<compile_context>
chip_gen: v7x
topology: tpu7x:2x2x1
jax: 0.10.0
libtpu: 0.0.40
codegen_flags: <defaults>
</compile_context>

<pallas_src>
import functools

import jax
import jax.numpy as jnp
from jax import lax
from jax.experimental import pallas as pl
from jax.experimental.pallas import tpu as pltpu


def _conv_bn_relu_kernel(x_ref, w_ref, scale_ref, bias_ref, o_ref, acc_ref, *,
                         kh, kw, stride, dilation, th, ow, opad, activation):
    # x_ref:     (1, Hp, Wp, C)    padded NHWC input for this batch element
    # w_ref:     (KH*KW, C, Opad)  conv weights, tap-major, lane-dense O
    # scale_ref: (1, Opad)         folded BN scale  = gamma / sqrt(var + eps)
    # bias_ref:  (1, Opad)         folded BN bias   = beta - mean * scale
    # o_ref:     (1, TH*OW, Opad)  flat output tile (lane-dense channels)
    # acc_ref:   (TH*OW, Opad)     f32 VMEM accumulator
    rt = pl.program_id(1)
    r0 = rt * (th * stride)          # first input row of this output-row tile

    acc_ref[...] = jnp.zeros_like(acc_ref)

    # Conv as a sum of KH*KW shifted (TH*OW, C) x (C, Opad) matmuls.
    for i in range(kh):
        for j in range(kw):
            if stride == 1:
                rows = pl.ds(r0 + i * dilation, th)
                cols = pl.ds(j * dilation, ow)
            else:
                # TODO(synk): strided sublane loads are correct but not tuned.
                rows = pl.ds(r0 + i * dilation, th, stride)
                cols = pl.ds(j * dilation, ow, stride)
            x_tap = x_ref[0, rows, cols, :]                    # (TH, OW, C)
            x2d = x_tap.reshape(th * ow, x_tap.shape[-1])      # (TH*OW, C)
            acc_ref[...] += jnp.dot(x2d, w_ref[i * kw + j],
                                    preferred_element_type=jnp.float32)

    # Folded BatchNorm (eval) + activation, all in f32 on the VPU.
    y = acc_ref[...] * scale_ref[...] + bias_ref[...]
    if activation == "relu":
        y = jnp.maximum(y, 0.0)
    elif activation == "relu6":
        y = jnp.clip(y, 0.0, 6.0)
    o_ref[0] = y.astype(o_ref.dtype)


@functools.partial(
    jax.jit,
    static_argnames=("stride", "padding", "dilation", "eps", "activation",
                     "compute_dtype", "target_tile_rows"))
def conv_block_forward(x_nchw, weight_oihw, gamma, beta, run_mean, run_var, *,
                       stride=1, padding=1, dilation=1, eps=1e-5,
                       activation="relu", compute_dtype=jnp.bfloat16,
                       target_tile_rows=512):
    """ConvBlock forward: Conv2d(no bias) -> BatchNorm2d(eval) -> ReLU.

    x_nchw:      (N, C, H, W)    float32
    weight_oihw: (O, C, KH, KW)  float32
    returns      (N, O, OH, OW)  float32
    """
    n, c, h, w = x_nchw.shape
    o, c_in, kh, kw = weight_oihw.shape
    assert c_in == c

    oh = (h + 2 * padding - dilation * (kh - 1) - 1) // stride + 1
    ow = (w + 2 * padding - dilation * (kw - 1) - 1) // stride + 1
    hp, wp = h + 2 * padding, w + 2 * padding

    # ---- glue (O(input) bytes only): layout + spatial zero-pad --------------
    x_nhwc = jnp.transpose(x_nchw, (0, 2, 3, 1)).astype(compute_dtype)
    xp = jnp.pad(x_nhwc,
                 ((0, 0), (padding, padding), (padding, padding), (0, 0)))
    # TODO(synk): keep the surrounding network NHWC so this transpose (and the
    #             final one) disappears.

    # Weights (O,C,KH,KW) -> (KH*KW, C, Opad), output channels on lanes.
    opad = ((o + 127) // 128) * 128
    w_taps = jnp.transpose(weight_oihw, (2, 3, 1, 0)).reshape(kh * kw, c, o)
    w_taps = jnp.pad(w_taps, ((0, 0), (0, 0), (0, opad - o))).astype(compute_dtype)

    # BatchNorm (eval mode) folded into per-channel scale/bias (f32).
    inv_std = gamma * lax.rsqrt(run_var + eps)
    scale = jnp.pad(inv_std, (0, opad - o)).reshape(1, opad).astype(jnp.float32)
    bias = jnp.pad(beta - run_mean * inv_std,
                   (0, opad - o)).reshape(1, opad).astype(jnp.float32)

    # Row tile: ~target_tile_rows matmul rows per grid step; must divide OH and
    # keep the output block's sublane dim (th*ow) 8-aligned.
    th = max(1, min(oh, max(1, target_tile_rows // max(ow, 1))))
    while th > 1 and (oh % th != 0 or (th * ow) % 8 != 0):
        th -= 1
    if oh % th != 0 or ((th * ow) % 8 != 0 and th != oh):
        th = oh
    n_row_tiles = oh // th

    kernel = functools.partial(
        _conv_bn_relu_kernel, kh=kh, kw=kw, stride=stride, dilation=dilation,
        th=th, ow=ow, opad=opad, activation=activation)

    in_bytes = jnp.dtype(compute_dtype).itemsize
    cost = pl.CostEstimate(
        flops=2 * n * oh * ow * kh * kw * c * opad,
        transcendentals=0,
        bytes_accessed=(xp.size * in_bytes + w_taps.size * in_bytes
                        + 2 * opad * 4 + n * oh * ow * opad * 4))

    out_flat = pl.pallas_call(
        kernel,
        out_shape=jax.ShapeDtypeStruct((n, oh * ow, opad), jnp.float32),
        grid_spec=pltpu.PrefetchScalarGridSpec(
            num_scalar_prefetch=0,
            grid=(n, n_row_tiles),
            in_specs=[
                # Whole padded image of one batch element; constant block index
                # across the row-tile axis -> read from HBM once per image.
                pl.BlockSpec((1, hp, wp, c), lambda b, r: (b, 0, 0, 0)),
                # Weights / BN scale / bias: constant index maps -> resident.
                pl.BlockSpec((kh * kw, c, opad), lambda b, r: (0, 0, 0)),
                pl.BlockSpec((1, opad), lambda b, r: (0, 0)),
                pl.BlockSpec((1, opad), lambda b, r: (0, 0)),
            ],
            out_specs=pl.BlockSpec((1, th * ow, opad), lambda b, r: (b, r, 0)),
            scratch_shapes=[pltpu.VMEM((th * ow, opad), jnp.float32)],
        ),
        compiler_params=pltpu.CompilerParams(
            dimension_semantics=("parallel", "parallel")),
        cost_estimate=cost,
    )(xp, w_taps, scale, bias)

    out_nhwc = out_flat.reshape(n, oh, ow, opad)[..., :o]
    return jnp.transpose(out_nhwc, (0, 3, 1, 2))   # back to NCHW interface


def _reference_forward(x_nchw, weight_oihw, gamma, beta, run_mean, run_var, *,
                       stride, padding, dilation, eps=1e-5):
    y = lax.conv_general_dilated(
        x_nchw, weight_oihw,
        window_strides=(stride, stride),
        padding=((padding, padding), (padding, padding)),
        rhs_dilation=(dilation, dilation),
        dimension_numbers=("NCHW", "OIHW", "NCHW"),
        precision=lax.Precision.HIGHEST,
    )
    s = (gamma / jnp.sqrt(run_var + eps)).reshape(1, -1, 1, 1)
    b = (beta - run_mean * gamma / jnp.sqrt(run_var + eps)).reshape(1, -1, 1, 1)
    return jnp.maximum(y * s + b, 0.0)


if __name__ == "__main__":
    # ConvBlock(in_channels=4, out_channels=8, kernel_size=3, strides=1, padding=1)
    N, C, H, W = 2, 4, 16, 16
    O, KH, KW = 8, 3, 3
    stride, padding, dilation = 1, 1, 1

    key = jax.random.PRNGKey(0)
    kx, kw_, kg, kb, km, kv = jax.random.split(key, 6)
    x = jax.random.normal(kx, (N, C, H, W), dtype=jnp.float32)
    weight = 0.1 * jax.random.normal(kw_, (O, C, KH, KW), dtype=jnp.float32)
    gamma = 1.0 + 0.1 * jax.random.normal(kg, (O,), dtype=jnp.float32)
    beta = 0.1 * jax.random.normal(kb, (O,), dtype=jnp.float32)
    run_mean = 0.1 * jax.random.normal(km, (O,), dtype=jnp.float32)
    run_var = jnp.abs(jax.random.normal(kv, (O,), dtype=jnp.float32)) + 0.5

    ref = _reference_forward(x, weight, gamma, beta, run_mean, run_var,
                             stride=stride, padding=padding, dilation=dilation)

    # f32 compute path (tight check).
    out_f32 = conv_block_forward(x, weight, gamma, beta, run_mean, run_var,
                                 stride=stride, padding=padding,
                                 dilation=dilation,
                                 compute_dtype=jnp.float32)
    out_f32 = jax.block_until_ready(out_f32)
    assert out_f32.shape == (N, O, H, W), out_f32.shape
    err_f32 = float(jnp.max(jnp.abs(out_f32 - ref)))
    assert err_f32 < 1e-3, err_f32

    # bf16 compute path (default: bf16 DMA/MXU, f32 accumulation; looser tol).
    out_bf16 = conv_block_forward(x, weight, gamma, beta, run_mean, run_var,
                                  stride=stride, padding=padding,
                                  dilation=dilation)
    out_bf16 = jax.block_until_ready(out_bf16)
    assert out_bf16.shape == (N, O, H, W), out_bf16.shape
    err_bf16 = float(jnp.max(jnp.abs(out_bf16 - ref)))
    assert err_bf16 < 1e-1, err_bf16

    print("KERNEL_OK")
</pallas_src>

<mosaic_0001>
module attributes {stable_mosaic.version = 11 : i64} {
  func.func @_conv_bn_relu_kernel(%arg0: i32, %arg1: i32, %arg2: memref<1x18x18x4xf32, #tpu.memory_space<vmem>>, %arg3: memref<9x4x128xf32, #tpu.memory_space<vmem>>, %arg4: memref<1x128xf32, #tpu.memory_space<vmem>>, %arg5: memref<1x128xf32, #tpu.memory_space<vmem>>, %arg6: memref<1x256x128xf32, #tpu.memory_space<vmem>>, %arg7: memref<256x128xf32, #tpu.memory_space<vmem>>) attributes {dimension_semantics = [#tpu.dimension_semantics<parallel>, #tpu.dimension_semantics<parallel>], iteration_bounds = array<i64: 2, 1>, scalar_prefetch = 0 : i64, scratch_operands = 1 : i64, tpu.core_type = #tpu.core_type<tc>, window_params = [{transform_indices = @transform_0, window_bounds = array<i64: 1, 18, 18, 4>}, {pipeline_mode = #tpu.pipeline_mode<synchronous>, transform_indices = @transform_1, window_bounds = array<i64: 9, 4, 128>}, {pipeline_mode = #tpu.pipeline_mode<synchronous>, transform_indices = @transform_2, window_bounds = array<i64: 1, 128>}, {pipeline_mode = #tpu.pipeline_mode<synchronous>, transform_indices = @transform_3, window_bounds = array<i64: 1, 128>}, {transform_indices = @transform_4, window_bounds = array<i64: 1, 256, 128>}]} {
    %c16_i32 = arith.constant 16 : i32
    %0 = arith.muli %arg1, %c16_i32 : i32
    %cst = arith.constant 0.000000e+00 : f32
    %1 = vector.broadcast %cst : f32 to vector<256x128xf32>
    %c0 = arith.constant 0 : index
    %c0_0 = arith.constant 0 : index
    %2 = vector.load %arg7[%c0, %c0_0] : memref<256x128xf32, #tpu.memory_space<vmem>>, vector<256x128xf32>
    tpu.vector_store %arg7[%c0, %c0_0], %1 {strides = array<i32>} : memref<256x128xf32, #tpu.memory_space<vmem>>, vector<256x128xf32>,
    %c0_i32 = arith.constant 0 : i32
    %3 = arith.addi %0, %c0_i32 : i32
    %c0_1 = arith.constant 0 : index
    %4 = arith.index_cast %3 : i32 to index
    %c0_2 = arith.constant 0 : index
    %c0_3 = arith.constant 0 : index
    %5 = vector.load %arg2[%c0_1, %4, %c0_2, %c0_3] : memref<1x18x18x4xf32, #tpu.memory_space<vmem>>, vector<1x16x16x4xf32>
    %6 = vector.shape_cast %5 : vector<1x16x16x4xf32> to vector<16x16x4xf32>
    %7 = vector.shape_cast %6 : vector<16x16x4xf32> to vector<256x4xf32>
    %c0_4 = arith.constant 0 : index
    %c0_5 = arith.constant 0 : index
    %8 = vector.load %arg7[%c0_4, %c0_5] : memref<256x128xf32, #tpu.memory_space<vmem>>, vector<256x128xf32>
    %c0_6 = arith.constant 0 : index
    %c0_7 = arith.constant 0 : index
    %c0_8 = arith.constant 0 : index
    %9 = vector.load %arg3[%c0_6, %c0_7, %c0_8] : memref<9x4x128xf32, #tpu.memory_space<vmem>>, vector<1x4x128xf32>
    %10 = vector.shape_cast %9 : vector<1x4x128xf32> to vector<4x128xf32>
    %cst_9 = arith.constant dense<0.000000e+00> : vector<256x128xf32>
    %11 = tpu.matmul %7, %10, %cst_9 {dimension_numbers = #tpu.dot_dimension_numbers<[1], [0], [0], [1], [0, 0, 1, 1], [], []>} : vector<256x4xf32>, vector<4x128xf32>, vector<256x128xf32> -> vector<256x128xf32>
    %12 = arith.addf %8, %11 : vector<256x128xf32>
    %c0_10 = arith.constant 0 : index
    %c0_11 = arith.constant 0 : index
    %13 = vector.load %arg7[%c0_10, %c0_11] : memref<256x128xf32, #tpu.memory_space<vmem>>, vector<256x128xf32>
    tpu.vector_store %arg7[%c0_10, %c0_11], %12 {strides = array<i32>} : memref<256x128xf32, #tpu.memory_space<vmem>>, vector<256x128xf32>,
    %c0_i32_12 = arith.constant 0 : i32
    %14 = arith.addi %0, %c0_i32_12 : i32
    %c0_13 = arith.constant 0 : index
    %15 = arith.index_cast %14 : i32 to index
    %c1 = arith.constant 1 : index
    %c0_14 = arith.constant 0 : index
    %16 = vector.load %arg2[%c0_13, %15, %c1, %c0_14] : memref<1x18x18x4xf32, #tpu.memory_space<vmem>>, vector<1x16x16x4xf32>
    %17 = vector.shape_cast %16 : vector<1x16x16x4xf32> to vector<16x16x4xf32>
    %18 = vector.shape_cast %17 : vector<16x16x4xf32> to vector<256x4xf32>
    %c0_15 = arith.constant 0 : index
    %c0_16 = arith.constant 0 : index
    %19 = vector.load %arg7[%c0_15, %c0_16] : memref<256x128xf32, #tpu.memory_space<vmem>>, vector<256x128xf32>
    %c1_17 = arith.constant 1 : index
    %c0_18 = arith.constant 0 : index
    %c0_19 = arith.constant 0 : index
    %20 = vector.load %arg3[%c1_17, %c0_18, %c0_19] : memref<9x4x128xf32, #tpu.memory_space<vmem>>, vector<1x4x128xf32>
    %21 = vector.shape_cast %20 : vector<1x4x128xf32> to vector<4x128xf32>
    %cst_20 = arith.constant dense<0.000000e+00> : vector<256x128xf32>
    %22 = tpu.matmul %18, %21, %cst_20 {dimension_numbers = #tpu.dot_dimension_numbers<[1], [0], [0], [1], [0, 0, 1, 1], [], []>} : vector<256x4xf32>, vector<4x128xf32>, vector<256x128xf32> -> vector<256x128xf32>
    %23 = arith.addf %19, %22 : vector<256x128xf32>
    %c0_21 = arith.constant 0 : index
    %c0_22 = arith.constant 0 : index
    %24 = vector.load %arg7[%c0_21, %c0_22] : memref<256x128xf32, #tpu.memory_space<vmem>>, vector<256x128xf32>
    tpu.vector_store %arg7[%c0_21, %c0_22], %23 {strides = array<i32>} : memref<256x128xf32, #tpu.memory_space<vmem>>, vector<256x128xf32>,
    %c0_i32_23 = arith.constant 0 : i32
    %25 = arith.addi %0, %c0_i32_23 : i32
    %c0_24 = arith.constant 0 : index
    %26 = arith.index_cast %25 : i32 to index
    %c2 = arith.constant 2 : index
    %c0_25 = arith.constant 0 : index
    %27 = vector.load %arg2[%c0_24, %26, %c2, %c0_25] : memref<1x18x18x4xf32, #tpu.memory_space<vmem>>, vector<1x16x16x4xf32>
    %28 = vector.shape_cast %27 : vector<1x16x16x4xf32> to vector<16x16x4xf32>
    %29 = vector.shape_cast %28 : vector<16x16x4xf32> to vector<256x4xf32>
    %c0_26 = arith.constant 0 : index
    %c0_27 = arith.constant 0 : index
    %30 = vector.load %arg7[%c0_26, %c0_27] : memref<256x128xf32, #tpu.memory_space<vmem>>, vector<256x128xf32>
    %c2_28 = arith.constant 2 : index
    %c0_29 = arith.constant 0 : index
    %c0_30 = arith.constant 0 : index
    %31 = vector.load %arg3[%c2_28, %c0_29, %c0_30] : memref<9x4x128xf32, #tpu.memory_space<vmem>>, vector<1x4x128xf32>
    %32 = vector.shape_cast %31 : vector<1x4x128xf32> to vector<4x128xf32>
    %cst_31 = arith.constant dense<0.000000e+00> : vector<256x128xf32>
    %33 = tpu.matmul %29, %32, %cst_31 {dimension_numbers = #tpu.dot_dimension_numbers<[1], [0], [0], [1], [0, 0, 1, 1], [], []>} : vector<256x4xf32>, vector<4x128xf32>, vector<256x128xf32> -> vector<256x128xf32>
    %34 = arith.addf %30, %33 : vector<256x128xf32>
    %c0_32 = arith.constant 0 : index
    %c0_33 = arith.constant 0 : index
    %35 = vector.load %arg7[%c0_32, %c0_33] : memref<256x128xf32, #tpu.memory_space<vmem>>, vector<256x128xf32>
    tpu.vector_store %arg7[%c0_32, %c0_33], %34 {strides = array<i32>} : memref<256x128xf32, #tpu.memory_space<vmem>>, vector<256x128xf32>,
    %c1_i32 = arith.constant 1 : i32
    %36 = arith.addi %0, %c1_i32 : i32
    %c0_34 = arith.constant 0 : index
    %37 = arith.index_cast %36 : i32 to index
    %c0_35 = arith.constant 0 : index
    %c0_36 = arith.constant 0 : index
    %38 = vector.load %arg2[%c0_34, %37, %c0_35, %c0_36] : memref<1x18x18x4xf32, #tpu.memory_space<vmem>>, vector<1x16x16x4xf32>
    %39 = vector.shape_cast %38 : vector<1x16x16x4xf32> to vector<16x16x4xf32>
    %40 = vector.shape_cast %39 : vector<16x16x4xf32> to vector<256x4xf32>
    %c0_37 = arith.constant 0 : index
    %c0_38 = arith.constant 0 : index
    %41 = vector.load %arg7[%c0_37, %c0_38] : memref<256x128xf32, #tpu.memory_space<vmem>>, vector<256x128xf32>
    %c3 = arith.constant 3 : index
    %c0_39 = arith.constant 0 : index
    %c0_40 = arith.constant 0 : index
    %42 = vector.load %arg3[%c3, %c0_39, %c0_40] : memref<9x4x128xf32, #tpu.memory_space<vmem>>, vector<1x4x128xf32>
    %43 = vector.shape_cast %42 : vector<1x4x128xf32> to vector<4x128xf32>
    %cst_41 = arith.constant dense<0.000000e+00> : vector<256x128xf32>
    %44 = tpu.matmul %40, %43, %cst_41 {dimension_numbers = #tpu.dot_dimension_numbers<[1], [0], [0], [1], [0, 0, 1, 1], [], []>} : vector<256x4xf32>, vector<4x128xf32>, vector<256x128xf32> -> vector<256x128xf32>
    %45 = arith.addf %41, %44 : vector<256x128xf32>
    %c0_42 = arith.constant 0 : index
    %c0_43 = arith.constant 0 : index
    %46 = vector.load %arg7[%c0_42, %c0_43] : memref<256x128xf32, #tpu.memory_space<vmem>>, vector<256x128xf32>
    tpu.vector_store %arg7[%c0_42, %c0_43], %45 {strides = array<i32>} : memref<256x128xf32, #tpu.memory_space<vmem>>, vector<256x128xf32>,
    %c1_i32_44 = arith.constant 1 : i32
    %47 = arith.addi %0, %c1_i32_44 : i32
    %c0_45 = arith.constant 0 : index
    %48 = arith.index_cast %47 : i32 to index
    %c1_46 = arith.constant 1 : index
    %c0_47 = arith.constant 0 : index
    %49 = vector.load %arg2[%c0_45, %48, %c1_46, %c0_47] : memref<1x18x18x4xf32, #tpu.memory_space<vmem>>, vector<1x16x16x4xf32>
    %50 = vector.shape_cast %49 : vector<1x16x16x4xf32> to vector<16x16x4xf32>
    %51 = vector.shape_cast %50 : vector<16x16x4xf32> to vector<256x4xf32>
    %c0_48 = arith.constant 0 : index
    %c0_49 = arith.constant 0 : index
    %52 = vector.load %arg7[%c0_48, %c0_49] : memref<256x128xf32, #tpu.memory_space<vmem>>, vector<256x128xf32>
    %c4 = arith.constant 4 : index
    %c0_50 = arith.constant 0 : index
    %c0_51 = arith.constant 0 : index
    %53 = vector.load %arg3[%c4, %c0_50, %c0_51] : memref<9x4x128xf32, #tpu.memory_space<vmem>>, vector<1x4x128xf32>
    %54 = vector.shape_cast %53 : vector<1x4x128xf32> to vector<4x128xf32>
    %cst_52 = arith.constant dense<0.000000e+00> : vector<256x128xf32>
    %55 = tpu.matmul %51, %54, %cst_52 {dimension_numbers = #tpu.dot_dimension_numbers<[1], [0], [0], [1], [0, 0, 1, 1], [], []>} : vector<256x4xf32>, vector<4x128xf32>, vector<256x128xf32> -> vector<256x128xf32>
    %56 = arith.addf %52, %55 : vector<256x128xf32>
    %c0_53 = arith.constant 0 : index
    %c0_54 = arith.constant 0 : index
    %57 = vector.load %arg7[%c0_53, %c0_54] : memref<256x128xf32, #tpu.memory_space<vmem>>, vector<256x128xf32>
    tpu.vector_store %arg7[%c0_53, %c0_54], %56 {strides = array<i32>} : memref<256x128xf32, #tpu.memory_space<vmem>>, vector<256x128xf32>,
    %c1_i32_55 = arith.constant 1 : i32
    %58 = arith.addi %0, %c1_i32_55 : i32
    %c0_56 = arith.constant 0 : index
    %59 = arith.index_cast %58 : i32 to index
    %c2_57 = arith.constant 2 : index
    %c0_58 = arith.constant 0 : index
    %60 = vector.load %arg2[%c0_56, %59, %c2_57, %c0_58] : memref<1x18x18x4xf32, #tpu.memory_space<vmem>>, vector<1x16x16x4xf32>
    %61 = vector.shape_cast %60 : vector<1x16x16x4xf32> to vector<16x16x4xf32>
    %62 = vector.shape_cast %61 : vector<16x16x4xf32> to vector<256x4xf32>
    %c0_59 = arith.constant 0 : index
    %c0_60 = arith.constant 0 : index
    %63 = vector.load %arg7[%c0_59, %c0_60] : memref<256x128xf32, #tpu.memory_space<vmem>>, vector<256x128xf32>
    %c5 = arith.constant 5 : index
    %c0_61 = arith.constant 0 : index
    %c0_62 = arith.constant 0 : index
    %64 = vector.load %arg3[%c5, %c0_61, %c0_62] : memref<9x4x128xf32, #tpu.memory_space<vmem>>, vector<1x4x128xf32>
    %65 = vector.shape_cast %64 : vector<1x4x128xf32> to vector<4x128xf32>
    %cst_63 = arith.constant dense<0.000000e+00> : vector<256x128xf32>
    %66 = tpu.matmul %62, %65, %cst_63 {dimension_numbers = #tpu.dot_dimension_numbers<[1], [0], [0], [1], [0, 0, 1, 1], [], []>} : vector<256x4xf32>, vector<4x128xf32>, vector<256x128xf32> -> vector<256x128xf32>
    %67 = arith.addf %63, %66 : vector<256x128xf32>
    %c0_64 = arith.constant 0 : index
    %c0_65 = arith.constant 0 : index
    %68 = vector.load %arg7[%c0_64, %c0_65] : memref<256x128xf32, #tpu.memory_space<vmem>>, vector<256x128xf32>
    tpu.vector_store %arg7[%c0_64, %c0_65], %67 {strides = array<i32>} : memref<256x128xf32, #tpu.memory_space<vmem>>, vector<256x128xf32>,
    %c2_i32 = arith.constant 2 : i32
    %69 = arith.addi %0, %c2_i32 : i32
    %c0_66 = arith.constant 0 : index
    %70 = arith.index_cast %69 : i32 to index
    %c0_67 = arith.constant 0 : index
    %c0_68 = arith.constant 0 : index
    %71 = vector.load %arg2[%c0_66, %70, %c0_67, %c0_68] : memref<1x18x18x4xf32, #tpu.memory_space<vmem>>, vector<1x16x16x4xf32>
    %72 = vector.shape_cast %71 : vector<1x16x16x4xf32> to vector<16x16x4xf32>
    %73 = vector.shape_cast %72 : vector<16x16x4xf32> to vector<256x4xf32>
    %c0_69 = arith.constant 0 : index
    %c0_70 = arith.constant 0 : index
    %74 = vector.load %arg7[%c0_69, %c0_70] : memref<256x128xf32, #tpu.memory_space<vmem>>, vector<256x128xf32>
    %c6 = arith.constant 6 : index
    %c0_71 = arith.constant 0 : index
    %c0_72 = arith.constant 0 : index
    %75 = vector.load %arg3[%c6, %c0_71, %c0_72] : memref<9x4x128xf32, #tpu.memory_space<vmem>>, vector<1x4x128xf32>
    %76 = vector.shape_cast %75 : vector<1x4x128xf32> to vector<4x128xf32>
    %cst_73 = arith.constant dense<0.000000e+00> : vector<256x128xf32>
    %77 = tpu.matmul %73, %76, %cst_73 {dimension_numbers = #tpu.dot_dimension_numbers<[1], [0], [0], [1], [0, 0, 1, 1], [], []>} : vector<256x4xf32>, vector<4x128xf32>, vector<256x128xf32> -> vector<256x128xf32>
    %78 = arith.addf %74, %77 : vector<256x128xf32>
    %c0_74 = arith.constant 0 : index
    %c0_75 = arith.constant 0 : index
    %79 = vector.load %arg7[%c0_74, %c0_75] : memref<256x128xf32, #tpu.memory_space<vmem>>, vector<256x128xf32>
    tpu.vector_store %arg7[%c0_74, %c0_75], %78 {strides = array<i32>} : memref<256x128xf32, #tpu.memory_space<vmem>>, vector<256x128xf32>,
    %c2_i32_76 = arith.constant 2 : i32
    %80 = arith.addi %0, %c2_i32_76 : i32
    %c0_77 = arith.constant 0 : index
    %81 = arith.index_cast %80 : i32 to index
    %c1_78 = arith.constant 1 : index
    %c0_79 = arith.constant 0 : index
    %82 = vector.load %arg2[%c0_77, %81, %c1_78, %c0_79] : memref<1x18x18x4xf32, #tpu.memory_space<vmem>>, vector<1x16x16x4xf32>
    %83 = vector.shape_cast %82 : vector<1x16x16x4xf32> to vector<16x16x4xf32>
    %84 = vector.shape_cast %83 : vector<16x16x4xf32> to vector<256x4xf32>
    %c0_80 = arith.constant 0 : index
    %c0_81 = arith.constant 0 : index
    %85 = vector.load %arg7[%c0_80, %c0_81] : memref<256x128xf32, #tpu.memory_space<vmem>>, vector<256x128xf32>
    %c7 = arith.constant 7 : index
    %c0_82 = arith.constant 0 : index
    %c0_83 = arith.constant 0 : index
    %86 = vector.load %arg3[%c7, %c0_82, %c0_83] : memref<9x4x128xf32, #tpu.memory_space<vmem>>, vector<1x4x128xf32>
    %87 = vector.shape_cast %86 : vector<1x4x128xf32> to vector<4x128xf32>
    %cst_84 = arith.constant dense<0.000000e+00> : vector<256x128xf32>
    %88 = tpu.matmul %84, %87, %cst_84 {dimension_numbers = #tpu.dot_dimension_numbers<[1], [0], [0], [1], [0, 0, 1, 1], [], []>} : vector<256x4xf32>, vector<4x128xf32>, vector<256x128xf32> -> vector<256x128xf32>
    %89 = arith.addf %85, %88 : vector<256x128xf32>
    %c0_85 = arith.constant 0 : index
    %c0_86 = arith.constant 0 : index
    %90 = vector.load %arg7[%c0_85, %c0_86] : memref<256x128xf32, #tpu.memory_space<vmem>>, vector<256x128xf32>
    tpu.vector_store %arg7[%c0_85, %c0_86], %89 {strides = array<i32>} : memref<256x128xf32, #tpu.memory_space<vmem>>, vector<256x128xf32>,
    %c2_i32_87 = arith.constant 2 : i32
    %91 = arith.addi %0, %c2_i32_87 : i32
    %c0_88 = arith.constant 0 : index
    %92 = arith.index_cast %91 : i32 to index
    %c2_89 = arith.constant 2 : index
    %c0_90 = arith.constant 0 : index
    %93 = vector.load %arg2[%c0_88, %92, %c2_89, %c0_90] : memref<1x18x18x4xf32, #tpu.memory_space<vmem>>, vector<1x16x16x4xf32>
    %94 = vector.shape_cast %93 : vector<1x16x16x4xf32> to vector<16x16x4xf32>
    %95 = vector.shape_cast %94 : vector<16x16x4xf32> to vector<256x4xf32>
    %c0_91 = arith.constant 0 : index
    %c0_92 = arith.constant 0 : index
    %96 = vector.load %arg7[%c0_91, %c0_92] : memref<256x128xf32, #tpu.memory_space<vmem>>, vector<256x128xf32>
    %c8 = arith.constant 8 : index
    %c0_93 = arith.constant 0 : index
    %c0_94 = arith.constant 0 : index
    %97 = vector.load %arg3[%c8, %c0_93, %c0_94] : memref<9x4x128xf32, #tpu.memory_space<vmem>>, vector<1x4x128xf32>
    %98 = vector.shape_cast %97 : vector<1x4x128xf32> to vector<4x128xf32>
    %cst_95 = arith.constant dense<0.000000e+00> : vector<256x128xf32>
    %99 = tpu.matmul %95, %98, %cst_95 {dimension_numbers = #tpu.dot_dimension_numbers<[1], [0], [0], [1], [0, 0, 1, 1], [], []>} : vector<256x4xf32>, vector<4x128xf32>, vector<256x128xf32> -> vector<256x128xf32>
    %100 = arith.addf %96, %99 : vector<256x128xf32>
    %c0_96 = arith.constant 0 : index
    %c0_97 = arith.constant 0 : index
    %101 = vector.load %arg7[%c0_96, %c0_97] : memref<256x128xf32, #tpu.memory_space<vmem>>, vector<256x128xf32>
    tpu.vector_store %arg7[%c0_96, %c0_97], %100 {strides = array<i32>} : memref<256x128xf32, #tpu.memory_space<vmem>>, vector<256x128xf32>,
    %c0_98 = arith.constant 0 : index
    %c0_99 = arith.constant 0 : index
    %102 = vector.load %arg7[%c0_98, %c0_99] : memref<256x128xf32, #tpu.memory_space<vmem>>, vector<256x128xf32>
    %c0_100 = arith.constant 0 : index
    %c0_101 = arith.constant 0 : index
    %103 = vector.load %arg4[%c0_100, %c0_101] : memref<1x128xf32, #tpu.memory_space<vmem>>, vector<1x128xf32>
    %104 = vector.broadcast %103 : vector<1x128xf32> to vector<256x128xf32>
    %105 = arith.mulf %102, %104 : vector<256x128xf32>
    %c0_102 = arith.constant 0 : index
    %c0_103 = arith.constant 0 : index
    %106 = vector.load %arg5[%c0_102, %c0_103] : memref<1x128xf32, #tpu.memory_space<vmem>>, vector<1x128xf32>
    %107 = vector.broadcast %106 : vector<1x128xf32> to vector<256x128xf32>
    %108 = arith.addf %105, %107 : vector<256x128xf32>
    %cst_104 = arith.constant 0.000000e+00 : f32
    %109 = vector.broadcast %cst_104 : f32 to vector<256x128xf32>
    %110 = arith.maximumf %108, %109 : vector<256x128xf32>
    %c0_105 = arith.constant 0 : index
    %c0_106 = arith.constant 0 : index
    %c0_107 = arith.constant 0 : index
    %111 = vector.load %arg6[%c0_105, %c0_106, %c0_107] : memref<1x256x128xf32, #tpu.memory_space<vmem>>, vector<1x256x128xf32>
    %112 = vector.shape_cast %111 : vector<1x256x128xf32> to vector<256x128xf32>
    %113 = vector.shape_cast %110 : vector<256x128xf32> to vector<1x256x128xf32>
    tpu.vector_store %arg6[%c0_105, %c0_106, %c0_107], %113 {strides = array<i32>} : memref<1x256x128xf32, #tpu.memory_space<vmem>>, vector<1x256x128xf32>,
    return
  }
  func.func @transform_0(%arg0: i32, %arg1: i32) -> (i32, i32, i32, i32) {
    %c0_i32 = arith.constant 0 : i32
    %c0_i32_0 = arith.constant 0 : i32
    %c0_i32_1 = arith.constant 0 : i32
    %c0_i32_2 = arith.constant 0 : i32
    return %arg0, %c0_i32, %c0_i32_0, %c0_i32_1 : i32, i32, i32, i32
  }
  func.func @transform_1(%arg0: i32, %arg1: i32) -> (i32, i32, i32) {
    %c0_i32 = arith.constant 0 : i32
    %c0_i32_0 = arith.constant 0 : i32
    %c0_i32_1 = arith.constant 0 : i32
    %c0_i32_2 = arith.constant 0 : i32
    return %c0_i32, %c0_i32_0, %c0_i32_1 : i32, i32, i32
  }
  func.func @transform_2(%arg0: i32, %arg1: i32) -> (i32, i32) {
    %c0_i32 = arith.constant 0 : i32
    %c0_i32_0 = arith.constant 0 : i32
    %c0_i32_1 = arith.constant 0 : i32
    return %c0_i32, %c0_i32_0 : i32, i32
  }
  func.func @transform_3(%arg0: i32, %arg1: i32) -> (i32, i32) {
    %c0_i32 = arith.constant 0 : i32
    %c0_i32_0 = arith.constant 0 : i32
    %c0_i32_1 = arith.constant 0 : i32
    return %c0_i32, %c0_i32_0 : i32, i32
  }
  func.func @transform_4(%arg0: i32, %arg1: i32) -> (i32, i32, i32) {
    %c0_i32 = arith.constant 0 : i32
    %c0_i32_0 = arith.constant 0 : i32
    return %arg0, %arg1, %c0_i32 : i32, i32, i32
  }
}

</mosaic_0001>

<llo_original>
// kernel: conv_block_forward.1
$region0: #{conv_block_forward.1}
  #allocation0 [shape = 'u32[]', space=smem, size = 0x4, offset = 0x4, fixed_abs, tag = 'smem constant byte address 0x4 - core index']
  #allocation1 [shape = 'u32[144,128]{1,0:T(1,128)}', space=vmem, size = 0x12000, scoped, tag = 'internal scratch']
  #allocation2 [shape = 'f32[256,128]{1,0:T(8,128)}', space=vmem, size = 0x20000, scoped, tag = 'scratch operand']
  %s0 = inlined_call_operand.vmem [shape: f32[2,18,18,4], index: 0, kind: input, shape index: {}]
  %s1 = inlined_call_operand.vmem [shape: f32[9,4,128], index: 1, kind: input, shape index: {}]
  %s2 = inlined_call_operand.vmem [shape: f32[1,128], index: 2, kind: input, shape index: {}]
  %s3 = inlined_call_operand.vmem [shape: f32[1,128], index: 3, kind: input, shape index: {}]
  %s4 = inlined_call_operand.vmem [shape: f32[2,256,128], index: 4, kind: output, shape index: {}]
  %s5 = sld [smem:[#allocation0]]
  $region49: #{conv_block_forward.1} parent=0
    _
  %s7 = ssub.s32 1, %s5
  %s8 = scalar_select 0, %s7, %s5
  loop: start=0, step=1, limit=4
  $region2: #{conv_block_forward.1} parent=0 // loop_pre_header
    _
  $region3: #{conv_block_forward.1} parent=0 // loop_header
    %s10 = sphi 0, %s14
    %p11 = scmp.ge.s32.totalorder %s10, 4
    %s17 = sphi 0, %s29
    %s18 = sphi 0, %s25
    %s19 = sphi 0, %s17
    %s20 = sphi 0, %s18
    %s21 = sphi 0, %s19
    %s22 = sphi 0, %s20
    %s32 = sphi 0, %s34
    %s35 = sphi 0, %s32
    %s36 = sphi 0, %s35
    %s52 = sphi 0, %s36
    %s56 = sphi 0, %s56
    %s58 = sphi 0, %s56
    %s59 = sphi 0, %s58
    %s73 = sphi 0, %s59
    %s77 = sphi 0, %s77
    %s79 = sphi 0, %s77
    %s80 = sphi 0, %s79
    %s94 = sphi 0, %s80
    %s98 = sphi 0, %s98
    %s100 = sphi 0, %s98
    %s101 = sphi 0, %s100
    %s115 = sphi 0, %s101
    %s123 = sphi 0, %s125
    %s126 = sphi 0, %s123
    %s127 = sphi 0, %s126
    %s143 = sphi 0, %s127
  $region4: #{conv_block_forward.1} parent=0 // loop_header_branch
    %13 = sbr.rel (%p11) target = $region8
  $region5: #{conv_block_forward.1} parent=0 // loop_body
    %s15 = ssub.s32 %s10, 1
    %s16 = ssub.s32 %s10, 2
    %s23 = sadd.s32 1, %s18
    %p24 = scmp.ge.s32.totalorder %s23, 1
    %s25 = scalar_select %p24, 0, %s23
    %s26 = sadd.s32 1, %s17
    %s27 = scalar_select %p24, %s26, %s17
    %p28 = scmp.ge.s32.totalorder %s27, 2
    %s29 = scalar_select %p28, 0, %s27
    %s30 = ssub.s32 %s17, %s29
    %p31 = scmp.eq.s32.totalorder %s30, 0
    %s33 = sadd.s32 %s32, 1
    %s34 = scalar_select %p31, %s32, %s33
    %p37 = pneg %p31
    %p38 = scmp.eq.s32.totalorder %s10, 1
    %p39 = por %p37, %p38
    %p40 = scmp.ne.s32.totalorder %s32, %s35
    %p41 = scmp.eq.s32.totalorder %s10, 0
    %p42 = por %p40, %p41
    %p43 = scmp.ne.s32.totalorder %s32, %s35
    %p44 = scmp.eq.s32.totalorder %s15, 1
    %p45 = por %p43, %p44
    %p46 = scmp.ne.s32.totalorder %s35, %s36
    %p47 = scmp.eq.s32.totalorder %s15, 0
    %p48 = por %p46, %p47
    %p49 = scmp.ne.s32.totalorder %s35, %s36
    %p50 = scmp.eq.s32.totalorder %s16, 1
    %p51 = por %p49, %p50
    %p53 = scmp.ne.s32.totalorder %s36, %s52
    %p54 = scmp.eq.s32.totalorder %s16, 0
    %p55 = por %p53, %p54
    %s57 = sadd.s32 %s56, 1
    %p60 = scmp.eq.s32.totalorder %s10, 1
    %p61 = scmp.ne.s32.totalorder %s56, %s58
    %p62 = scmp.eq.s32.totalorder %s10, 0
    %p63 = por %p61, %p62
    %p64 = scmp.ne.s32.totalorder %s56, %s58
    %p65 = scmp.eq.s32.totalorder %s15, 1
    %p66 = por %p64, %p65
    %p67 = scmp.ne.s32.totalorder %s58, %s59
    %p68 = scmp.eq.s32.totalorder %s15, 0
    %p69 = por %p67, %p68
    %p70 = scmp.ne.s32.totalorder %s58, %s59
    %p71 = scmp.eq.s32.totalorder %s16, 1
    %p72 = por %p70, %p71
    %p74 = scmp.ne.s32.totalorder %s59, %s73
    %p75 = scmp.eq.s32.totalorder %s16, 0
    %p76 = por %p74, %p75
    %s78 = sadd.s32 %s77, 1
    %p81 = scmp.eq.s32.totalorder %s10, 1
    %p82 = scmp.ne.s32.totalorder %s77, %s79
    %p83 = scmp.eq.s32.totalorder %s10, 0
    %p84 = por %p82, %p83
    %p85 = scmp.ne.s32.totalorder %s77, %s79
    %p86 = scmp.eq.s32.totalorder %s15, 1
    %p87 = por %p85, %p86
    %p88 = scmp.ne.s32.totalorder %s79, %s80
    %p89 = scmp.eq.s32.totalorder %s15, 0
    %p90 = por %p88, %p89
    %p91 = scmp.ne.s32.totalorder %s79, %s80
    %p92 = scmp.eq.s32.totalorder %s16, 1
    %p93 = por %p91, %p92
    %p95 = scmp.ne.s32.totalorder %s80, %s94
    %p96 = scmp.eq.s32.totalorder %s16, 0
    %p97 = por %p95, %p96
    %s99 = sadd.s32 %s98, 1
    %p102 = scmp.eq.s32.totalorder %s10, 1
    %p103 = scmp.ne.s32.totalorder %s98, %s100
    %p104 = scmp.eq.s32.totalorder %s10, 0
    %p105 = por %p103, %p104
    %p106 = scmp.ne.s32.totalorder %s98, %s100
    %p107 = scmp.eq.s32.totalorder %s15, 1
    %p108 = por %p106, %p107
    %p109 = scmp.ne.s32.totalorder %s100, %s101
    %p110 = scmp.eq.s32.totalorder %s15, 0
    %p111 = por %p109, %p110
    %p112 = scmp.ne.s32.totalorder %s100, %s101
    %p113 = scmp.eq.s32.totalorder %s16, 1
    %p114 = por %p112, %p113
    %p116 = scmp.ne.s32.totalorder %s101, %s115
    %p117 = scmp.eq.s32.totalorder %s16, 0
    %p118 = por %p116, %p117
    %s119 = ssub.s32 %s17, %s29
    %s120 = ssub.s32 %s18, %s25
    %s121 = sor.u32 %s119, %s120
    %p122 = scmp.eq.s32.totalorder %s121, 0
    %s124 = sadd.s32 %s123, 1
    %s125 = scalar_select %p122, %s123, %s124
    %p128 = pneg %p122
    %p129 = scmp.eq.s32.totalorder %s10, 1
    %p130 = por %p128, %p129
    %p131 = scmp.ne.s32.totalorder %s123, %s126
    %p132 = scmp.eq.s32.totalorder %s10, 0
    %p133 = por %p131, %p132
    %p134 = scmp.ne.s32.totalorder %s123, %s126
    %p135 = scmp.eq.s32.totalorder %s15, 1
    %p136 = por %p134, %p135
    %p137 = scmp.ne.s32.totalorder %s126, %s127
    %p138 = scmp.eq.s32.totalorder %s15, 0
    %p139 = por %p137, %p138
    %p140 = scmp.ne.s32.totalorder %s126, %s127
    %p141 = scmp.eq.s32.totalorder %s16, 1
    %p142 = por %p140, %p141
    %p144 = scmp.ne.s32.totalorder %s127, %s143
    %p145 = scmp.eq.s32.totalorder %s16, 0
    %p146 = por %p144, %p145
    %p147 = scmp.le.s32.totalorder 1, %s10
    %p148 = scmp.lt.s32.totalorder %s10, 3
    %p149 = pnand %p147, %p148
    %p150 = pneg %p149
    // Predicated region
    $region9: #{conv_block_forward.1} parent=5 // pred_check
      _
    $region10: #{conv_block_forward.1} parent=5 // pred_check_branch
      %152 = sbr.rel (%p149) target = $region12
    $region11: #{conv_block_forward.1} parent=5 // pred_region
      %s153 = ssub.s32 %s10, 1
      // Predicated region
      $region13: #{conv_block_forward.1} parent=11 // pred_check
        %p154 = pneg %p69
      $region14: #{conv_block_forward.1} parent=11 // pred_check_branch
        %156 = sbr.rel (%p154) target = $region16
      $region15: #{conv_block_forward.1} parent=11 // pred_region
        _
      $region16: #{conv_block_forward.1} parent=11 // pred_fallthru
        _
      // Predicated region
      $region17: #{conv_block_forward.1} parent=11 // pred_check
        %p157 = pneg %p90
      $region18: #{conv_block_forward.1} parent=11 // pred_check_branch
        %159 = sbr.rel (%p157) target = $region20
      $region19: #{conv_block_forward.1} parent=11 // pred_region
        _
      $region20: #{conv_block_forward.1} parent=11 // pred_fallthru
        _
      // Predicated region
      $region21: #{conv_block_forward.1} parent=11 // pred_check
        %p160 = pneg %p111
      $region22: #{conv_block_forward.1} parent=11 // pred_check_branch
        %162 = sbr.rel (%p160) target = $region24
      $region23: #{conv_block_forward.1} parent=11 // pred_region
        _
      $region24: #{conv_block_forward.1} parent=11 // pred_fallthru
        _
    $region12: #{conv_block_forward.1} parent=5 // pred_fallthru
      _
    %p163 = scmp.lt.s32.totalorder %s10, 2
    // Predicated region
    $region25: #{conv_block_forward.1} parent=5 // pred_check
      %p164 = pneg %p163
    $region26: #{conv_block_forward.1} parent=5 // pred_check_branch
      %166 = sbr.rel (%p164) target = $region28
    $region27: #{conv_block_forward.1} parent=5 // pred_region
      // Predicated region
      $region29: #{conv_block_forward.1} parent=27 // pred_check
        %p167 = pneg %p42
      $region30: #{conv_block_forward.1} parent=27 // pred_check_branch
        %169 = sbr.rel (%p167) target = $region32
      $region31: #{conv_block_forward.1} parent=27 // pred_region
        %p170 = scmp.lt.s32.totalorder %s17, 1
        %s171 = scalar_select %p170, %s17, 1
        %s172 = smul.addr %s171, 54
        %s173 = smul.addr %s172, 8
        %s174 = scalar_lea.vmem %s0, %s173
      $region32: #{conv_block_forward.1} parent=27 // pred_fallthru
        _
    $region28: #{conv_block_forward.1} parent=5 // pred_fallthru
      _
    %p175 = scmp.le.s32.totalorder 1, %s10
    %p176 = scmp.lt.s32.totalorder %s10, 3
    %p177 = pnand %p175, %p176
    %p178 = pneg %p177
    // Predicated region
    $region33: #{conv_block_forward.1} parent=5 // pred_check
      _
    $region34: #{conv_block_forward.1} parent=5 // pred_check_branch
      %180 = sbr.rel (%p177) target = $region36
    $region35: #{conv_block_forward.1} parent=5 // pred_region
      %s181 = ssub.s32 %s10, 1
      %p182 = scmp.lt.s32.totalorder %s19, 1
      %s183 = scalar_select %p182, %s19, 1
      %s184 = smul.addr %s183, 54
      %s185 = smul.addr %s184, 8
      %s186 = scalar_lea.vmem %s0, %s185
      %p187 = pneg %p48
      %p188 = pneg %p45
      %p189 = pneg %p69
      %p190 = pneg %p66
      %p191 = pneg %p90
      %p192 = pneg %p87
      %p193 = pneg %p111
      %p194 = pneg %p108
      %p195 = pneg %p139
      %p196 = pneg %p136
      %s197 = smul.u32 32, %s20
      %p198 = scmp.lt.s32.totalorder %s19, 1
      %s199 = scalar_select %p198, %s19, 1
      %p200 = scmp.lt.s32.totalorder %s197, 31
      %s201 = scalar_select %p200, %s197, 31
      %s202 = smul.addr %s199, 32
      %s203 = sadd.s32 %s201, %s202
      %s204 = smul.addr %s203, 8
      %s205 = scalar_lea.vmem %s4, %s204
      %p206 = scmp.lt.s32.totalorder %s19, 1
      %s207 = scalar_select %p206, %s19, 1
      %s208 = smul.addr %s207, 54
      %s209 = smul.addr %s208, 8
      %s210 = scalar_lea.vmem %s0, %s209
      %s211 = smul.u32 32, %s20
      %p212 = scmp.lt.s32.totalorder %s19, 1
      %s213 = scalar_select %p212, %s19, 1
      %p214 = scmp.lt.s32.totalorder %s211, 31
      %s215 = scalar_select %p214, %s211, 31
      %s216 = smul.addr %s213, 32
      %s217 = sadd.s32 %s215, %s216
      %s218 = smul.addr %s217, 8
      %s219 = scalar_lea.vmem %s4, %s218
      %s220 = smul.u32 32, %s20
      %s221 = smul.u32 %s20, 16
      %222 = vst [vmem:[#allocation2] sm:$0xff] 0.0
      %223 = vst [vmem:[#allocation2 + $0x8] sm:$0xff] 0.0
      %224 = vst [vmem:[#allocation2 + $0x10] sm:$0xff] 0.0
      %225 = vst [vmem:[#allocation2 + $0x18] sm:$0xff] 0.0
      %226 = vst [vmem:[#allocation2 + $0x20] sm:$0xff] 0.0
      %227 = vst [vmem:[#allocation2 + $0x28] sm:$0xff] 0.0
      %228 = vst [vmem:[#allocation2 + $0x30] sm:$0xff] 0.0
      %229 = vst [vmem:[#allocation2 + $0x38] sm:$0xff] 0.0
      %230 = vst [vmem:[#allocation2 + $0x40] sm:$0xff] 0.0
      %231 = vst [vmem:[#allocation2 + $0x48] sm:$0xff] 0.0
      %232 = vst [vmem:[#allocation2 + $0x50] sm:$0xff] 0.0
      %233 = vst [vmem:[#allocation2 + $0x58] sm:$0xff] 0.0
      %234 = vst [vmem:[#allocation2 + $0x60] sm:$0xff] 0.0
      %235 = vst [vmem:[#allocation2 + $0x68] sm:$0xff] 0.0
      %236 = vst [vmem:[#allocation2 + $0x70] sm:$0xff] 0.0
      %237 = vst [vmem:[#allocation2 + $0x78] sm:$0xff] 0.0
      %238 = vst [vmem:[#allocation2 + $0x80] sm:$0xff] 0.0
      %239 = vst [vmem:[#allocation2 + $0x88] sm:$0xff] 0.0
      %240 = vst [vmem:[#allocation2 + $0x90] sm:$0xff] 0.0
      %241 = vst [vmem:[#allocation2 + $0x98] sm:$0xff] 0.0
      %242 = vst [vmem:[#allocation2 + $0xa0] sm:$0xff] 0.0
      %243 = vst [vmem:[#allocation2 + $0xa8] sm:$0xff] 0.0
      %244 = vst [vmem:[#allocation2 + $0xb0] sm:$0xff] 0.0
      %245 = vst [vmem:[#allocation2 + $0xb8] sm:$0xff] 0.0
      %246 = vst [vmem:[#allocation2 + $0xc0] sm:$0xff] 0.0
      %247 = vst [vmem:[#allocation2 + $0xc8] sm:$0xff] 0.0
      %248 = vst [vmem:[#allocation2 + $0xd0] sm:$0xff] 0.0
      %249 = vst [vmem:[#allocation2 + $0xd8] sm:$0xff] 0.0
      %250 = vst [vmem:[#allocation2 + $0xe0] sm:$0xff] 0.0
      %251 = vst [vmem:[#allocation2 + $0xe8] sm:$0xff] 0.0
      %252 = vst [vmem:[#allocation2 + $0xf0] sm:$0xff] 0.0
      %253 = vst [vmem:[#allocation2 + $0xf8] sm:$0xff] 0.0
      %s254 = smul.u32 %s221, 24
      %s255 = scalar_lea.vmem %s210, %s254
      %v256 = vld [vmem:[%s255] sm:$0xff]
      %v257 = vld [vmem:[%s255 + $0x8] sm:$0xff]
      %v258 = vld [vmem:[%s255 + $0x18] sm:$0xff]
      %v259 = vld [vmem:[%s255 + $0x20] sm:$0xff]
      %v260 = vld [vmem:[%s255 + $0x30] sm:$0xff]
      %v261 = vld [vmem:[%s255 + $0x38] sm:$0xff]
      %v262 = vld [vmem:[%s255 + $0x48] sm:$0xff]
      %v263 = vld [vmem:[%s255 + $0x50] sm:$0xff]
      %v264 = vld [vmem:[%s255 + $0x60] sm:$0xff]
      %v265 = vld [vmem:[%s255 + $0x68] sm:$0xff]
      %v266 = vld [vmem:[%s255 + $0x78] sm:$0xff]
      %v267 = vld [vmem:[%s255 + $0x80] sm:$0xff]
      %v268 = vld [vmem:[%s255 + $0x90] sm:$0xff]
      %v269 = vld [vmem:[%s255 + $0x98] sm:$0xff]
      %v270 = vld [vmem:[%s255 + $0xa8] sm:$0xff]
      %v271 = vld [vmem:[%s255 + $0xb0] sm:$0xff]
      %v272 = vld [vmem:[%s255 + $0xc0] sm:$0xff]
      %v273 = vld [vmem:[%s255 + $0xc8] sm:$0xff]
      %v274 = vld [vmem:[%s255 + $0xd8] sm:$0xff]
      %v275 = vld [vmem:[%s255 + $0xe0] sm:$0xff]
      %v276 = vld [vmem:[%s255 + $0xf0] sm:$0xff]
      %v277 = vld [vmem:[%s255 + $0xf8] sm:$0xff]
      %v278 = vld [vmem:[%s255 + $0x108] sm:$0xff]
      %v279 = vld [vmem:[%s255 + $0x110] sm:$0xff]
      %v280 = vld [vmem:[%s255 + $0x120] sm:$0xff]
      %v281 = vld [vmem:[%s255 + $0x128] sm:$0xff]
      %v282 = vld [vmem:[%s255 + $0x138] sm:$0xff]
      %v283 = vld [vmem:[%s255 + $0x140] sm:$0xff]
      %v284 = vld [vmem:[%s255 + $0x150] sm:$0xff]
      %v285 = vld [vmem:[%s255 + $0x158] sm:$0xff]
      %v286 = vld [vmem:[%s255 + $0x168] sm:$0xff]
      %v287 = vld [vmem:[%s255 + $0x170] sm:$0xff]
      %v288 = vld [vmem:[#allocation2] sm:$0xff]
      %v289 = vld [vmem:[#allocation2 + $0x8] sm:$0xff]
      %v290 = vld [vmem:[#allocation2 + $0x10] sm:$0xff]
      %v291 = vld [vmem:[#allocation2 + $0x18] sm:$0xff]
      %v292 = vld [vmem:[#allocation2 + $0x20] sm:$0xff]
      %v293 = vld [vmem:[#allocation2 + $0x28] sm:$0xff]
      %v294 = vld [vmem:[#allocation2 + $0x30] sm:$0xff]
      %v295 = vld [vmem:[#allocation2 + $0x38] sm:$0xff]
      %v296 = vld [vmem:[#allocation2 + $0x40] sm:$0xff]
      %v297 = vld [vmem:[#allocation2 + $0x48] sm:$0xff]
      %v298 = vld [vmem:[#allocation2 + $0x50] sm:$0xff]
      %v299 = vld [vmem:[#allocation2 + $0x58] sm:$0xff]
      %v300 = vld [vmem:[#allocation2 + $0x60] sm:$0xff]
      %v301 = vld [vmem:[#allocation2 + $0x68] sm:$0xff]
      %v302 = vld [vmem:[#allocation2 + $0x70] sm:$0xff]
      %v303 = vld [vmem:[#allocation2 + $0x78] sm:$0xff]
      %v304 = vld [vmem:[#allocation2 + $0x80] sm:$0xff]
      %v305 = vld [vmem:[#allocation2 + $0x88] sm:$0xff]
      %v306 = vld [vmem:[#allocation2 + $0x90] sm:$0xff]
      %v307 = vld [vmem:[#allocation2 + $0x98] sm:$0xff]
      %v308 = vld [vmem:[#allocation2 + $0xa0] sm:$0xff]
      %v309 = vld [vmem:[#allocation2 + $0xa8] sm:$0xff]
      %v310 = vld [vmem:[#allocation2 + $0xb0] sm:$0xff]
      %v311 = vld [vmem:[#allocation2 + $0xb8] sm:$0xff]
      %v312 = vld [vmem:[#allocation2 + $0xc0] sm:$0xff]
      %v313 = vld [vmem:[#allocation2 + $0xc8] sm:$0xff]
      %v314 = vld [vmem:[#allocation2 + $0xd0] sm:$0xff]
      %v315 = vld [vmem:[#allocation2 + $0xd8] sm:$0xff]
      %v316 = vld [vmem:[#allocation2 + $0xe0] sm:$0xff]
      %v317 = vld [vmem:[#allocation2 + $0xe8] sm:$0xff]
      %v318 = vld [vmem:[#allocation2 + $0xf0] sm:$0xff]
      %v319 = vld [vmem:[#allocation2 + $0xf8] sm:$0xff]
      %v320 = vld [vmem:[%s1] sm:$0xf]
      %vm321 = vcmask 31744
      %v323 = vsel %vm321, %v256, 0
      %v326 = vsel %vm321, %v257, 0
      %v329 = vsel %vm321, %v258, 0
      %v332 = vsel %vm321, %v259, 0
      %v335 = vsel %vm321, %v260, 0
      %v338 = vsel %vm321, %v261, 0
      %v341 = vsel %vm321, %v262, 0
      %v344 = vsel %vm321, %v263, 0
      %v347 = vsel %vm321, %v264, 0
      %v350 = vsel %vm321, %v265, 0
      %v353 = vsel %vm321, %v266, 0
      %v356 = vsel %vm321, %v267, 0
      %v359 = vsel %vm321, %v268, 0
      %v362 = vsel %vm321, %v269, 0
      %v365 = vsel %vm321, %v270, 0
      %v368 = vsel %vm321, %v271, 0
      %v371 = vsel %vm321, %v272, 0
      %v374 = vsel %vm321, %v273, 0
      %v377 = vsel %vm321, %v274, 0
      %v380 = vsel %vm321, %v275, 0
      %v383 = vsel %vm321, %v276, 0
      %v386 = vsel %vm321, %v277, 0
      %v389 = vsel %vm321, %v278, 0
      %v392 = vsel %vm321, %v279, 0
      %v395 = vsel %vm321, %v280, 0
      %v398 = vsel %vm321, %v281, 0
      %v401 = vsel %vm321, %v282, 0
      %v404 = vsel %vm321, %v283, 0
      %v407 = vsel %vm321, %v284, 0
      %v410 = vsel %vm321, %v285, 0
      %v413 = vsel %vm321, %v286, 0
      %v416 = vsel %vm321, %v287, 0
      %vm418 = vcmask 1043456
      %v420 = vsel %vm418, %v320, 0
      %422 = vmatprep.subr.mxu0 0.0
      %423 = vmatpush1.msra.mxu0 %v420
      %424 = vmatprep.subr.mxu0 0.0
      %425 = vmatpush1.msra.mxu0 0.0
      %426 = vmatprep.subr.mxu0 0.0
      %427 = vmatpush1.msra.mxu0 0.0
      %428 = vmatprep.subr.mxu0 0.0
      %429 = vmatpush1.msra.mxu0 0.0
      %430 = vmatprep.subr.mxu0 0.0
      %431 = vmatpush1.msra.mxu0 0.0
      %432 = vmatprep.subr.mxu0 0.0
      %433 = vmatpush1.msra.mxu0 0.0
      %434 = vmatprep.subr.mxu0 0.0
      %435 = vmatpush1.msra.mxu0 0.0
      %436 = vmatprep.subr.mxu0 0.0
      %437 = vmatpush1.msra.mxu0 0.0
      %438 = vmatprep.subr.mxu0 0.0
      %439 = vmatpush1.msra.mxu0 0.0
      %440 = vmatprep.subr.mxu0 0.0
      %441 = vmatpush1.msra.mxu0 0.0
      %442 = vmatprep.subr.mxu0 0.0
      %443 = vmatpush1.msra.mxu0 0.0
      %444 = vmatprep.subr.mxu0 0.0
      %445 = vmatpush1.msra.mxu0 0.0
      %446 = vmatprep.subr.mxu0 0.0
      %447 = vmatpush1.msra.mxu0 0.0
      %448 = vmatprep.subr.mxu0 0.0
      %449 = vmatpush1.msra.mxu0 0.0
      %450 = vmatprep.subr.mxu0 0.0
      %451 = vmatpush1.msra.mxu0 0.0
      %452 = vmatprep.subr.mxu0 0.0
      %453 = vmatpush1.msra.mxu0 0.0
      %454 = vmatprep.subr.mxu0 0.0
      %455 = vmatpush1.msra.mxu0 0.0
      %456 = vmatprep.subr.mxu0 0.0
      %457 = vmatpush1.msra.mxu0 0.0
      %458 = vmatprep.subr.mxu0 0.0
      %459 = vmatpush1.msra.mxu0 0.0
      %460 = vmatprep.subr.mxu0 0.0
      %461 = vmatpush1.msra.mxu0 0.0
      %462 = vmatprep.subr.mxu0 0.0
      %463 = vmatpush1.msra.mxu0 0.0
      %464 = vmatprep.subr.mxu0 0.0
      %465 = vmatpush1.msra.mxu0 0.0
      %466 = vmatprep.subr.mxu0 0.0
      %467 = vmatpush1.msra.mxu0 0.0
      %468 = vmatprep.subr.mxu0 0.0
      %469 = vmatpush1.msra.mxu0 0.0
      %470 = vmatprep.subr.mxu0 0.0
      %471 = vmatpush1.msra.mxu0 0.0
      %472 = vmatprep.subr.mxu0 0.0
      %473 = vmatpush1.msra.mxu0 0.0
      %474 = vmatprep.subr.mxu0 0.0
      %475 = vmatpush1.msra.mxu0 0.0
      %476 = vmatprep.subr.mxu0 0.0
      %477 = vmatpush1.msra.mxu0 0.0
      %478 = vmatprep.subr.mxu0 0.0
      %479 = vmatpush1.msra.mxu0 0.0
      %480 = vmatprep.subr.mxu0 0.0
      %481 = vmatpush1.msra.mxu0 0.0
      %482 = vmatprep.subr.mxu0 0.0
      %483 = vmatpush1.msra.mxu0 0.0
      %484 = vmatprep.subr.mxu0 0.0
      %485 = vmatpush1.msra.mxu0 0.0
      %486 = vmatprep.mubr.f32.mxu0 0.0
      %487 = vmatmul.mubr.f32.gmra.mrb[0].mxu0 %v323
      %v488 = vpop.f32.mrb[0].mxu0
      %v489 = vadd.f32 0.0, %v488
      %v490 = vpop.f32.mrb[0].mxu0
      %491 = vmatprep.mubr.f32.mxu0 0.0
      %492 = vmatmul.mubr.f32.gmra.mrb[0].mxu0 %v326
      %v493 = vpop.f32.mrb[0].mxu0
      %v494 = vadd.f32 0.0, %v493
      %v495 = vpop.f32.mrb[0].mxu0
      %496 = vmatprep.mubr.f32.mxu0 0.0
      %497 = vmatmul.mubr.f32.gmra.mrb[0].mxu0 %v329
      %v498 = vpop.f32.mrb[0].mxu0
      %v499 = vadd.f32 0.0, %v498
      %v500 = vpop.f32.mrb[0].mxu0
      %501 = vmatprep.mubr.f32.mxu0 0.0
      %502 = vmatmul.mubr.f32.gmra.mrb[0].mxu0 %v332
      %v503 = vpop.f32.mrb[0].mxu0
      %v504 = vadd.f32 0.0, %v503
      %v505 = vpop.f32.mrb[0].mxu0
      %506 = vmatprep.mubr.f32.mxu0 0.0
      %507 = vmatmul.mubr.f32.gmra.mrb[0].mxu0 %v335
      %v508 = vpop.f32.mrb[0].mxu0
      %v509 = vadd.f32 0.0, %v508
      %v510 = vpop.f32.mrb[0].mxu0
      %511 = vmatprep.mubr.f32.mxu0 0.0
      %512 = vmatmul.mubr.f32.gmra.mrb[0].mxu0 %v338
      %v513 = vpop.f32.mrb[0].mxu0
      %v514 = vadd.f32 0.0, %v513
      %v515 = vpop.f32.mrb[0].mxu0
      %516 = vmatprep.mubr.f32.mxu0 0.0
      %517 = vmatmul.mubr.f32.gmra.mrb[0].mxu0 %v341
      %v518 = vpop.f32.mrb[0].mxu0
      %v519 = vadd.f32 0.0, %v518
      %v520 = vpop.f32.mrb[0].mxu0
      %521 = vmatprep.mubr.f32.mxu0 0.0
      %522 = vmatmul.mubr.f32.gmra.mrb[0].mxu0 %v344
      %v523 = vpop.f32.mrb[0].mxu0
      %v524 = vadd.f32 0.0, %v523
      %v525 = vpop.f32.mrb[0].mxu0
      %526 = vmatprep.mubr.f32.mxu0 0.0
      %527 = vmatmul.mubr.f32.gmra.mrb[0].mxu0 %v347
      %v528 = vpop.f32.mrb[0].mxu0
      %v529 = vadd.f32 0.0, %v528
      %v530 = vpop.f32.mrb[0].mxu0
      %531 = vmatprep.mubr.f32.mxu0 0.0
      %532 = vmatmul.mubr.f32.gmra.mrb[0].mxu0 %v350
      %v533 = vpop.f32.mrb[0].mxu0
      %v534 = vadd.f32 0.0, %v533
      %v535 = vpop.f32.mrb[0].mxu0
      %536 = vmatprep.mubr.f32.mxu0 0.0
      %537 = vmatmul.mubr.f32.gmra.mrb[0].mxu0 %v353
      %v538 = vpop.f32.mrb[0].mxu0
      %v539 = vadd.f32 0.0, %v538
      %v540 = vpop.f32.mrb[0].mxu0
      %541 = vmatprep.mubr.f32.mxu0 0.0
      %542 = vmatmul.mubr.f32.gmra.mrb[0].mxu0 %v356
      %v543 = vpop.f32.mrb[0].mxu0
      %v544 = vadd.f32 0.0, %v543
      %v545 = vpop.f32.mrb[0].mxu0
      %546 = vmatprep.mubr.f32.mxu0 0.0
      %547 = vmatmul.mubr.f32.gmra.mrb[0].mxu0 %v359
      %v548 = vpop.f32.mrb[0].mxu0
      %v549 = vadd.f32 0.0, %v548
      %v550 = vpop.f32.mrb[0].mxu0
      %551 = vmatprep.mubr.f32.mxu0 0.0
      %552 = vmatmul.mubr.f32.gmra.mrb[0].mxu0 %v362
      %v553 = vpop.f32.mrb[0].mxu0
      %v554 = vadd.f32 0.0, %v553
      %v555 = vpop.f32.mrb[0].mxu0
      %556 = vmatprep.mubr.f32.mxu0 0.0
      %557 = vmatmul.mubr.f32.gmra.mrb[0].mxu0 %v365
      %v558 = vpop.f32.mrb[0].mxu0
      %v559 = vadd.f32 0.0, %v558
      %v560 = vpop.f32.mrb[0].mxu0
      %561 = vmatprep.mubr.f32.mxu0 0.0
      %562 = vmatmul.mubr.f32.gmra.mrb[0].mxu0 %v368
      %v563 = vpop.f32.mrb[0].mxu0
      %v564 = vadd.f32 0.0, %v563
      %v565 = vpop.f32.mrb[0].mxu0
      %566 = vmatprep.mubr.f32.mxu0 0.0
      %567 = vmatmul.mubr.f32.gmra.mrb[0].mxu0 %v371
      %v568 = vpop.f32.mrb[0].mxu0
      %v569 = vadd.f32 0.0, %v568
      %v570 = vpop.f32.mrb[0].mxu0
      %571 = vmatprep.mubr.f32.mxu0 0.0
      %572 = vmatmul.mubr.f32.gmra.mrb[0].mxu0 %v374
      %v573 = vpop.f32.mrb[0].mxu0
      %v574 = vadd.f32 0.0, %v573
      %v575 = vpop.f32.mrb[0].mxu0
      %576 = vmatprep.mubr.f32.mxu0 0.0
      %577 = vmatmul.mubr.f32.gmra.mrb[0].mxu0 %v377
      %v578 = vpop.f32.mrb[0].mxu0
      %v579 = vadd.f32 0.0, %v578
      %v580 = vpop.f32.mrb[0].mxu0
      %581 = vmatprep.mubr.f32.mxu0 0.0
      %582 = vmatmul.mubr.f32.gmra.mrb[0].mxu0 %v380
      %v583 = vpop.f32.mrb[0].mxu0
      %v584 = vadd.f32 0.0, %v583
      %v585 = vpop.f32.mrb[0].mxu0
      %586 = vmatprep.mubr.f32.mxu0 0.0
      %587 = vmatmul.mubr.f32.gmra.mrb[0].mxu0 %v383
      %v588 = vpop.f32.mrb[0].mxu0
      %v589 = vadd.f32 0.0, %v588
      %v590 = vpop.f32.mrb[0].mxu0
      %591 = vmatprep.mubr.f32.mxu0 0.0
      %592 = vmatmul.mubr.f32.gmra.mrb[0].mxu0 %v386
      %v593 = vpop.f32.mrb[0].mxu0
      %v594 = vadd.f32 0.0, %v593
      %v595 = vpop.f32.mrb[0].mxu0
      %596 = vmatprep.mubr.f32.mxu0 0.0
      %597 = vmatmul.mubr.f32.gmra.mrb[0].mxu0 %v389
      %v598 = vpop.f32.mrb[0].mxu0
      %v599 = vadd.f32 0.0, %v598
      %v600 = vpop.f32.mrb[0].mxu0
      %601 = vmatprep.mubr.f32.mxu0 0.0
      %602 = vmatmul.mubr.f32.gmra.mrb[0].mxu0 %v392
      %v603 = vpop.f32.mrb[0].mxu0
      %v604 = vadd.f32 0.0, %v603
      %v605 = vpop.f32.mrb[0].mxu0
      %606 = vmatprep.mubr.f32.mxu0 0.0
      %607 = vmatmul.mubr.f32.gmra.mrb[0].mxu0 %v395
      %v608 = vpop.f32.mrb[0].mxu0
      %v609 = vadd.f32 0.0, %v608
      %v610 = vpop.f32.mrb[0].mxu0
      %611 = vmatprep.mubr.f32.mxu0 0.0
      %612 = vmatmul.mubr.f32.gmra.mrb[0].mxu0 %v398
      %v613 = vpop.f32.mrb[0].mxu0
      %v614 = vadd.f32 0.0, %v613
      %v615 = vpop.f32.mrb[0].mxu0
      %616 = vmatprep.mubr.f32.mxu0 0.0
      %617 = vmatmul.mubr.f32.gmra.mrb[0].mxu0 %v401
      %v618 = vpop.f32.mrb[0].mxu0
      %v619 = vadd.f32 0.0, %v618
      %v620 = vpop.f32.mrb[0].mxu0
      %621 = vmatprep.mubr.f32.mxu0 0.0
      %622 = vmatmul.mubr.f32.gmra.mrb[0].mxu0 %v404
      %v623 = vpop.f32.mrb[0].mxu0
      %v624 = vadd.f32 0.0, %v623
      %v625 = vpop.f32.mrb[0].mxu0
      %626 = vmatprep.mubr.f32.mxu0 0.0
      %627 = vmatmul.mubr.f32.gmra.mrb[0].mxu0 %v407
      %v628 = vpop.f32.mrb[0].mxu0
      %v629 = vadd.f32 0.0, %v628
      %v630 = vpop.f32.mrb[0].mxu0
      %631 = vmatprep.mubr.f32.mxu0 0.0
      %632 = vmatmul.mubr.f32.gmra.mrb[0].mxu0 %v410
      %v633 = vpop.f32.mrb[0].mxu0
      %v634 = vadd.f32 0.0, %v633
      %v635 = vpop.f32.mrb[0].mxu0
      %636 = vmatprep.mubr.f32.mxu0 0.0
      %637 = vmatmul.mubr.f32.gmra.mrb[0].mxu0 %v413
      %v638 = vpop.f32.mrb[0].mxu0
      %v639 = vadd.f32 0.0, %v638
      %v640 = vpop.f32.mrb[0].mxu0
      %641 = vmatprep.mubr.f32.mxu0 0.0
      %642 = vmatmul.mubr.f32.gmra.mrb[0].mxu0 %v416
      %v643 = vpop.f32.mrb[0].mxu0
      %v644 = vadd.f32 0.0, %v643
      %v645 = vpop.f32.mrb[0].mxu0
      %646 = vdwg.mxu0
      %v647 = vadd.f32 %v288, %v489
      %v648 = vadd.f32 %v289, %v494
      %v649 = vadd.f32 %v290, %v499
      %v650 = vadd.f32 %v291, %v504
      %v651 = vadd.f32 %v292, %v509
      %v652 = vadd.f32 %v293, %v514
      %v653 = vadd.f32 %v294, %v519
      %v654 = vadd.f32 %v295, %v524
      %v655 = vadd.f32 %v296, %v529
      %v656 = vadd.f32 %v297, %v534
      %v657 = vadd.f32 %v298, %v539
      %v658 = vadd.f32 %v299, %v544
      %v659 = vadd.f32 %v300, %v549
      %v660 = vadd.f32 %v301, %v554
      %v661 = vadd.f32 %v302, %v559
      %v662 = vadd.f32 %v303, %v564
      %v663 = vadd.f32 %v304, %v569
      %v664 = vadd.f32 %v305, %v574
      %v665 = vadd.f32 %v306, %v579
      %v666 = vadd.f32 %v307, %v584
      %v667 = vadd.f32 %v308, %v589
      %v668 = vadd.f32 %v309, %v594
      %v669 = vadd.f32 %v310, %v599
      %v670 = vadd.f32 %v311, %v604
      %v671 = vadd.f32 %v312, %v609
      %v672 = vadd.f32 %v313, %v614
      %v673 = vadd.f32 %v314, %v619
      %v674 = vadd.f32 %v315, %v624
      %v675 = vadd.f32 %v316, %v629
      %v676 = vadd.f32 %v317, %v634
      %v677 = vadd.f32 %v318, %v639
      %v678 = vadd.f32 %v319, %v644
      %679 = vst [vmem:[#allocation2] sm:$0xff] %v647
      %680 = vst [vmem:[#allocation2 + $0x8] sm:$0xff] %v648
      %681 = vst [vmem:[#allocation2 + $0x10] sm:$0xff] %v649
      %682 = vst [vmem:[#allocation2 + $0x18] sm:$0xff] %v650
      %683 = vst [vmem:[#allocation2 + $0x20] sm:$0xff] %v651
      %684 = vst [vmem:[#allocation2 + $0x28] sm:$0xff] %v652
      %685 = vst [vmem:[#allocation2 + $0x30] sm:$0xff] %v653
      %686 = vst [vmem:[#allocation2 + $0x38] sm:$0xff] %v654
      %687 = vst [vmem:[#allocation2 + $0x40] sm:$0xff] %v655
      %688 = vst [vmem:[#allocation2 + $0x48] sm:$0xff] %v656
      %689 = vst [vmem:[#allocation2 + $0x50] sm:$0xff] %v657
      %690 = vst [vmem:[#allocation2 + $0x58] sm:$0xff] %v658
      %691 = vst [vmem:[#allocation2 + $0x60] sm:$0xff] %v659
      %692 = vst [vmem:[#allocation2 + $0x68] sm:$0xff] %v660
      %693 = vst [vmem:[#allocation2 + $0x70] sm:$0xff] %v661
      %694 = vst [vmem:[#allocation2 + $0x78] sm:$0xff] %v662
      %695 = vst [vmem:[#allocation2 + $0x80] sm:$0xff] %v663
      %696 = vst [vmem:[#allocation2 + $0x88] sm:$0xff] %v664
      %697 = vst [vmem:[#allocation2 + $0x90] sm:$0xff] %v665
      %698 = vst [vmem:[#allocation2 + $0x98] sm:$0xff] %v666
      %699 = vst [vmem:[#allocation2 + $0xa0] sm:$0xff] %v667
      %700 = vst [vmem:[#allocation2 + $0xa8] sm:$0xff] %v668
      %701 = vst [vmem:[#allocation2 + $0xb0] sm:$0xff] %v669
      %702 = vst [vmem:[#allocation2 + $0xb8] sm:$0xff] %v670
      %703 = vst [vmem:[#allocation2 + $0xc0] sm:$0xff] %v671
      %704 = vst [vmem:[#allocation2 + $0xc8] sm:$0xff] %v672
      %705 = vst [vmem:[#allocation2 + $0xd0] sm:$0xff] %v673
      %706 = vst [vmem:[#allocation2 + $0xd8] sm:$0xff] %v674
      %707 = vst [vmem:[#allocation2 + $0xe0] sm:$0xff] %v675
      %708 = vst [vmem:[#allocation2 + $0xe8] sm:$0xff] %v676
      %709 = vst [vmem:[#allocation2 + $0xf0] sm:$0xff] %v677
      %710 = vst [vmem:[#allocation2 + $0xf8] sm:$0xff] %v678
      %v711 = vld [vmem:[%s255 + $0x1] sm:$0xff]
      %v712 = vld [vmem:[%s255 + $0x9] sm:$0xff]
      %v713 = vld [vmem:[%s255 + $0x19] sm:$0xff]
      %v714 = vld [vmem:[%s255 + $0x21] sm:$0xff]
      %v715 = vld [vmem:[%s255 + $0x31] sm:$0xff]
      %v716 = vld [vmem:[%s255 + $0x39] sm:$0xff]
      %v717 = vld [vmem:[%s255 + $0x49] sm:$0xff]
      %v718 = vld [vmem:[%s255 + $0x51] sm:$0xff]
      %v719 = vld [vmem:[%s255 + $0x61] sm:$0xff]
      %v720 = vld [vmem:[%s255 + $0x69] sm:$0xff]
      %v721 = vld [vmem:[%s255 + $0x79] sm:$0xff]
      %v722 = vld [vmem:[%s255 + $0x81] sm:$0xff]
      %v723 = vld [vmem:[%s255 + $0x91] sm:$0xff]
      %v724 = vld [vmem:[%s255 + $0x99] sm:$0xff]
      %v725 = vld [vmem:[%s255 + $0xa9] sm:$0xff]
      %v726 = vld [vmem:[%s255 + $0xb1] sm:$0xff]
      %v727 = vld [vmem:[%s255 + $0xc1] sm:$0xff]
      %v728 = vld [vmem:[%s255 + $0xc9] sm:$0xff]
      %v729 = vld [vmem:[%s255 + $0xd9] sm:$0xff]
      %v730 = vld [vmem:[%s255 + $0xe1] sm:$0xff]
      %v731 = vld [vmem:[%s255 + $0xf1] sm:$0xff]
      %v732 = vld [vmem:[%s255 + $0xf9] sm:$0xff]
      %v733 = vld [vmem:[%s255 + $0x109] sm:$0xff]
      %v734 = vld [vmem:[%s255 + $0x111] sm:$0xff]
      %v735 = vld [vmem:[%s255 + $0x121] sm:$0xff]
      %v736 = vld [vmem:[%s255 + $0x129] sm:$0xff]
      %v737 = vld [vmem:[%s255 + $0x139] sm:$0xff]
      %v738 = vld [vmem:[%s255 + $0x141] sm:$0xff]
      %v739 = vld [vmem:[%s255 + $0x151] sm:$0xff]
      %v740 = vld [vmem:[%s255 + $0x159] sm:$0xff]
      %v741 = vld [vmem:[%s255 + $0x169] sm:$0xff]
      %v742 = vld [vmem:[%s255 + $0x171] sm:$0xff]
      %v743 = vld [vmem:[#allocation2] sm:$0xff]
      %v744 = vld [vmem:[#allocation2 + $0x8] sm:$0xff]
      %v745 = vld [vmem:[#allocation2 + $0x10] sm:$0xff]
      %v746 = vld [vmem:[#allocation2 + $0x18] sm:$0xff]
      %v747 = vld [vmem:[#allocation2 + $0x20] sm:$0xff]
      %v748 = vld [vmem:[#allocation2 + $0x28] sm:$0xff]
      %v749 = vld [vmem:[#allocation2 + $0x30] sm:$0xff]
      %v750 = vld [vmem:[#allocation2 + $0x38] sm:$0xff]
      %v751 = vld [vmem:[#allocation2 + $0x40] sm:$0xff]
      %v752 = vld [vmem:[#allocation2 + $0x48] sm:$0xff]
      %v753 = vld [vmem:[#allocation2 + $0x50] sm:$0xff]
      %v754 = vld [vmem:[#allocation2 + $0x58] sm:$0xff]
      %v755 = vld [vmem:[#allocation2 + $0x60] sm:$0xff]
      %v756 = vld [vmem:[#allocation2 + $0x68] sm:$0xff]
      %v757 = vld [vmem:[#allocation2 + $0x70] sm:$0xff]
      %v758 = vld [vmem:[#allocation2 + $0x78] sm:$0xff]
      %v759 = vld [vmem:[#allocation2 + $0x80] sm:$0xff]
      %v760 = vld [vmem:[#allocation2 + $0x88] sm:$0xff]
      %v761 = vld [vmem:[#allocation2 + $0x90] sm:$0xff]
      %v762 = vld [vmem:[#allocation2 + $0x98] sm:$0xff]
      %v763 = vld [vmem:[#allocation2 + $0xa0] sm:$0xff]
      %v764 = vld [vmem:[#allocation2 + $0xa8] sm:$0xff]
      %v765 = vld [vmem:[#allocation2 + $0xb0] sm:$0xff]
      %v766 = vld [vmem:[#allocation2 + $0xb8] sm:$0xff]
      %v767 = vld [vmem:[#allocation2 + $0xc0] sm:$0xff]
      %v768 = vld [vmem:[#allocation2 + $0xc8] sm:$0xff]
      %v769 = vld [vmem:[#allocation2 + $0xd0] sm:$0xff]
      %v770 = vld [vmem:[#allocation2 + $0xd8] sm:$0xff]
      %v771 = vld [vmem:[#allocation2 + $0xe0] sm:$0xff]
      %v772 = vld [vmem:[#allocation2 + $0xe8] sm:$0xff]
      %v773 = vld [vmem:[#allocation2 + $0xf0] sm:$0xff]
      %v774 = vld [vmem:[#allocation2 + $0xf8] sm:$0xff]
      %s775 = scalar_lea.vmem %s1, 4
      %v776 = vld [vmem:[%s775] sm:$0xf]
      %v778 = vsel %vm321, %v711, 0
      %v781 = vsel %vm321, %v712, 0
      %v784 = vsel %vm321, %v713, 0
      %v787 = vsel %vm321, %v714, 0
      %v790 = vsel %vm321, %v715, 0
      %v793 = vsel %vm321, %v716, 0
      %v796 = vsel %vm321, %v717, 0
      %v799 = vsel %vm321, %v718, 0
      %v802 = vsel %vm321, %v719, 0
      %v805 = vsel %vm321, %v720, 0
      %v808 = vsel %vm321, %v721, 0
      %v811 = vsel %vm321, %v722, 0
      %v814 = vsel %vm321, %v723, 0
      %v817 = vsel %vm321, %v724, 0
      %v820 = vsel %vm321, %v725, 0
      %v823 = vsel %vm321, %v726, 0
      %v826 = vsel %vm321, %v727, 0
      %v829 = vsel %vm321, %v728, 0
      %v832 = vsel %vm321, %v729, 0
      %v835 = vsel %vm321, %v730, 0
      %v838 = vsel %vm321, %v731, 0
      %v841 = vsel %vm321, %v732, 0
      %v844 = vsel %vm321, %v733, 0
      %v847 = vsel %vm321, %v734, 0
      %v850 = vsel %vm321, %v735, 0
      %v853 = vsel %vm321, %v736, 0
      %v856 = vsel %vm321, %v737, 0
      %v859 = vsel %vm321, %v738, 0
      %v862 = vsel %vm321, %v739, 0
      %v865 = vsel %vm321, %v740, 0
      %v868 = vsel %vm321, %v741, 0
      %v871 = vsel %vm321, %v742, 0
      %v874 = vsel %vm418, %v776, 0
      %876 = vmatprep.subr.mxu0 0.0
      %877 = vmatpush1.msra.mxu0 %v874
      %878 = vmatprep.subr.mxu0 0.0
      %879 = vmatpush1.msra.mxu0 0.0
      %880 = vmatprep.subr.mxu0 0.0
      %881 = vmatpush1.msra.mxu0 0.0
      %882 = vmatprep.subr.mxu0 0.0
      %883 = vmatpush1.msra.mxu0 0.0
      %884 = vmatprep.subr.mxu0 0.0
      %885 = vmatpush1.msra.mxu0 0.0
      %886 = vmatprep.subr.mxu0 0.0
      %887 = vmatpush1.msra.mxu0 0.0
      %888 = vmatprep.subr.mxu0 0.0
      %889 = vmatpush1.msra.mxu0 0.0
      %890 = vmatprep.subr.mxu0 0.0
      %891 = vmatpush1.msra.mxu0 0.0
      %892 = vmatprep.subr.mxu0 0.0
      %893 = vmatpush1.msra.mxu0 0.0
      %894 = vmatprep.subr.mxu0 0.0
      %895 = vmatpush1.msra.mxu0 0.0
      %896 = vmatprep.subr.mxu0 0.0
      %897 = vmatpush1.msra.mxu0 0.0
      %898 = vmatprep.subr.mxu0 0.0
      %899 = vmatpush1.msra.mxu0 0.0
      %900 = vmatprep.subr.mxu0 0.0
      %901 = vmatpush1.msra.mxu0 0.0
      %902 = vmatprep.subr.mxu0 0.0
      %903 = vmatpush1.msra.mxu0 0.0
      %904 = vmatprep.subr.mxu0 0.0
      %905 = vmatpush1.msra.mxu0 0.0
      %906 = vmatprep.subr.mxu0 0.0
      %907 = vmatpush1.msra.mxu0 0.0
      %908 = vmatprep.subr.mxu0 0.0
      %909 = vmatpush1.msra.mxu0 0.0
      %910 = vmatprep.subr.mxu0 0.0
      %911 = vmatpush1.msra.mxu0 0.0
      %912 = vmatprep.subr.mxu0 0.0
      %913 = vmatpush1.msra.mxu0 0.0
      %914 = vmatprep.subr.mxu0 0.0
      %915 = vmatpush1.msra.mxu0 0.0
      %916 = vmatprep.subr.mxu0 0.0
      %917 = vmatpush1.msra.mxu0 0.0
      %918 = vmatprep.subr.mxu0 0.0
      %919 = vmatpush1.msra.mxu0 0.0
      %920 = vmatprep.subr.mxu0 0.0
      %921 = vmatpush1.msra.mxu0 0.0
      %922 = vmatprep.subr.mxu0 0.0
      %923 = vmatpush1.msra.mxu0 0.0
      %924 = vmatprep.subr.mxu0 0.0
      %925 = vmatpush1.msra.mxu0 0.0
      %926 = vmatprep.subr.mxu0 0.0
      %927 = vmatpush1.msra.mxu0 0.0
      %928 = vmatprep.subr.mxu0 0.0
      %929 = vmatpush1.msra.mxu0 0.0
      %930 = vmatprep.subr.mxu0 0.0
      %931 = vmatpush1.msra.mxu0 0.0
      %932 = vmatprep.subr.mxu0 0.0
      %933 = vmatpush1.msra.mxu0 0.0
      %934 = vmatprep.subr.mxu0 0.0
      %935 = vmatpush1.msra.mxu0 0.0
      %936 = vmatprep.subr.mxu0 0.0
      %937 = vmatpush1.msra.mxu0 0.0
      %938 = vmatprep.subr.mxu0 0.0
      %939 = vmatpush1.msra.mxu0 0.0
      %940 = vmatprep.mubr.f32.mxu0 0.0
      %941 = vmatmul.mubr.f32.gmra.mrb[0].mxu0 %v778
      %v942 = vpop.f32.mrb[0].mxu0
      %v943 = vadd.f32 0.0, %v942
      %v944 = vpop.f32.mrb[0].mxu0
      %945 = vmatprep.mubr.f32.mxu0 0.0
      %946 = vmatmul.mubr.f32.gmra.mrb[0].mxu0 %v781
      %v947 = vpop.f32.mrb[0].mxu0
      %v948 = vadd.f32 0.0, %v947
      %v949 = vpop.f32.mrb[0].mxu0
      %950 = vmatprep.mubr.f32.mxu0 0.0
      %951 = vmatmul.mubr.f32.gmra.mrb[0].mxu0 %v784
      %v952 = vpop.f32.mrb[0].mxu0
      %v953 = vadd.f32 0.0, %v952
      %v954 = vpop.f32.mrb[0].mxu0
      %955 = vmatprep.mubr.f32.mxu0 0.0
      %956 = vmatmul.mubr.f32.gmra.mrb[0].mxu0 %v787
      %v957 = vpop.f32.mrb[0].mxu0
      %v958 = vadd.f32 0.0, %v957
      %v959 = vpop.f32.mrb[0].mxu0
      %960 = vmatprep.mubr.f32.mxu0 0.0
      %961 = vmatmul.mubr.f32.gmra.mrb[0].mxu0 %v790
      %v962 = vpop.f32.mrb[0].mxu0
      %v963 = vadd.f32 0.0, %v962
      %v964 = vpop.f32.mrb[0].mxu0
      %965 = vmatprep.mubr.f32.mxu0 0.0
      %966 = vmatmul.mubr.f32.gmra.mrb[0].mxu0 %v793
      %v967 = vpop.f32.mrb[0].mxu0
      %v968 = vadd.f32 0.0, %v967
      %v969 = vpop.f32.mrb[0].mxu0
      %970 = vmatprep.mubr.f32.mxu0 0.0
      %971 = vmatmul.mubr.f32.gmra.mrb[0].mxu0 %v796
      %v972 = vpop.f32.mrb[0].mxu0
      %v973 = vadd.f32 0.0, %v972
      %v974 = vpop.f32.mrb[0].mxu0
      %975 = vmatprep.mubr.f32.mxu0 0.0
      %976 = vmatmul.mubr.f32.gmra.mrb[0].mxu0 %v799
      %v977 = vpop.f32.mrb[0].mxu0
      %v978 = vadd.f32 0.0, %v977
      %v979 = vpop.f32.mrb[0].mxu0
      %980 = vmatprep.mubr.f32.mxu0 0.0
      %981 = vmatmul.mubr.f32.gmra.mrb[0].mxu0 %v802
      %v982 = vpop.f32.mrb[0].mxu0
      %v983 = vadd.f32 0.0, %v982
      %v984 = vpop.f32.mrb[0].mxu0
      %985 = vmatprep.mubr.f32.mxu0 0.0
      %986 = vmatmul.mubr.f32.gmra.mrb[0].mxu0 %v805
      %v987 = vpop.f32.mrb[0].mxu0
      %v988 = vadd.f32 0.0, %v987
      %v989 = vpop.f32.mrb[0].mxu0
      %990 = vmatprep.mubr.f32.mxu0 0.0
      %991 = vmatmul.mubr.f32.gmra.mrb[0].mxu0 %v808
      %v992 = vpop.f32.mrb[0].mxu0
      %v993 = vadd.f32 0.0, %v992
      %v994 = vpop.f32.mrb[0].mxu0
      %995 = vmatprep.mubr.f32.mxu0 0.0
      %996 = vmatmul.mubr.f32.gmra.mrb[0].mxu0 %v811
      %v997 = vpop.f32.mrb[0].mxu0
      %v998 = vadd.f32 0.0, %v997
      %v999 = vpop.f32.mrb[0].mxu0
      %1000 = vmatprep.mubr.f32.mxu0 0.0
      %1001 = vmatmul.mubr.f32.gmra.mrb[0].mxu0 %v814
      %v1002 = vpop.f32.mrb[0].mxu0
      %v1003 = vadd.f32 0.0, %v1002
      %v1004 = vpop.f32.mrb[0].mxu0
      %1005 = vmatprep.mubr.f32.mxu0 0.0
      %1006 = vmatmul.mubr.f32.gmra.mrb[0].mxu0 %v817
      %v1007 = vpop.f32.mrb[0].mxu0
      %v1008 = vadd.f32 0.0, %v1007
      %v1009 = vpop.f32.mrb[0].mxu0
      %1010 = vmatprep.mubr.f32.mxu0 0.0
      %1011 = vmatmul.mubr.f32.gmra.mrb[0].mxu0 %v820
      %v1012 = vpop.f32.mrb[0].mxu0
      %v1013 = vadd.f32 0.0, %v1012
      %v1014 = vpop.f32.mrb[0].mxu0
      %1015 = vmatprep.mubr.f32.mxu0 0.0
      %1016 = vmatmul.mubr.f32.gmra.mrb[0].mxu0 %v823
      %v1017 = vpop.f32.mrb[0].mxu0
      %v1018 = vadd.f32 0.0, %v1017
      %v1019 = vpop.f32.mrb[0].mxu0
      %1020 = vmatprep.mubr.f32.mxu0 0.0
      %1021 = vmatmul.mubr.f32.gmra.mrb[0].mxu0 %v826
      %v1022 = vpop.f32.mrb[0].mxu0
      %v1023 = vadd.f32 0.0, %v1022
      %v1024 = vpop.f32.mrb[0].mxu0
      %1025 = vmatprep.mubr.f32.mxu0 0.0
      %1026 = vmatmul.mubr.f32.gmra.mrb[0].mxu0 %v829
      %v1027 = vpop.f32.mrb[0].mxu0
      %v1028 = vadd.f32 0.0, %v1027
      %v1029 = vpop.f32.mrb[0].mxu0
      %1030 = vmatprep.mubr.f32.mxu0 0.0
      %1031 = vmatmul.mubr.f32.gmra.mrb[0].mxu0 %v832
      %v1032 = vpop.f32.mrb[0].mxu0
      %v1033 = vadd.f32 0.0, %v1032
      %v1034 = vpop.f32.mrb[0].mxu0
      %1035 = vmatprep.mubr.f32.mxu0 0.0
      %1036 = vmatmul.mubr.f32.gmra.mrb[0].mxu0 %v835
      %v1037 = vpop.f32.mrb[0].mxu0
      %v1038 = vadd.f32 0.0, %v1037
      %v1039 = vpop.f32.mrb[0].mxu0
      %1040 = vmatprep.mubr.f32.mxu0 0.0
      %1041 = vmatmul.mubr.f32.gmra.mrb[0].mxu0 %v838
      %v1042 = vpop.f32.mrb[0].mxu0
      %v1043 = vadd.f32 0.0, %v1042
      %v1044 = vpop.f32.mrb[0].mxu0
      %1045 = vmatprep.mubr.f32.mxu0 0.0
      %1046 = vmatmul.mubr.f32.gmra.mrb[0].mxu0 %v841
      %v1047 = vpop.f32.mrb[0].mxu0
      %v1048 = vadd.f32 0.0, %v1047
      %v1049 = vpop.f32.mrb[0].mxu0
      %1050 = vmatprep.mubr.f32.mxu0 0.0
      %1051 = vmatmul.mubr.f32.gmra.mrb[0].mxu0 %v844
      %v1052 = vpop.f32.mrb[0].mxu0
      %v1053 = vadd.f32 0.0, %v1052
      %v1054 = vpop.f32.mrb[0].mxu0
      %1055 = vmatprep.mubr.f32.mxu0 0.0
      %1056 = vmatmul.mubr.f32.gmra.mrb[0].mxu0 %v847
      %v1057 = vpop.f32.mrb[0].mxu0
      %v1058 = vadd.f32 0.0, %v1057
      %v1059 = vpop.f32.mrb[0].mxu0
      %1060 = vmatprep.mubr.f32.mxu0 0.0
      %1061 = vmatmul.mubr.f32.gmra.mrb[0].mxu0 %v850
      %v1062 = vpop.f32.mrb[0].mxu0
      %v1063 = vadd.f32 0.0, %v1062
      %v1064 = vpop.f32.mrb[0].mxu0
      %1065 = vmatprep.mubr.f32.mxu0 0.0
      %1066 = vmatmul.mubr.f32.gmra.mrb[0].mxu0 %v853
      %v1067 = vpop.f32.mrb[0].mxu0
      %v1068 = vadd.f32 0.0, %v1067
      %v1069 = vpop.f32.mrb[0].mxu0
      %1070 = vmatprep.mubr.f32.mxu0 0.0
      %1071 = vmatmul.mubr.f32.gmra.mrb[0].mxu0 %v856
      %v1072 = vpop.f32.mrb[0].mxu0
      %v1073 = vadd.f32 0.0, %v1072
      %v1074 = vpop.f32.mrb[0].mxu0
      %1075 = vmatprep.mubr.f32.mxu0 0.0
      %1076 = vmatmul.mubr.f32.gmra.mrb[0].mxu0 %v859
      %v1077 = vpop.f32.mrb[0].mxu0
      %v1078 = vadd.f32 0.0, %v1077
      %v1079 = vpop.f32.mrb[0].mxu0
      %1080 = vmatprep.mubr.f32.mxu0 0.0
      %1081 = vmatmul.mubr.f32.gmra.mrb[0].mxu0 %v862
      %v1082 = vpop.f32.mrb[0].mxu0
      %v1083 = vadd.f32 0.0, %v1082
      %v1084 = vpop.f32.mrb[0].mxu0
      %1085 = vmatprep.mubr.f32.mxu0 0.0
      %1086 = vmatmul.mubr.f32.gmra.mrb[0].mxu0 %v865
      %v1087 = vpop.f32.mrb[0].mxu0
      %v1088 = vadd.f32 0.0, %v1087
      %v1089 = vpop.f32.mrb[0].mxu0
      %1090 = vmatprep.mubr.f32.mxu0 0.0
      %1091 = vmatmul.mubr.f32.gmra.mrb[0].mxu0 %v868
      %v1092 = vpop.f32.mrb[0].mxu0
      %v1093 = vadd.f32 0.0, %v1092
      %v1094 = vpop.f32.mrb[0].mxu0
      %1095 = vmatprep.mubr.f32.mxu0 0.0
      %1096 = vmatmul.mubr.f32.gmra.mrb[0].mxu0 %v871
      %v1097 = vpop.f32.mrb[0].mxu0
      %v1098 = vadd.f32 0.0, %v1097
      %v1099 = vpop.f32.mrb[0].mxu0
      %1100 = vdwg.mxu0
      %v1101 = vadd.f32 %v743, %v943
      %v1102 = vadd.f32 %v744, %v948
      %v1103 = vadd.f32 %v745, %v953
      %v1104 = vadd.f32 %v746, %v958
      %v1105 = vadd.f32 %v747, %v963
      %v1106 = vadd.f32 %v748, %v968
      %v1107 = vadd.f32 %v749, %v973
      %v1108 = vadd.f32 %v750, %v978
      %v1109 = vadd.f32 %v751, %v983
      %v1110 = vadd.f32 %v752, %v988
      %v1111 = vadd.f32 %v753, %v993
      %v1112 = vadd.f32 %v754, %v998
      %v1113 = vadd.f32 %v755, %v1003
      %v1114 = vadd.f32 %v756, %v1008
      %v1115 = vadd.f32 %v757, %v1013
      %v1116 = vadd.f32 %v758, %v1018
      %v1117 = vadd.f32 %v759, %v1023
      %v1118 = vadd.f32 %v760, %v1028
      %v1119 = vadd.f32 %v761, %v1033
      %v1120 = vadd.f32 %v762, %v1038
      %v1121 = vadd.f32 %v763, %v1043
      %v1122 = vadd.f32 %v764, %v1048
      %v1123 = vadd.f32 %v765, %v1053
      %v1124 = vadd.f32 %v766, %v1058
      %v1125 = vadd.f32 %v767, %v1063
      %v1126 = vadd.f32 %v768, %v1068
      %v1127 = vadd.f32 %v769, %v1073
      %v1128 = vadd.f32 %v770, %v1078
      %v1129 = vadd.f32 %v771, %v1083
      %v1130 = vadd.f32 %v772, %v1088
      %v1131 = vadd.f32 %v773, %v1093
      %v1132 = vadd.f32 %v774, %v1098
      %1133 = vst [vmem:[#allocation2] sm:$0xff] %v1101
      %1134 = vst [vmem:[#allocation2 + $0x8] sm:$0xff] %v1102
      %1135 = vst [vmem:[#allocation2 + $0x10] sm:$0xff] %v1103
      %1136 = vst [vmem:[#allocation2 + $0x18] sm:$0xff] %v1104
      %1137 = vst [vmem:[#allocation2 + $0x20] sm:$0xff] %v1105
      %1138 = vst [vmem:[#allocation2 + $0x28] sm:$0xff] %v1106
      %1139 = vst [vmem:[#allocation2 + $0x30] sm:$0xff] %v1107
      %1140 = vst [vmem:[#allocation2 + $0x38] sm:$0xff] %v1108
      %1141 = vst [vmem:[#allocation2 + $0x40] sm:$0xff] %v1109
      %1142 = vst [vmem:[#allocation2 + $0x48] sm:$0xff] %v1110
      %1143 = vst [vmem:[#allocation2 + $0x50] sm:$0xff] %v1111
      %1144 = vst [vmem:[#allocation2 + $0x58] sm:$0xff] %v1112
      %1145 = vst [vmem:[#allocation2 + $0x60] sm:$0xff] %v1113
      %1146 = vst [vmem:[#allocation2 + $0x68] sm:$0xff] %v1114
      %1147 = vst [vmem:[#allocation2 + $0x70] sm:$0xff] %v1115
      %1148 = vst [vmem:[#allocation2 + $0x78] sm:$0xff] %v1116
      %1149 = vst [vmem:[#allocation2 + $0x80] sm:$0xff] %v1117
      %1150 = vst [vmem:[#allocation2 + $0x88] sm:$0xff] %v1118
      %1151 = vst [vmem:[#allocation2 + $0x90] sm:$0xff] %v1119
      %1152 = vst [vmem:[#allocation2 + $0x98] sm:$0xff] %v1120
      %1153 = vst [vmem:[#allocation2 + $0xa0] sm:$0xff] %v1121
      %1154 = vst [vmem:[#allocation2 + $0xa8] sm:$0xff] %v1122
      %1155 = vst [vmem:[#allocation2 + $0xb0] sm:$0xff] %v1123
      %1156 = vst [vmem:[#allocation2 + $0xb8] sm:$0xff] %v1124
      %1157 = vst [vmem:[#allocation2 + $0xc0] sm:$0xff] %v1125
      %1158 = vst [vmem:[#allocation2 + $0xc8] sm:$0xff] %v1126
      %1159 = vst [vmem:[#allocation2 + $0xd0] sm:$0xff] %v1127
      %1160 = vst [vmem:[#allocation2 + $0xd8] sm:$0xff] %v1128
      %1161 = vst [vmem:[#allocation2 + $0xe0] sm:$0xff] %v1129
      %1162 = vst [vmem:[#allocation2 + $0xe8] sm:$0xff] %v1130
      %1163 = vst [vmem:[#allocation2 + $0xf0] sm:$0xff] %v1131
      %1164 = vst [vmem:[#allocation2 + $0xf8] sm:$0xff] %v1132
      %v1165 = vld [vmem:[%s255 + $0x2] sm:$0xff]
      %v1166 = vld [vmem:[%s255 + $0xa] sm:$0xff]
      %v1167 = vld [vmem:[%s255 + $0x1a] sm:$0xff]
      %v1168 = vld [vmem:[%s255 + $0x22] sm:$0xff]
      %v1169 = vld [vmem:[%s255 + $0x32] sm:$0xff]
      %v1170 = vld [vmem:[%s255 + $0x3a] sm:$0xff]
      %v1171 = vld [vmem:[%s255 + $0x4a] sm:$0xff]
      %v1172 = vld [vmem:[%s255 + $0x52] sm:$0xff]
      %v1173 = vld [vmem:[%s255 + $0x62] sm:$0xff]
      %v1174 = vld [vmem:[%s255 + $0x6a] sm:$0xff]
      %v1175 = vld [vmem:[%s255 + $0x7a] sm:$0xff]
      %v1176 = vld [vmem:[%s255 + $0x82] sm:$0xff]
      %v1177 = vld [vmem:[%s255 + $0x92] sm:$0xff]
      %v1178 = vld [vmem:[%s255 + $0x9a] sm:$0xff]
      %v1179 = vld [vmem:[%s255 + $0xaa] sm:$0xff]
      %v1180 = vld [vmem:[%s255 + $0xb2] sm:$0xff]
      %v1181 = vld [vmem:[%s255 + $0xc2] sm:$0xff]
      %v1182 = vld [vmem:[%s255 + $0xca] sm:$0xff]
      %v1183 = vld [vmem:[%s255 + $0xda] sm:$0xff]
      %v1184 = vld [vmem:[%s255 + $0xe2] sm:$0xff]
      %v1185 = vld [vmem:[%s255 + $0xf2] sm:$0xff]
      %v1186 = vld [vmem:[%s255 + $0xfa] sm:$0xff]
      %v1187 = vld [vmem:[%s255 + $0x10a] sm:$0xff]
      %v1188 = vld [vmem:[%s255 + $0x112] sm:$0xff]
      %v1189 = vld [vmem:[%s255 + $0x122] sm:$0xff]
      %v1190 = vld [vmem:[%s255 + $0x12a] sm:$0xff]
      %v1191 = vld [vmem:[%s255 + $0x13a] sm:$0xff]
      %v1192 = vld [vmem:[%s255 + $0x142] sm:$0xff]
      %v1193 = vld [vmem:[%s255 + $0x152] sm:$0xff]
      %v1194 = vld [vmem:[%s255 + $0x15a] sm:$0xff]
      %v1195 = vld [vmem:[%s255 + $0x16a] sm:$0xff]
      %v1196 = vld [vmem:[%s255 + $0x172] sm:$0xff]
      %v1197 = vld [vmem:[#allocation2] sm:$0xff]
      %v1198 = vld [vmem:[#allocation2 + $0x8] sm:$0xff]
      %v1199 = vld [vmem:[#allocation2 + $0x10] sm:$0xff]
      %v1200 = vld [vmem:[#allocation2 + $0x18] sm:$0xff]
      %v1201 = vld [vmem:[#allocation2 + $0x20] sm:$0xff]
      %v1202 = vld [vmem:[#allocation2 + $0x28] sm:$0xff]
      %v1203 = vld [vmem:[#allocation2 + $0x30] sm:$0xff]
      %v1204 = vld [vmem:[#allocation2 + $0x38] sm:$0xff]
      %v1205 = vld [vmem:[#allocation2 + $0x40] sm:$0xff]
      %v1206 = vld [vmem:[#allocation2 + $0x48] sm:$0xff]
      %v1207 = vld [vmem:[#allocation2 + $0x50] sm:$0xff]
      %v1208 = vld [vmem:[#allocation2 + $0x58] sm:$0xff]
      %v1209 = vld [vmem:[#allocation2 + $0x60] sm:$0xff]
      %v1210 = vld [vmem:[#allocation2 + $0x68] sm:$0xff]
      %v1211 = vld [vmem:[#allocation2 + $0x70] sm:$0xff]
      %v1212 = vld [vmem:[#allocation2 + $0x78] sm:$0xff]
      %v1213 = vld [vmem:[#allocation2 + $0x80] sm:$0xff]
      %v1214 = vld [vmem:[#allocation2 + $0x88] sm:$0xff]
      %v1215 = vld [vmem:[#allocation2 + $0x90] sm:$0xff]
      %v1216 = vld [vmem:[#allocation2 + $0x98] sm:$0xff]
      %v1217 = vld [vmem:[#allocation2 + $0xa0] sm:$0xff]
      %v1218 = vld [vmem:[#allocation2 + $0xa8] sm:$0xff]
      %v1219 = vld [vmem:[#allocation2 + $0xb0] sm:$0xff]
      %v1220 = vld [vmem:[#allocation2 + $0xb8] sm:$0xff]
      %v1221 = vld [vmem:[#allocation2 + $0xc0] sm:$0xff]
      %v1222 = vld [vmem:[#allocation2 + $0xc8] sm:$0xff]
      %v1223 = vld [vmem:[#allocation2 + $0xd0] sm:$0xff]
      %v1224 = vld [vmem:[#allocation2 + $0xd8] sm:$0xff]
      %v1225 = vld [vmem:[#allocation2 + $0xe0] sm:$0xff]
      %v1226 = vld [vmem:[#allocation2 + $0xe8] sm:$0xff]
      %v1227 = vld [vmem:[#allocation2 + $0xf0] sm:$0xff]
      %v1228 = vld [vmem:[#allocation2 + $0xf8] sm:$0xff]
      %s1229 = scalar_lea.vmem %s1, 8
      %v1230 = vld [vmem:[%s1229] sm:$0xf]
      %v1232 = vsel %vm321, %v1165, 0
      %v1235 = vsel %vm321, %v1166, 0
      %v1238 = vsel %vm321, %v1167, 0
      %v1241 = vsel %vm321, %v1168, 0
      %v1244 = vsel %vm321, %v1169, 0
      %v1247 = vsel %vm321, %v1170, 0
      %v1250 = vsel %vm321, %v1171, 0
      %v1253 = vsel %vm321, %v1172, 0
      %v1256 = vsel %vm321, %v1173, 0
      %v1259 = vsel %vm321, %v1174, 0
      %v1262 = vsel %vm321, %v1175, 0
      %v1265 = vsel %vm321, %v1176, 0
      %v1268 = vsel %vm321, %v1177, 0
      %v1271 = vsel %vm321, %v1178, 0
      %v1274 = vsel %vm321, %v1179, 0
      %v1277 = vsel %vm321, %v1180, 0
      %v1280 = vsel %vm321, %v1181, 0
      %v1283 = vsel %vm321, %v1182, 0
      %v1286 = vsel %vm321, %v1183, 0
      %v1289 = vsel %vm321, %v1184, 0
      %v1292 = vsel %vm321, %v1185, 0
      %v1295 = vsel %vm321, %v1186, 0
      %v1298 = vsel %vm321, %v1187, 0
      %v1301 = vsel %vm321, %v1188, 0
      %v1304 = vsel %vm321, %v1189, 0
      %v1307 = vsel %vm321, %v1190, 0
      %v1310 = vsel %vm321, %v1191, 0
      %v1313 = vsel %vm321, %v1192, 0
      %v1316 = vsel %vm321, %v1193, 0
      %v1319 = vsel %vm321, %v1194, 0
      %v1322 = vsel %vm321, %v1195, 0
      %v1325 = vsel %vm321, %v1196, 0
      %v1328 = vsel %vm418, %v1230, 0
      %1330 = vmatprep.subr.mxu0 0.0
      %1331 = vmatpush1.msra.mxu0 %v1328
      %1332 = vmatprep.subr.mxu0 0.0
      %1333 = vmatpush1.msra.mxu0 0.0
      %1334 = vmatprep.subr.mxu0 0.0
      %1335 = vmatpush1.msra.mxu0 0.0
      %1336 = vmatprep.subr.mxu0 0.0
      %1337 = vmatpush1.msra.mxu0 0.0
      %1338 = vmatprep.subr.mxu0 0.0
      %1339 = vmatpush1.msra.mxu0 0.0
      %1340 = vmatprep.subr.mxu0 0.0
      %1341 = vmatpush1.msra.mxu0 0.0
      %1342 = vmatprep.subr.mxu0 0.0
      %1343 = vmatpush1.msra.mxu0 0.0
      %1344 = vmatprep.subr.mxu0 0.0
      %1345 = vmatpush1.msra.mxu0 0.0
      %1346 = vmatprep.subr.mxu0 0.0
      %1347 = vmatpush1.msra.mxu0 0.0
      %1348 = vmatprep.subr.mxu0 0.0
      %1349 = vmatpush1.msra.mxu0 0.0
      %1350 = vmatprep.subr.mxu0 0.0
      %1351 = vmatpush1.msra.mxu0 0.0
      %1352 = vmatprep.subr.mxu0 0.0
      %1353 = vmatpush1.msra.mxu0 0.0
      %1354 = vmatprep.subr.mxu0 0.0
      %1355 = vmatpush1.msra.mxu0 0.0
      %1356 = vmatprep.subr.mxu0 0.0
      %1357 = vmatpush1.msra.mxu0 0.0
      %1358 = vmatprep.subr.mxu0 0.0
      %1359 = vmatpush1.msra.mxu0 0.0
      %1360 = vmatprep.subr.mxu0 0.0
      %1361 = vmatpush1.msra.mxu0 0.0
      %1362 = vmatprep.subr.mxu0 0.0
      %1363 = vmatpush1.msra.mxu0 0.0
      %1364 = vmatprep.subr.mxu0 0.0
      %1365 = vmatpush1.msra.mxu0 0.0
      %1366 = vmatprep.subr.mxu0 0.0
      %1367 = vmatpush1.msra.mxu0 0.0
      %1368 = vmatprep.subr.mxu0 0.0
      %1369 = vmatpush1.msra.mxu0 0.0
      %1370 = vmatprep.subr.mxu0 0.0
      %1371 = vmatpush1.msra.mxu0 0.0
      %1372 = vmatprep.subr.mxu0 0.0
      %1373 = vmatpush1.msra.mxu0 0.0
      %1374 = vmatprep.subr.mxu0 0.0
      %1375 = vmatpush1.msra.mxu0 0.0
      %1376 = vmatprep.subr.mxu0 0.0
      %1377 = vmatpush1.msra.mxu0 0.0
      %1378 = vmatprep.subr.mxu0 0.0
      %1379 = vmatpush1.msra.mxu0 0.0
      %1380 = vmatprep.subr.mxu0 0.0
      %1381 = vmatpush1.msra.mxu0 0.0
      %1382 = vmatprep.subr.mxu0 0.0
      %1383 = vmatpush1.msra.mxu0 0.0
      %1384 = vmatprep.subr.mxu0 0.0
      %1385 = vmatpush1.msra.mxu0 0.0
      %1386 = vmatprep.subr.mxu0 0.0
      %1387 = vmatpush1.msra.mxu0 0.0
      %1388 = vmatprep.subr.mxu0 0.0
      %1389 = vmatpush1.msra.mxu0 0.0
      %1390 = vmatprep.subr.mxu0 0.0
      %1391 = vmatpush1.msra.mxu0 0.0
      %1392 = vmatprep.subr.mxu0 0.0
      %1393 = vmatpush1.msra.mxu0 0.0
      %1394 = vmatprep.mubr.f32.mxu0 0.0
      %1395 = vmatmul.mubr.f32.gmra.mrb[0].mxu0 %v1232
      %v1396 = vpop.f32.mrb[0].mxu0
      %v1397 = vadd.f32 0.0, %v1396
      %v1398 = vpop.f32.mrb[0].mxu0
      %1399 = vmatprep.mubr.f32.mxu0 0.0
      %1400 = vmatmul.mubr.f32.gmra.mrb[0].mxu0 %v1235
      %v1401 = vpop.f32.mrb[0].mxu0
      %v1402 = vadd.f32 0.0, %v1401
      %v1403 = vpop.f32.mrb[0].mxu0
      %1404 = vmatprep.mubr.f32.mxu0 0.0
      %1405 = vmatmul.mubr.f32.gmra.mrb[0].mxu0 %v1238
      %v1406 = vpop.f32.mrb[0].mxu0
      %v1407 = vadd.f32 0.0, %v1406
      %v1408 = vpop.f32.mrb[0].mxu0
      %1409 = vmatprep.mubr.f32.mxu0 0.0
      %1410 = vmatmul.mubr.f32.gmra.mrb[0].mxu0 %v1241
      %v1411 = vpop.f32.mrb[0].mxu0
      %v1412 = vadd.f32 0.0, %v1411
      %v1413 = vpop.f32.mrb[0].mxu0
      %1414 = vmatprep.mubr.f32.mxu0 0.0
      %1415 = vmatmul.mubr.f32.gmra.mrb[0].mxu0 %v1244
      %v1416 = vpop.f32.mrb[0].mxu0
      %v1417 = vadd.f32 0.0, %v1416
      %v1418 = vpop.f32.mrb[0].mxu0
      %1419 = vmatprep.mubr.f32.mxu0 0.0
      %1420 = vmatmul.mubr.f32.gmra.mrb[0].mxu0 %v1247
      %v1421 = vpop.f32.mrb[0].mxu0
      %v1422 = vadd.f32 0.0, %v1421
      %v1423 = vpop.f32.mrb[0].mxu0
      %1424 = vmatprep.mubr.f32.mxu0 0.0
      %1425 = vmatmul.mubr.f32.gmra.mrb[0].mxu0 %v1250
      %v1426 = vpop.f32.mrb[0].mxu0
      %v1427 = vadd.f32 0.0, %v1426
      %v1428 = vpop.f32.mrb[0].mxu0
      %1429 = vmatprep.mubr.f32.mxu0 0.0
      %1430 = vmatmul.mubr.f32.gmra.mrb[0].mxu0 %v1253
      %v1431 = vpop.f32.mrb[0].mxu0
      %v1432 = vadd.f32 0.0, %v1431
      %v1433 = vpop.f32.mrb[0].mxu0
      %1434 = vmatprep.mubr.f32.mxu0 0.0
      %1435 = vmatmul.mubr.f32.gmra.mrb[0].mxu0 %v1256
      %v1436 = vpop.f32.mrb[0].mxu0
      %v1437 = vadd.f32 0.0, %v1436
      %v1438 = vpop.f32.mrb[0].mxu0
      %1439 = vmatprep.mubr.f32.mxu0 0.0
      %1440 = vmatmul.mubr.f32.gmra.mrb[0].mxu0 %v1259
      %v1441 = vpop.f32.mrb[0].mxu0
      %v1442 = vadd.f32 0.0, %v1441
      %v1443 = vpop.f32.mrb[0].mxu0
      %1444 = vmatprep.mubr.f32.mxu0 0.0
      %1445 = vmatmul.mubr.f32.gmra.mrb[0].mxu0 %v1262
      %v1446 = vpop.f32.mrb[0].mxu0
      %v1447 = vadd.f32 0.0, %v1446
      %v1448 = vpop.f32.mrb[0].mxu0
      %1449 = vmatprep.mubr.f32.mxu0 0.0
      %1450 = vmatmul.mubr.f32.gmra.mrb[0].mxu0 %v1265
      %v1451 = vpop.f32.mrb[0].mxu0
      %v1452 = vadd.f32 0.0, %v1451
      %v1453 = vpop.f32.mrb[0].mxu0
      %1454 = vmatprep.mubr.f32.mxu0 0.0
      %1455 = vmatmul.mubr.f32.gmra.mrb[0].mxu0 %v1268
      %v1456 = vpop.f32.mrb[0].mxu0
      %v1457 = vadd.f32 0.0, %v1456
      %v1458 = vpop.f32.mrb[0].mxu0
      %1459 = vmatprep.mubr.f32.mxu0 0.0
      %1460 = vmatmul.mubr.f32.gmra.mrb[0].mxu0 %v1271
      %v1461 = vpop.f32.mrb[0].mxu0
      %v1462 = vadd.f32 0.0, %v1461
      %v1463 = vpop.f32.mrb[0].mxu0
      %1464 = vmatprep.mubr.f32.mxu0 0.0
      %1465 = vmatmul.mubr.f32.gmra.mrb[0].mxu0 %v1274
      %v1466 = vpop.f32.mrb[0].mxu0
      %v1467 = vadd.f32 0.0, %v1466
      %v1468 = vpop.f32.mrb[0].mxu0
      %1469 = vmatprep.mubr.f32.mxu0 0.0
      %1470 = vmatmul.mubr.f32.gmra.mrb[0].mxu0 %v1277
      %v1471 = vpop.f32.mrb[0].mxu0
      %v1472 = vadd.f32 0.0, %v1471
      %v1473 = vpop.f32.mrb[0].mxu0
      %1474 = vmatprep.mubr.f32.mxu0 0.0
      %1475 = vmatmul.mubr.f32.gmra.mrb[0].mxu0 %v1280
      %v1476 = vpop.f32.mrb[0].mxu0
      %v1477 = vadd.f32 0.0, %v1476
      %v1478 = vpop.f32.mrb[0].mxu0
      %1479 = vmatprep.mubr.f32.mxu0 0.0
      %1480 = vmatmul.mubr.f32.gmra.mrb[0].mxu0 %v1283
      %v1481 = vpop.f32.mrb[0].mxu0
      %v1482 = vadd.f32 0.0, %v1481
      %v1483 = vpop.f32.mrb[0].mxu0
      %1484 = vmatprep.mubr.f32.mxu0 0.0
      %1485 = vmatmul.mubr.f32.gmra.mrb[0].mxu0 %v1286
      %v1486 = vpop.f32.mrb[0].mxu0
      %v1487 = vadd.f32 0.0, %v1486
      %v1488 = vpop.f32.mrb[0].mxu0
      %1489 = vmatprep.mubr.f32.mxu0 0.0
      %1490 = vmatmul.mubr.f32.gmra.mrb[0].mxu0 %v1289
      %v1491 = vpop.f32.mrb[0].mxu0
      %v1492 = vadd.f32 0.0, %v1491
      %v1493 = vpop.f32.mrb[0].mxu0
      %1494 = vmatprep.mubr.f32.mxu0 0.0
      %1495 = vmatmul.mubr.f32.gmra.mrb[0].mxu0 %v1292
      %v1496 = vpop.f32.mrb[0].mxu0
      %v1497 = vadd.f32 0.0, %v1496
      %v1498 = vpop.f32.mrb[0].mxu0
      %1499 = vmatprep.mubr.f32.mxu0 0.0
      %1500 = vmatmul.mubr.f32.gmra.mrb[0].mxu0 %v1295
      %v1501 = vpop.f32.mrb[0].mxu0
      %v1502 = vadd.f32 0.0, %v1501
      %v1503 = vpop.f32.mrb[0].mxu0
      %1504 = vmatprep.mubr.f32.mxu0 0.0
      %1505 = vmatmul.mubr.f32.gmra.mrb[0].mxu0 %v1298
      %v1506 = vpop.f32.mrb[0].mxu0
      %v1507 = vadd.f32 0.0, %v1506
      %v1508 = vpop.f32.mrb[0].mxu0
      %1509 = vmatprep.mubr.f32.mxu0 0.0
      %1510 = vmatmul.mubr.f32.gmra.mrb[0].mxu0 %v1301
      %v1511 = vpop.f32.mrb[0].mxu0
      %v1512 = vadd.f32 0.0, %v1511
      %v1513 = vpop.f32.mrb[0].mxu0
      %1514 = vmatprep.mubr.f32.mxu0 0.0
      %1515 = vmatmul.mubr.f32.gmra.mrb[0].mxu0 %v1304
      %v1516 = vpop.f32.mrb[0].mxu0
      %v1517 = vadd.f32 0.0, %v1516
      %v1518 = vpop.f32.mrb[0].mxu0
      %1519 = vmatprep.mubr.f32.mxu0 0.0
      %1520 = vmatmul.mubr.f32.gmra.mrb[0].mxu0 %v1307
      %v1521 = vpop.f32.mrb[0].mxu0
      %v1522 = vadd.f32 0.0, %v1521
      %v1523 = vpop.f32.mrb[0].mxu0
      %1524 = vmatprep.mubr.f32.mxu0 0.0
      %1525 = vmatmul.mubr.f32.gmra.mrb[0].mxu0 %v1310
      %v1526 = vpop.f32.mrb[0].mxu0
      %v1527 = vadd.f32 0.0, %v1526
      %v1528 = vpop.f32.mrb[0].mxu0
      %1529 = vmatprep.mubr.f32.mxu0 0.0
      %1530 = vmatmul.mubr.f32.gmra.mrb[0].mxu0 %v1313
      %v1531 = vpop.f32.mrb[0].mxu0
      %v1532 = vadd.f32 0.0, %v1531
      %v1533 = vpop.f32.mrb[0].mxu0
      %1534 = vmatprep.mubr.f32.mxu0 0.0
      %1535 = vmatmul.mubr.f32.gmra.mrb[0].mxu0 %v1316
      %v1536 = vpop.f32.mrb[0].mxu0
      %v1537 = vadd.f32 0.0, %v1536
      %v1538 = vpop.f32.mrb[0].mxu0
      %1539 = vmatprep.mubr.f32.mxu0 0.0
      %1540 = vmatmul.mubr.f32.gmra.mrb[0].mxu0 %v1319
      %v1541 = vpop.f32.mrb[0].mxu0
      %v1542 = vadd.f32 0.0, %v1541
      %v1543 = vpop.f32.mrb[0].mxu0
      %1544 = vmatprep.mubr.f32.mxu0 0.0
      %1545 = vmatmul.mubr.f32.gmra.mrb[0].mxu0 %v1322
      %v1546 = vpop.f32.mrb[0].mxu0
      %v1547 = vadd.f32 0.0, %v1546
      %v1548 = vpop.f32.mrb[0].mxu0
      %1549 = vmatprep.mubr.f32.mxu0 0.0
      %1550 = vmatmul.mubr.f32.gmra.mrb[0].mxu0 %v1325
      %v1551 = vpop.f32.mrb[0].mxu0
      %v1552 = vadd.f32 0.0, %v1551
      %v1553 = vpop.f32.mrb[0].mxu0
      %1554 = vdwg.mxu0
      %v1555 = vadd.f32 %v1197, %v1397
      %v1556 = vadd.f32 %v1198, %v1402
      %v1557 = vadd.f32 %v1199, %v1407
      %v1558 = vadd.f32 %v1200, %v1412
      %v1559 = vadd.f32 %v1201, %v1417
      %v1560 = vadd.f32 %v1202, %v1422
      %v1561 = vadd.f32 %v1203, %v1427
      %v1562 = vadd.f32 %v1204, %v1432
      %v1563 = vadd.f32 %v1205, %v1437
      %v1564 = vadd.f32 %v1206, %v1442
      %v1565 = vadd.f32 %v1207, %v1447
      %v1566 = vadd.f32 %v1208, %v1452
      %v1567 = vadd.f32 %v1209, %v1457
      %v1568 = vadd.f32 %v1210, %v1462
      %v1569 = vadd.f32 %v1211, %v1467
      %v1570 = vadd.f32 %v1212, %v1472
      %v1571 = vadd.f32 %v1213, %v1477
      %v1572 = vadd.f32 %v1214, %v1482
      %v1573 = vadd.f32 %v1215, %v1487
      %v1574 = vadd.f32 %v1216, %v1492
      %v1575 = vadd.f32 %v1217, %v1497
      %v1576 = vadd.f32 %v1218, %v1502
      %v1577 = vadd.f32 %v1219, %v1507
      %v1578 = vadd.f32 %v1220, %v1512
      %v1579 = vadd.f32 %v1221, %v1517
      %v1580 = vadd.f32 %v1222, %v1522
      %v1581 = vadd.f32 %v1223, %v1527
      %v1582 = vadd.f32 %v1224, %v1532
      %v1583 = vadd.f32 %v1225, %v1537
      %v1584 = vadd.f32 %v1226, %v1542
      %v1585 = vadd.f32 %v1227, %v1547
      %v1586 = vadd.f32 %v1228, %v1552
      %1587 = vst [vmem:[#allocation2] sm:$0xff] %v1555
      %1588 = vst [vmem:[#allocation2 + $0x8] sm:$0xff] %v1556
      %1589 = vst [vmem:[#allocation2 + $0x10] sm:$0xff] %v1557
      %1590 = vst [vmem:[#allocation2 + $0x18] sm:$0xff] %v1558
      %1591 = vst [vmem:[#allocation2 + $0x20] sm:$0xff] %v1559
      %1592 = vst [vmem:[#allocation2 + $0x28] sm:$0xff] %v1560
      %1593 = vst [vmem:[#allocation2 + $0x30] sm:$0xff] %v1561
      %1594 = vst [vmem:[#allocation2 + $0x38] sm:$0xff] %v1562
      %1595 = vst [vmem:[#allocation2 + $0x40] sm:$0xff] %v1563
      %1596 = vst [vmem:[#allocation2 + $0x48] sm:$0xff] %v1564
      %1597 = vst [vmem:[#allocation2 + $0x50] sm:$0xff] %v1565
      %1598 = vst [vmem:[#allocation2 + $0x58] sm:$0xff] %v1566
      %1599 = vst [vmem:[#allocation2 + $0x60] sm:$0xff] %v1567
      %1600 = vst [vmem:[#allocation2 + $0x68] sm:$0xff] %v1568
      %1601 = vst [vmem:[#allocation2 + $0x70] sm:$0xff] %v1569
      %1602 = vst [vmem:[#allocation2 + $0x78] sm:$0xff] %v1570
      %1603 = vst [vmem:[#allocation2 + $0x80] sm:$0xff] %v1571
      %1604 = vst [vmem:[#allocation2 + $0x88] sm:$0xff] %v1572
      %1605 = vst [vmem:[#allocation2 + $0x90] sm:$0xff] %v1573
      %1606 = vst [vmem:[#allocation2 + $0x98] sm:$0xff] %v1574
      %1607 = vst [vmem:[#allocation2 + $0xa0] sm:$0xff] %v1575
      %1608 = vst [vmem:[#allocation2 + $0xa8] sm:$0xff] %v1576
      %1609 = vst [vmem:[#allocation2 + $0xb0] sm:$0xff] %v1577
      %1610 = vst [vmem:[#allocation2 + $0xb8] sm:$0xff] %v1578
      %1611 = vst [vmem:[#allocation2 + $0xc0] sm:$0xff] %v1579
      %1612 = vst [vmem:[#allocation2 + $0xc8] sm:$0xff] %v1580
      %1613 = vst [vmem:[#allocation2 + $0xd0] sm:$0xff] %v1581
      %1614 = vst [vmem:[#allocation2 + $0xd8] sm:$0xff] %v1582
      %1615 = vst [vmem:[#allocation2 + $0xe0] sm:$0xff] %v1583
      %1616 = vst [vmem:[#allocation2 + $0xe8] sm:$0xff] %v1584
      %1617 = vst [vmem:[#allocation2 + $0xf0] sm:$0xff] %v1585
      %1618 = vst [vmem:[#allocation2 + $0xf8] sm:$0xff] %v1586
      %s1619 = sadd.s32 %s221, 1
      %s1620 = smul.u32 %s1619, 24
      %s1621 = scalar_lea.vmem %s210, %s1620
      %v1622 = vld [vmem:[%s1621] sm:$0xff]
      %v1623 = vld [vmem:[%s1621 + $0x8] sm:$0xff]
      %v1624 = vld [vmem:[%s1621 + $0x18] sm:$0xff]
      %v1625 = vld [vmem:[%s1621 + $0x20] sm:$0xff]
      %v1626 = vld [vmem:[%s1621 + $0x30] sm:$0xff]
      %v1627 = vld [vmem:[%s1621 + $0x38] sm:$0xff]
      %v1628 = vld [vmem:[%s1621 + $0x48] sm:$0xff]
      %v1629 = vld [vmem:[%s1621 + $0x50] sm:$0xff]
      %v1630 = vld [vmem:[%s1621 + $0x60] sm:$0xff]
      %v1631 = vld [vmem:[%s1621 + $0x68] sm:$0xff]
      %v1632 = vld [vmem:[%s1621 + $0x78] sm:$0xff]
      %v1633 = vld [vmem:[%s1621 + $0x80] sm:$0xff]
      %v1634 = vld [vmem:[%s1621 + $0x90] sm:$0xff]
      %v1635 = vld [vmem:[%s1621 + $0x98] sm:$0xff]
      %v1636 = vld [vmem:[%s1621 + $0xa8] sm:$0xff]
      %v1637 = vld [vmem:[%s1621 + $0xb0] sm:$0xff]
      %v1638 = vld [vmem:[%s1621 + $0xc0] sm:$0xff]
      %v1639 = vld [vmem:[%s1621 + $0xc8] sm:$0xff]
      %v1640 = vld [vmem:[%s1621 + $0xd8] sm:$0xff]
      %v1641 = vld [vmem:[%s1621 + $0xe0] sm:$0xff]
      %v1642 = vld [vmem:[%s1621 + $0xf0] sm:$0xff]
      %v1643 = vld [vmem:[%s1621 + $0xf8] sm:$0xff]
      %v1644 = vld [vmem:[%s1621 + $0x108] sm:$0xff]
      %v1645 = vld [vmem:[%s1621 + $0x110] sm:$0xff]
      %v1646 = vld [vmem:[%s1621 + $0x120] sm:$0xff]
      %v1647 = vld [vmem:[%s1621 + $0x128] sm:$0xff]
      %v1648 = vld [vmem:[%s1621 + $0x138] sm:$0xff]
      %v1649 = vld [vmem:[%s1621 + $0x140] sm:$0xff]
      %v1650 = vld [vmem:[%s1621 + $0x150] sm:$0xff]
      %v1651 = vld [vmem:[%s1621 + $0x158] sm:$0xff]
      %v1652 = vld [vmem:[%s1621 + $0x168] sm:$0xff]
      %v1653 = vld [vmem:[%s1621 + $0x170] sm:$0xff]
      %v1654 = vld [vmem:[#allocation2] sm:$0xff]
      %v1655 = vld [vmem:[#allocation2 + $0x8] sm:$0xff]
      %v1656 = vld [vmem:[#allocation2 + $0x10] sm:$0xff]
      %v1657 = vld [vmem:[#allocation2 + $0x18] sm:$0xff]
      %v1658 = vld [vmem:[#allocation2 + $0x20] sm:$0xff]
      %v1659 = vld [vmem:[#allocation2 + $0x28] sm:$0xff]
      %v1660 = vld [vmem:[#allocation2 + $0x30] sm:$0xff]
      %v1661 = vld [vmem:[#allocation2 + $0x38] sm:$0xff]
      %v1662 = vld [vmem:[#allocation2 + $0x40] sm:$0xff]
      %v1663 = vld [vmem:[#allocation2 + $0x48] sm:$0xff]
      %v1664 = vld [vmem:[#allocation2 + $0x50] sm:$0xff]
      %v1665 = vld [vmem:[#allocation2 + $0x58] sm:$0xff]
      %v1666 = vld [vmem:[#allocation2 + $0x60] sm:$0xff]
      %v1667 = vld [vmem:[#allocation2 + $0x68] sm:$0xff]
      %v1668 = vld [vmem:[#allocation2 + $0x70] sm:$0xff]
      %v1669 = vld [vmem:[#allocation2 + $0x78] sm:$0xff]
      %v1670 = vld [vmem:[#allocation2 + $0x80] sm:$0xff]
      %v1671 = vld [vmem:[#allocation2 + $0x88] sm:$0xff]
      %v1672 = vld [vmem:[#allocation2 + $0x90] sm:$0xff]
      %v1673 = vld [vmem:[#allocation2 + $0x98] sm:$0xff]
      %v1674 = vld [vmem:[#allocation2 + $0xa0] sm:$0xff]
      %v1675 = vld [vmem:[#allocation2 + $0xa8] sm:$0xff]
      %v1676 = vld [vmem:[#allocation2 + $0xb0] sm:$0xff]
      %v1677 = vld [vmem:[#allocation2 + $0xb8] sm:$0xff]
      %v1678 = vld [vmem:[#allocation2 + $0xc0] sm:$0xff]
      %v1679 = vld [vmem:[#allocation2 + $0xc8] sm:$0xff]
      %v1680 = vld [vmem:[#allocation2 + $0xd0] sm:$0xff]
      %v1681 = vld [vmem:[#allocation2 + $0xd8] sm:$0xff]
      %v1682 = vld [vmem:[#allocation2 + $0xe0] sm:$0xff]
      %v1683 = vld [vmem:[#allocation2 + $0xe8] sm:$0xff]
      %v1684 = vld [vmem:[#allocation2 + $0xf0] sm:$0xff]
      %v1685 = vld [vmem:[#allocation2 + $0xf8] sm:$0xff]
      %s1686 = scalar_lea.vmem %s1, 12
      %v1687 = vld [vmem:[%s1686] sm:$0xf]
      %v1689 = vsel %vm321, %v1622, 0
      %v1692 = vsel %vm321, %v1623, 0
      %v1695 = vsel %vm321, %v1624, 0
      %v1698 = vsel %vm321, %v1625, 0
      %v1701 = vsel %vm321, %v1626, 0
      %v1704 = vsel %vm321, %v1627, 0
      %v1707 = vsel %vm321, %v1628, 0
      %v1710 = vsel %vm321, %v1629, 0
      %v1713 = vsel %vm321, %v1630, 0
      %v1716 = vsel %vm321, %v1631, 0
      %v1719 = vsel %vm321, %v1632, 0
      %v1722 = vsel %vm321, %v1633, 0
      %v1725 = vsel %vm321, %v1634, 0
      %v1728 = vsel %vm321, %v1635, 0
      %v1731 = vsel %vm321, %v1636, 0
      %v1734 = vsel %vm321, %v1637, 0
      %v1737 = vsel %vm321, %v1638, 0
      %v1740 = vsel %vm321, %v1639, 0
      %v1743 = vsel %vm321, %v1640, 0
      %v1746 = vsel %vm321, %v1641, 0
      %v1749 = vsel %vm321, %v1642, 0
      %v1752 = vsel %vm321, %v1643, 0
      %v1755 = vsel %vm321, %v1644, 0
      %v1758 = vsel %vm321, %v1645, 0
      %v1761 = vsel %vm321, %v1646, 0
      %v1764 = vsel %vm321, %v1647, 0
      %v1767 = vsel %vm321, %v1648, 0
      %v1770 = vsel %vm321, %v1649, 0
      %v1773 = vsel %vm321, %v1650, 0
      %v1776 = vsel %vm321, %v1651, 0
      %v1779 = vsel %vm321, %v1652, 0
      %v1782 = vsel %vm321, %v1653, 0
      %v1785 = vsel %vm418, %v1687, 0
      %1787 = vmatprep.subr.mxu0 0.0
      %1788 = vmatpush1.msra.mxu0 %v1785
      %1789 = vmatprep.subr.mxu0 0.0
      %1790 = vmatpush1.msra.mxu0 0.0
      %1791 = vmatprep.subr.mxu0 0.0
      %1792 = vmatpush1.msra.mxu0 0.0
      %1793 = vmatprep.subr.mxu0 0.0
      %1794 = vmatpush1.msra.mxu0 0.0
      %1795 = vmatprep.subr.mxu0 0.0
      %1796 = vmatpush1.msra.mxu0 0.0
      %1797 = vmatprep.subr.mxu0 0.0
      %1798 = vmatpush1.msra.mxu0 0.0
      %1799 = vmatprep.subr.mxu0 0.0
      %1800 = vmatpush1.msra.mxu0 0.0
      %1801 = vmatprep.subr.mxu0 0.0
      %1802 = vmatpush1.msra.mxu0 0.0
      %1803 = vmatprep.subr.mxu0 0.0
      %1804 = vmatpush1.msra.mxu0 0.0
      %1805 = vmatprep.subr.mxu0 0.0
      %1806 = vmatpush1.msra.mxu0 0.0
      %1807 = vmatprep.subr.mxu0 0.0
      %1808 = vmatpush1.msra.mxu0 0.0
      %1809 = vmatprep.subr.mxu0 0.0
      %1810 = vmatpush1.msra.mxu0 0.0
      %1811 = vmatprep.subr.mxu0 0.0
      %1812 = vmatpush1.msra.mxu0 0.0
      %1813 = vmatprep.subr.mxu0 0.0
      %1814 = vmatpush1.msra.mxu0 0.0
      %1815 = vmatprep.subr.mxu0 0.0
      %1816 = vmatpush1.msra.mxu0 0.0
      %1817 = vmatprep.subr.mxu0 0.0
      %1818 = vmatpush1.msra.mxu0 0.0
      %1819 = vmatprep.subr.mxu0 0.0
      %1820 = vmatpush1.msra.mxu0 0.0
      %1821 = vmatprep.subr.mxu0 0.0
      %1822 = vmatpush1.msra.mxu0 0.0
      %1823 = vmatprep.subr.mxu0 0.0
      %1824 = vmatpush1.msra.mxu0 0.0
      %1825 = vmatprep.subr.mxu0 0.0
      %1826 = vmatpush1.msra.mxu0 0.0
      %1827 = vmatprep.subr.mxu0 0.0
      %1828 = vmatpush1.msra.mxu0 0.0
      %1829 = vmatprep.subr.mxu0 0.0
      %1830 = vmatpush1.msra.mxu0 0.0
      %1831 = vmatprep.subr.mxu0 0.0
      %1832 = vmatpush1.msra.mxu0 0.0
      %1833 = vmatprep.subr.mxu0 0.0
      %1834 = vmatpush1.msra.mxu0 0.0
      %1835 = vmatprep.subr.mxu0 0.0
      %1836 = vmatpush1.msra.mxu0 0.0
      %1837 = vmatprep.subr.mxu0 0.0
      %1838 = vmatpush1.msra.mxu0 0.0
      %1839 = vmatprep.subr.mxu0 0.0
      %1840 = vmatpush1.msra.mxu0 0.0
      %1841 = vmatprep.subr.mxu0 0.0
      %1842 = vmatpush1.msra.mxu0 0.0
      %1843 = vmatprep.subr.mxu0 0.0
      %1844 = vmatpush1.msra.mxu0 0.0
      %1845 = vmatprep.subr.mxu0 0.0
      %1846 = vmatpush1.msra.mxu0 0.0
      %1847 = vmatprep.subr.mxu0 0.0
      %1848 = vmatpush1.msra.mxu0 0.0
      %1849 = vmatprep.subr.mxu0 0.0
      %1850 = vmatpush1.msra.mxu0 0.0
      %1851 = vmatprep.mubr.f32.mxu0 0.0
      %1852 = vmatmul.mubr.f32.gmra.mrb[0].mxu0 %v1689
      %v1853 = vpop.f32.mrb[0].mxu0
      %v1854 = vadd.f32 0.0, %v1853
      %v1855 = vpop.f32.mrb[0].mxu0
      %1856 = vmatprep.mubr.f32.mxu0 0.0
      %1857 = vmatmul.mubr.f32.gmra.mrb[0].mxu0 %v1692
      %v1858 = vpop.f32.mrb[0].mxu0
      %v1859 = vadd.f32 0.0, %v1858
      %v1860 = vpop.f32.mrb[0].mxu0
      %1861 = vmatprep.mubr.f32.mxu0 0.0
      %1862 = vmatmul.mubr.f32.gmra.mrb[0].mxu0 %v1695
      %v1863 = vpop.f32.mrb[0].mxu0
      %v1864 = vadd.f32 0.0, %v1863
      %v1865 = vpop.f32.mrb[0].mxu0
      %1866 = vmatprep.mubr.f32.mxu0 0.0
      %1867 = vmatmul.mubr.f32.gmra.mrb[0].mxu0 %v1698
      %v1868 = vpop.f32.mrb[0].mxu0
      %v1869 = vadd.f32 0.0, %v1868
      %v1870 = vpop.f32.mrb[0].mxu0
      %1871 = vmatprep.mubr.f32.mxu0 0.0
      %1872 = vmatmul.mubr.f32.gmra.mrb[0].mxu0 %v1701
      %v1873 = vpop.f32.mrb[0].mxu0
      %v1874 = vadd.f32 0.0, %v1873
      %v1875 = vpop.f32.mrb[0].mxu0
      %1876 = vmatprep.mubr.f32.mxu0 0.0
      %1877 = vmatmul.mubr.f32.gmra.mrb[0].mxu0 %v1704
      %v1878 = vpop.f32.mrb[0].mxu0
      %v1879 = vadd.f32 0.0, %v1878
      %v1880 = vpop.f32.mrb[0].mxu0
      %1881 = vmatprep.mubr.f32.mxu0 0.0
      %1882 = vmatmul.mubr.f32.gmra.mrb[0].mxu0 %v1707
      %v1883 = vpop.f32.mrb[0].mxu0
      %v1884 = vadd.f32 0.0, %v1883
      %v1885 = vpop.f32.mrb[0].mxu0
      %1886 = vmatprep.mubr.f32.mxu0 0.0
      %1887 = vmatmul.mubr.f32.gmra.mrb[0].mxu0 %v1710
      %v1888 = vpop.f32.mrb[0].mxu0
      %v1889 = vadd.f32 0.0, %v1888
      %v1890 = vpop.f32.mrb[0].mxu0
      %1891 = vmatprep.mubr.f32.mxu0 0.0
      %1892 = vmatmul.mubr.f32.gmra.mrb[0].mxu0 %v1713
      %v1893 = vpop.f32.mrb[0].mxu0
      %v1894 = vadd.f32 0.0, %v1893
      %v1895 = vpop.f32.mrb[0].mxu0
      %1896 = vmatprep.mubr.f32.mxu0 0.0
      %1897 = vmatmul.mubr.f32.gmra.mrb[0].mxu0 %v1716
      %v1898 = vpop.f32.mrb[0].mxu0
      %v1899 = vadd.f32 0.0, %v1898
      %v1900 = vpop.f32.mrb[0].mxu0
      %1901 = vmatprep.mubr.f32.mxu0 0.0
      %1902 = vmatmul.mubr.f32.gmra.mrb[0].mxu0 %v1719
      %v1903 = vpop.f32.mrb[0].mxu0
      %v1904 = vadd.f32 0.0, %v1903
      %v1905 = vpop.f32.mrb[0].mxu0
      %1906 = vmatprep.mubr.f32.mxu0 0.0
      %1907 = vmatmul.mubr.f32.gmra.mrb[0].mxu0 %v1722
      %v1908 = vpop.f32.mrb[0].mxu0
      %v1909 = vadd.f32 0.0, %v1908
      %v1910 = vpop.f32.mrb[0].mxu0
      %1911 = vmatprep.mubr.f32.mxu0 0.0
      %1912 = vmatmul.mubr.f32.gmra.mrb[0].mxu0 %v1725
      %v1913 = vpop.f32.mrb[0].mxu0
      %v1914 = vadd.f32 0.0, %v1913
      %v1915 = vpop.f32.mrb[0].mxu0
      %1916 = vmatprep.mubr.f32.mxu0 0.0
      %1917 = vmatmul.mubr.f32.gmra.mrb[0].mxu0 %v1728
      %v1918 = vpop.f32.mrb[0].mxu0
      %v1919 = vadd.f32 0.0, %v1918
      %v1920 = vpop.f32.mrb[0].mxu0
      %1921 = vmatprep.mubr.f32.mxu0 0.0
      %1922 = vmatmul.mubr.f32.gmra.mrb[0].mxu0 %v1731
      %v1923 = vpop.f32.mrb[0].mxu0
      %v1924 = vadd.f32 0.0, %v1923
      %v1925 = vpop.f32.mrb[0].mxu0
      %1926 = vmatprep.mubr.f32.mxu0 0.0
      %1927 = vmatmul.mubr.f32.gmra.mrb[0].mxu0 %v1734
      %v1928 = vpop.f32.mrb[0].mxu0
      %v1929 = vadd.f32 0.0, %v1928
      %v1930 = vpop.f32.mrb[0].mxu0
      %1931 = vmatprep.mubr.f32.mxu0 0.0
      %1932 = vmatmul.mubr.f32.gmra.mrb[0].mxu0 %v1737
      %v1933 = vpop.f32.mrb[0].mxu0
      %v1934 = vadd.f32 0.0, %v1933
      %v1935 = vpop.f32.mrb[0].mxu0
      %1936 = vmatprep.mubr.f32.mxu0 0.0
      %1937 = vmatmul.mubr.f32.gmra.mrb[0].mxu0 %v1740
      %v1938 = vpop.f32.mrb[0].mxu0
      %v1939 = vadd.f32 0.0, %v1938
      %v1940 = vpop.f32.mrb[0].mxu0
      %1941 = vmatprep.mubr.f32.mxu0 0.0
      %1942 = vmatmul.mubr.f32.gmra.mrb[0].mxu0 %v1743
      %v1943 = vpop.f32.mrb[0].mxu0
      %v1944 = vadd.f32 0.0, %v1943
      %v1945 = vpop.f32.mrb[0].mxu0
      %1946 = vmatprep.mubr.f32.mxu0 0.0
      %1947 = vmatmul.mubr.f32.gmra.mrb[0].mxu0 %v1746
      %v1948 = vpop.f32.mrb[0].mxu0
      %v1949 = vadd.f32 0.0, %v1948
      %v1950 = vpop.f32.mrb[0].mxu0
      %1951 = vmatprep.mubr.f32.mxu0 0.0
      %1952 = vmatmul.mubr.f32.gmra.mrb[0].mxu0 %v1749
      %v1953 = vpop.f32.mrb[0].mxu0
      %v1954 = vadd.f32 0.0, %v1953
      %v1955 = vpop.f32.mrb[0].mxu0
      %1956 = vmatprep.mubr.f32.mxu0 0.0
      %1957 = vmatmul.mubr.f32.gmra.mrb[0].mxu0 %v1752
      %v1958 = vpop.f32.mrb[0].mxu0
      %v1959 = vadd.f32 0.0, %v1958
      %v1960 = vpop.f32.mrb[0].mxu0
      %1961 = vmatprep.mubr.f32.mxu0 0.0
      %1962 = vmatmul.mubr.f32.gmra.mrb[0].mxu0 %v1755
      %v1963 = vpop.f32.mrb[0].mxu0
      %v1964 = vadd.f32 0.0, %v1963
      %v1965 = vpop.f32.mrb[0].mxu0
      %1966 = vmatprep.mubr.f32.mxu0 0.0
      %1967 = vmatmul.mubr.f32.gmra.mrb[0].mxu0 %v1758
      %v1968 = vpop.f32.mrb[0].mxu0
      %v1969 = vadd.f32 0.0, %v1968
      %v1970 = vpop.f32.mrb[0].mxu0
      %1971 = vmatprep.mubr.f32.mxu0 0.0
      %1972 = vmatmul.mubr.f32.gmra.mrb[0].mxu0 %v1761
      %v1973 = vpop.f32.mrb[0].mxu0
      %v1974 = vadd.f32 0.0, %v1973
      %v1975 = vpop.f32.mrb[0].mxu0
      %1976 = vmatprep.mubr.f32.mxu0 0.0
      %1977 = vmatmul.mubr.f32.gmra.mrb[0].mxu0 %v1764
      %v1978 = vpop.f32.mrb[0].mxu0
      %v1979 = vadd.f32 0.0, %v1978
      %v1980 = vpop.f32.mrb[0].mxu0
      %1981 = vmatprep.mubr.f32.mxu0 0.0
      %1982 = vmatmul.mubr.f32.gmra.mrb[0].mxu0 %v1767
      %v1983 = vpop.f32.mrb[0].mxu0
      %v1984 = vadd.f32 0.0, %v1983
      %v1985 = vpop.f32.mrb[0].mxu0
      %1986 = vmatprep.mubr.f32.mxu0 0.0
      %1987 = vmatmul.mubr.f32.gmra.mrb[0].mxu0 %v1770
      %v1988 = vpop.f32.mrb[0].mxu0
      %v1989 = vadd.f32 0.0, %v1988
      %v1990 = vpop.f32.mrb[0].mxu0
      %1991 = vmatprep.mubr.f32.mxu0 0.0
      %1992 = vmatmul.mubr.f32.gmra.mrb[0].mxu0 %v1773
      %v1993 = vpop.f32.mrb[0].mxu0
      %v1994 = vadd.f32 0.0, %v1993
      %v1995 = vpop.f32.mrb[0].mxu0
      %1996 = vmatprep.mubr.f32.mxu0 0.0
      %1997 = vmatmul.mubr.f32.gmra.mrb[0].mxu0 %v1776
      %v1998 = vpop.f32.mrb[0].mxu0
      %v1999 = vadd.f32 0.0, %v1998
      %v2000 = vpop.f32.mrb[0].mxu0
      %2001 = vmatprep.mubr.f32.mxu0 0.0
      %2002 = vmatmul.mubr.f32.gmra.mrb[0].mxu0 %v1779
      %v2003 = vpop.f32.mrb[0].mxu0
      %v2004 = vadd.f32 0.0, %v2003
      %v2005 = vpop.f32.mrb[0].mxu0
      %2006 = vmatprep.mubr.f32.mxu0 0.0
      %2007 = vmatmul.mubr.f32.gmra.mrb[0].mxu0 %v1782
      %v2008 = vpop.f32.mrb[0].mxu0
      %v2009 = vadd.f32 0.0, %v2008
      %v2010 = vpop.f32.mrb[0].mxu0
      %2011 = vdwg.mxu0
      %v2012 = vadd.f32 %v1654, %v1854
      %v2013 = vadd.f32 %v1655, %v1859
      %v2014 = vadd.f32 %v1656, %v1864
      %v2015 = vadd.f32 %v1657, %v1869
      %v2016 = vadd.f32 %v1658, %v1874
      %v2017 = vadd.f32 %v1659, %v1879
      %v2018 = vadd.f32 %v1660, %v1884
      %v2019 = vadd.f32 %v1661, %v1889
      %v2020 = vadd.f32 %v1662, %v1894
      %v2021 = vadd.f32 %v1663, %v1899
      %v2022 = vadd.f32 %v1664, %v1904
      %v2023 = vadd.f32 %v1665, %v1909
      %v2024 = vadd.f32 %v1666, %v1914
      %v2025 = vadd.f32 %v1667, %v1919
      %v2026 = vadd.f32 %v1668, %v1924
      %v2027 = vadd.f32 %v1669, %v1929
      %v2028 = vadd.f32 %v1670, %v1934
      %v2029 = vadd.f32 %v1671, %v1939
      %v2030 = vadd.f32 %v1672, %v1944
      %v2031 = vadd.f32 %v1673, %v1949
      %v2032 = vadd.f32 %v1674, %v1954
      %v2033 = vadd.f32 %v1675, %v1959
      %v2034 = vadd.f32 %v1676, %v1964
      %v2035 = vadd.f32 %v1677, %v1969
      %v2036 = vadd.f32 %v1678, %v1974
      %v2037 = vadd.f32 %v1679, %v1979
      %v2038 = vadd.f32 %v1680, %v1984
      %v2039 = vadd.f32 %v1681, %v1989
      %v2040 = vadd.f32 %v1682, %v1994
      %v2041 = vadd.f32 %v1683, %v1999
      %v2042 = vadd.f32 %v1684, %v2004
      %v2043 = vadd.f32 %v1685, %v2009
      %2044 = vst [vmem:[#allocation2] sm:$0xff] %v2012
      %2045 = vst [vmem:[#allocation2 + $0x8] sm:$0xff] %v2013
      %2046 = vst [vmem:[#allocation2 + $0x10] sm:$0xff] %v2014
      %2047 = vst [vmem:[#allocation2 + $0x18] sm:$0xff] %v2015
      %2048 = vst [vmem:[#allocation2 + $0x20] sm:$0xff] %v2016
      %2049 = vst [vmem:[#allocation2 + $0x28] sm:$0xff] %v2017
      %2050 = vst [vmem:[#allocation2 + $0x30] sm:$0xff] %v2018
      %2051 = vst [vmem:[#allocation2 + $0x38] sm:$0xff] %v2019
      %2052 = vst [vmem:[#allocation2 + $0x40] sm:$0xff] %v2020
      %2053 = vst [vmem:[#allocation2 + $0x48] sm:$0xff] %v2021
      %2054 = vst [vmem:[#allocation2 + $0x50] sm:$0xff] %v2022
      %2055 = vst [vmem:[#allocation2 + $0x58] sm:$0xff] %v2023
      %2056 = vst [vmem:[#allocation2 + $0x60] sm:$0xff] %v2024
      %2057 = vst [vmem:[#allocation2 + $0x68] sm:$0xff] %v2025
      %2058 = vst [vmem:[#allocation2 + $0x70] sm:$0xff] %v2026
      %2059 = vst [vmem:[#allocation2 + $0x78] sm:$0xff] %v2027
      %2060 = vst [vmem:[#allocation2 + $0x80] sm:$0xff] %v2028
      %2061 = vst [vmem:[#allocation2 + $0x88] sm:$0xff] %v2029
      %2062 = vst [vmem:[#allocation2 + $0x90] sm:$0xff] %v2030
      %2063 = vst [vmem:[#allocation2 + $0x98] sm:$0xff] %v2031
      %2064 = vst [vmem:[#allocation2 + $0xa0] sm:$0xff] %v2032
      %2065 = vst [vmem:[#allocation2 + $0xa8] sm:$0xff] %v2033
      %2066 = vst [vmem:[#allocation2 + $0xb0] sm:$0xff] %v2034
      %2067 = vst [vmem:[#allocation2 + $0xb8] sm:$0xff] %v2035
      %2068 = vst [vmem:[#allocation2 + $0xc0] sm:$0xff] %v2036
      %2069 = vst [vmem:[#allocation2 + $0xc8] sm:$0xff] %v2037
      %2070 = vst [vmem:[#allocation2 + $0xd0] sm:$0xff] %v2038
      %2071 = vst [vmem:[#allocation2 + $0xd8] sm:$0xff] %v2039
      %2072 = vst [vmem:[#allocation2 + $0xe0] sm:$0xff] %v2040
      %2073 = vst [vmem:[#allocation2 + $0xe8] sm:$0xff] %v2041
      %2074 = vst [vmem:[#allocation2 + $0xf0] sm:$0xff] %v2042
      %2075 = vst [vmem:[#allocation2 + $0xf8] sm:$0xff] %v2043
      %v2076 = vld [vmem:[%s1621 + $0x1] sm:$0xff]
      %v2077 = vld [vmem:[%s1621 + $0x9] sm:$0xff]
      %v2078 = vld [vmem:[%s1621 + $0x19] sm:$0xff]
      %v2079 = vld [vmem:[%s1621 + $0x21] sm:$0xff]
      %v2080 = vld [vmem:[%s1621 + $0x31] sm:$0xff]
      %v2081 = vld [vmem:[%s1621 + $0x39] sm:$0xff]
      %v2082 = vld [vmem:[%s1621 + $0x49] sm:$0xff]
      %v2083 = vld [vmem:[%s1621 + $0x51] sm:$0xff]
      %v2084 = vld [vmem:[%s1621 + $0x61] sm:$0xff]
      %v2085 = vld [vmem:[%s1621 + $0x69] sm:$0xff]
      %v2086 = vld [vmem:[%s1621 + $0x79] sm:$0xff]
      %v2087 = vld [vmem:[%s1621 + $0x81] sm:$0xff]
      %v2088 = vld [vmem:[%s1621 + $0x91] sm:$0xff]
      %v2089 = vld [vmem:[%s1621 + $0x99] sm:$0xff]
      %v2090 = vld [vmem:[%s1621 + $0xa9] sm:$0xff]
      %v2091 = vld [vmem:[%s1621 + $0xb1] sm:$0xff]
      %v2092 = vld [vmem:[%s1621 + $0xc1] sm:$0xff]
      %v2093 = vld [vmem:[%s1621 + $0xc9] sm:$0xff]
      %v2094 = vld [vmem:[%s1621 + $0xd9] sm:$0xff]
      %v2095 = vld [vmem:[%s1621 + $0xe1] sm:$0xff]
      %v2096 = vld [vmem:[%s1621 + $0xf1] sm:$0xff]
      %v2097 = vld [vmem:[%s1621 + $0xf9] sm:$0xff]
      %v2098 = vld [vmem:[%s1621 + $0x109] sm:$0xff]
      %v2099 = vld [vmem:[%s1621 + $0x111] sm:$0xff]
      %v2100 = vld [vmem:[%s1621 + $0x121] sm:$0xff]
      %v2101 = vld [vmem:[%s1621 + $0x129] sm:$0xff]
      %v2102 = vld [vmem:[%s1621 + $0x139] sm:$0xff]
      %v2103 = vld [vmem:[%s1621 + $0x141] sm:$0xff]
      %v2104 = vld [vmem:[%s1621 + $0x151] sm:$0xff]
      %v2105 = vld [vmem:[%s1621 + $0x159] sm:$0xff]
      %v2106 = vld [vmem:[%s1621 + $0x169] sm:$0xff]
      %v2107 = vld [vmem:[%s1621 + $0x171] sm:$0xff]
      %v2108 = vld [vmem:[#allocation2] sm:$0xff]
      %v2109 = vld [vmem:[#allocation2 + $0x8] sm:$0xff]
      %v2110 = vld [vmem:[#allocation2 + $0x10] sm:$0xff]
      %v2111 = vld [vmem:[#allocation2 + $0x18] sm:$0xff]
      %v2112 = vld [vmem:[#allocation2 + $0x20] sm:$0xff]
      %v2113 = vld [vmem:[#allocation2 + $0x28] sm:$0xff]
      %v2114 = vld [vmem:[#allocation2 + $0x30] sm:$0xff]
      %v2115 = vld [vmem:[#allocation2 + $0x38] sm:$0xff]
      %v2116 = vld [vmem:[#allocation2 + $0x40] sm:$0xff]
      %v2117 = vld [vmem:[#allocation2 + $0x48] sm:$0xff]
      %v2118 = vld [vmem:[#allocation2 + $0x50] sm:$0xff]
      %v2119 = vld [vmem:[#allocation2 + $0x58] sm:$0xff]
      %v2120 = vld [vmem:[#allocation2 + $0x60] sm:$0xff]
      %v2121 = vld [vmem:[#allocation2 + $0x68] sm:$0xff]
      %v2122 = vld [vmem:[#allocation2 + $0x70] sm:$0xff]
      %v2123 = vld [vmem:[#allocation2 + $0x78] sm:$0xff]
      %v2124 = vld [vmem:[#allocation2 + $0x80] sm:$0xff]
      %v2125 = vld [vmem:[#allocation2 + $0x88] sm:$0xff]
      %v2126 = vld [vmem:[#allocation2 + $0x90] sm:$0xff]
      %v2127 = vld [vmem:[#allocation2 + $0x98] sm:$0xff]
      %v2128 = vld [vmem:[#allocation2 + $0xa0] sm:$0xff]
      %v2129 = vld [vmem:[#allocation2 + $0xa8] sm:$0xff]
      %v2130 = vld [vmem:[#allocation2 + $0xb0] sm:$0xff]
      %v2131 = vld [vmem:[#allocation2 + $0xb8] sm:$0xff]
      %v2132 = vld [vmem:[#allocation2 + $0xc0] sm:$0xff]
      %v2133 = vld [vmem:[#allocation2 + $0xc8] sm:$0xff]
      %v2134 = vld [vmem:[#allocation2 + $0xd0] sm:$0xff]
      %v2135 = vld [vmem:[#allocation2 + $0xd8] sm:$0xff]
      %v2136 = vld [vmem:[#allocation2 + $0xe0] sm:$0xff]
      %v2137 = vld [vmem:[#allocation2 + $0xe8] sm:$0xff]
      %v2138 = vld [vmem:[#allocation2 + $0xf0] sm:$0xff]
      %v2139 = vld [vmem:[#allocation2 + $0xf8] sm:$0xff]
      %s2140 = scalar_lea.vmem %s1, 16
      %v2141 = vld [vmem:[%s2140] sm:$0xf]
      %v2143 = vsel %vm321, %v2076, 0
      %v2146 = vsel %vm321, %v2077, 0
      %v2149 = vsel %vm321, %v2078, 0
      %v2152 = vsel %vm321, %v2079, 0
      %v2155 = vsel %vm321, %v2080, 0
      %v2158 = vsel %vm321, %v2081, 0
      %v2161 = vsel %vm321, %v2082, 0
      %v2164 = vsel %vm321, %v2083, 0
      %v2167 = vsel %vm321, %v2084, 0
      %v2170 = vsel %vm321, %v2085, 0
      %v2173 = vsel %vm321, %v2086, 0
      %v2176 = vsel %vm321, %v2087, 0
      %v2179 = vsel %vm321, %v2088, 0
      %v2182 = vsel %vm321, %v2089, 0
      %v2185 = vsel %vm321, %v2090, 0
      %v2188 = vsel %vm321, %v2091, 0
      %v2191 = vsel %vm321, %v2092, 0
      %v2194 = vsel %vm321, %v2093, 0
      %v2197 = vsel %vm321, %v2094, 0
      %v2200 = vsel %vm321, %v2095, 0
      %v2203 = vsel %vm321, %v2096, 0
      %v2206 = vsel %vm321, %v2097, 0
      %v2209 = vsel %vm321, %v2098, 0
      %v2212 = vsel %vm321, %v2099, 0
      %v2215 = vsel %vm321, %v2100, 0
      %v2218 = vsel %vm321, %v2101, 0
      %v2221 = vsel %vm321, %v2102, 0
      %v2224 = vsel %vm321, %v2103, 0
      %v2227 = vsel %vm321, %v2104, 0
      %v2230 = vsel %vm321, %v2105, 0
      %v2233 = vsel %vm321, %v2106, 0
      %v2236 = vsel %vm321, %v2107, 0
      %v2239 = vsel %vm418, %v2141, 0
      %2241 = vmatprep.subr.mxu0 0.0
      %2242 = vmatpush1.msra.mxu0 %v2239
      %2243 = vmatprep.subr.mxu0 0.0
      %2244 = vmatpush1.msra.mxu0 0.0
      %2245 = vmatprep.subr.mxu0 0.0
      %2246 = vmatpush1.msra.mxu0 0.0
      %2247 = vmatprep.subr.mxu0 0.0
      %2248 = vmatpush1.msra.mxu0 0.0
      %2249 = vmatprep.subr.mxu0 0.0
      %2250 = vmatpush1.msra.mxu0 0.0
      %2251 = vmatprep.subr.mxu0 0.0
      %2252 = vmatpush1.msra.mxu0 0.0
      %2253 = vmatprep.subr.mxu0 0.0
      %2254 = vmatpush1.msra.mxu0 0.0
      %2255 = vmatprep.subr.mxu0 0.0
      %2256 = vmatpush1.msra.mxu0 0.0
      %2257 = vmatprep.subr.mxu0 0.0
      %2258 = vmatpush1.msra.mxu0 0.0
      %2259 = vmatprep.subr.mxu0 0.0
      %2260 = vmatpush1.msra.mxu0 0.0
      %2261 = vmatprep.subr.mxu0 0.0
      %2262 = vmatpush1.msra.mxu0 0.0
      %2263 = vmatprep.subr.mxu0 0.0
      %2264 = vmatpush1.msra.mxu0 0.0
      %2265 = vmatprep.subr.mxu0 0.0
      %2266 = vmatpush1.msra.mxu0 0.0
      %2267 = vmatprep.subr.mxu0 0.0
      %2268 = vmatpush1.msra.mxu0 0.0
      %2269 = vmatprep.subr.mxu0 0.0
      %2270 = vmatpush1.msra.mxu0 0.0
      %2271 = vmatprep.subr.mxu0 0.0
      %2272 = vmatpush1.msra.mxu0 0.0
      %2273 = vmatprep.subr.mxu0 0.0
      %2274 = vmatpush1.msra.mxu0 0.0
      %2275 = vmatprep.subr.mxu0 0.0
      %2276 = vmatpush1.msra.mxu0 0.0
      %2277 = vmatprep.subr.mxu0 0.0
      %2278 = vmatpush1.msra.mxu0 0.0
      %2279 = vmatprep.subr.mxu0 0.0
      %2280 = vmatpush1.msra.mxu0 0.0
      %2281 = vmatprep.subr.mxu0 0.0
      %2282 = vmatpush1.msra.mxu0 0.0
      %2283 = vmatprep.subr.mxu0 0.0
      %2284 = vmatpush1.msra.mxu0 0.0
      %2285 = vmatprep.subr.mxu0 0.0
      %2286 = vmatpush1.msra.mxu0 0.0
      %2287 = vmatprep.subr.mxu0 0.0
      %2288 = vmatpush1.msra.mxu0 0.0
      %2289 = vmatprep.subr.mxu0 0.0
      %2290 = vmatpush1.msra.mxu0 0.0
      %2291 = vmatprep.subr.mxu0 0.0
      %2292 = vmatpush1.msra.mxu0 0.0
      %2293 = vmatprep.subr.mxu0 0.0
      %2294 = vmatpush1.msra.mxu0 0.0
      %2295 = vmatprep.subr.mxu0 0.0
      %2296 = vmatpush1.msra.mxu0 0.0
      %2297 = vmatprep.subr.mxu0 0.0
      %2298 = vmatpush1.msra.mxu0 0.0
      %2299 = vmatprep.subr.mxu0 0.0
      %2300 = vmatpush1.msra.mxu0 0.0
      %2301 = vmatprep.subr.mxu0 0.0
      %2302 = vmatpush1.msra.mxu0 0.0
      %2303 = vmatprep.subr.mxu0 0.0
      %2304 = vmatpush1.msra.mxu0 0.0
      %2305 = vmatprep.mubr.f32.mxu0 0.0
      %2306 = vmatmul.mubr.f32.gmra.mrb[0].mxu0 %v2143
      %v2307 = vpop.f32.mrb[0].mxu0
      %v2308 = vadd.f32 0.0, %v2307
      %v2309 = vpop.f32.mrb[0].mxu0
      %2310 = vmatprep.mubr.f32.mxu0 0.0
      %2311 = vmatmul.mubr.f32.gmra.mrb[0].mxu0 %v2146
      %v2312 = vpop.f32.mrb[0].mxu0
      %v2313 = vadd.f32 0.0, %v2312
      %v2314 = vpop.f32.mrb[0].mxu0
      %2315 = vmatprep.mubr.f32.mxu0 0.0
      %2316 = vmatmul.mubr.f32.gmra.mrb[0].mxu0 %v2149
      %v2317 = vpop.f32.mrb[0].mxu0
      %v2318 = vadd.f32 0.0, %v2317
      %v2319 = vpop.f32.mrb[0].mxu0
      %2320 = vmatprep.mubr.f32.mxu0 0.0
      %2321 = vmatmul.mubr.f32.gmra.mrb[0].mxu0 %v2152
      %v2322 = vpop.f32.mrb[0].mxu0
      %v2323 = vadd.f32 0.0, %v2322
      %v2324 = vpop.f32.mrb[0].mxu0
      %2325 = vmatprep.mubr.f32.mxu0 0.0
      %2326 = vmatmul.mubr.f32.gmra.mrb[0].mxu0 %v2155
      %v2327 = vpop.f32.mrb[0].mxu0
      %v2328 = vadd.f32 0.0, %v2327
      %v2329 = vpop.f32.mrb[0].mxu0
      %2330 = vmatprep.mubr.f32.mxu0 0.0
      %2331 = vmatmul.mubr.f32.gmra.mrb[0].mxu0 %v2158
      %v2332 = vpop.f32.mrb[0].mxu0
      %v2333 = vadd.f32 0.0, %v2332
      %v2334 = vpop.f32.mrb[0].mxu0
      %2335 = vmatprep.mubr.f32.mxu0 0.0
      %2336 = vmatmul.mubr.f32.gmra.mrb[0].mxu0 %v2161
      %v2337 = vpop.f32.mrb[0].mxu0
      %v2338 = vadd.f32 0.0, %v2337
      %v2339 = vpop.f32.mrb[0].mxu0
      %2340 = vmatprep.mubr.f32.mxu0 0.0
      %2341 = vmatmul.mubr.f32.gmra.mrb[0].mxu0 %v2164
      %v2342 = vpop.f32.mrb[0].mxu0
      %v2343 = vadd.f32 0.0, %v2342
      %v2344 = vpop.f32.mrb[0].mxu0
      %2345 = vmatprep.mubr.f32.mxu0 0.0
      %2346 = vmatmul.mubr.f32.gmra.mrb[0].mxu0 %v2167
      %v2347 = vpop.f32.mrb[0].mxu0
      %v2348 = vadd.f32 0.0, %v2347
      %v2349 = vpop.f32.mrb[0].mxu0
      %2350 = vmatprep.mubr.f32.mxu0 0.0
      %2351 = vmatmul.mubr.f32.gmra.mrb[0].mxu0 %v2170
      %v2352 = vpop.f32.mrb[0].mxu0
      %v2353 = vadd.f32 0.0, %v2352
      %v2354 = vpop.f32.mrb[0].mxu0
      %2355 = vmatprep.mubr.f32.mxu0 0.0
      %2356 = vmatmul.mubr.f32.gmra.mrb[0].mxu0 %v2173
      %v2357 = vpop.f32.mrb[0].mxu0
      %v2358 = vadd.f32 0.0, %v2357
      %v2359 = vpop.f32.mrb[0].mxu0
      %2360 = vmatprep.mubr.f32.mxu0 0.0
      %2361 = vmatmul.mubr.f32.gmra.mrb[0].mxu0 %v2176
      %v2362 = vpop.f32.mrb[0].mxu0
      %v2363 = vadd.f32 0.0, %v2362
      %v2364 = vpop.f32.mrb[0].mxu0
      %2365 = vmatprep.mubr.f32.mxu0 0.0
      %2366 = vmatmul.mubr.f32.gmra.mrb[0].mxu0 %v2179
      %v2367 = vpop.f32.mrb[0].mxu0
      %v2368 = vadd.f32 0.0, %v2367
      %v2369 = vpop.f32.mrb[0].mxu0
      %2370 = vmatprep.mubr.f32.mxu0 0.0
      %2371 = vmatmul.mubr.f32.gmra.mrb[0].mxu0 %v2182
      %v2372 = vpop.f32.mrb[0].mxu0
      %v2373 = vadd.f32 0.0, %v2372
      %v2374 = vpop.f32.mrb[0].mxu0
      %2375 = vmatprep.mubr.f32.mxu0 0.0
      %2376 = vmatmul.mubr.f32.gmra.mrb[0].mxu0 %v2185
      %v2377 = vpop.f32.mrb[0].mxu0
      %v2378 = vadd.f32 0.0, %v2377
      %v2379 = vpop.f32.mrb[0].mxu0
      %2380 = vmatprep.mubr.f32.mxu0 0.0
      %2381 = vmatmul.mubr.f32.gmra.mrb[0].mxu0 %v2188
      %v2382 = vpop.f32.mrb[0].mxu0
      %v2383 = vadd.f32 0.0, %v2382
      %v2384 = vpop.f32.mrb[0].mxu0
      %2385 = vmatprep.mubr.f32.mxu0 0.0
      %2386 = vmatmul.mubr.f32.gmra.mrb[0].mxu0 %v2191
      %v2387 = vpop.f32.mrb[0].mxu0
      %v2388 = vadd.f32 0.0, %v2387
      %v2389 = vpop.f32.mrb[0].mxu0
      %2390 = vmatprep.mubr.f32.mxu0 0.0
      %2391 = vmatmul.mubr.f32.gmra.mrb[0].mxu0 %v2194
      %v2392 = vpop.f32.mrb[0].mxu0
      %v2393 = vadd.f32 0.0, %v2392
      %v2394 = vpop.f32.mrb[0].mxu0
      %2395 = vmatprep.mubr.f32.mxu0 0.0
      %2396 = vmatmul.mubr.f32.gmra.mrb[0].mxu0 %v2197
      %v2397 = vpop.f32.mrb[0].mxu0
      %v2398 = vadd.f32 0.0, %v2397
      %v2399 = vpop.f32.mrb[0].mxu0
      %2400 = vmatprep.mubr.f32.mxu0 0.0
      %2401 = vmatmul.mubr.f32.gmra.mrb[0].mxu0 %v2200
      %v2402 = vpop.f32.mrb[0].mxu0
      %v2403 = vadd.f32 0.0, %v2402
      %v2404 = vpop.f32.mrb[0].mxu0
      %2405 = vmatprep.mubr.f32.mxu0 0.0
      %2406 = vmatmul.mubr.f32.gmra.mrb[0].mxu0 %v2203
      %v2407 = vpop.f32.mrb[0].mxu0
      %v2408 = vadd.f32 0.0, %v2407
      %v2409 = vpop.f32.mrb[0].mxu0
      %2410 = vmatprep.mubr.f32.mxu0 0.0
      %2411 = vmatmul.mubr.f32.gmra.mrb[0].mxu0 %v2206
      %v2412 = vpop.f32.mrb[0].mxu0
      %v2413 = vadd.f32 0.0, %v2412
      %v2414 = vpop.f32.mrb[0].mxu0
      %2415 = vmatprep.mubr.f32.mxu0 0.0
      %2416 = vmatmul.mubr.f32.gmra.mrb[0].mxu0 %v2209
      %v2417 = vpop.f32.mrb[0].mxu0
      %v2418 = vadd.f32 0.0, %v2417
      %v2419 = vpop.f32.mrb[0].mxu0
      %2420 = vmatprep.mubr.f32.mxu0 0.0
      %2421 = vmatmul.mubr.f32.gmra.mrb[0].mxu0 %v2212
      %v2422 = vpop.f32.mrb[0].mxu0
      %v2423 = vadd.f32 0.0, %v2422
      %v2424 = vpop.f32.mrb[0].mxu0
      %2425 = vmatprep.mubr.f32.mxu0 0.0
      %2426 = vmatmul.mubr.f32.gmra.mrb[0].mxu0 %v2215
      %v2427 = vpop.f32.mrb[0].mxu0
      %v2428 = vadd.f32 0.0, %v2427
      %v2429 = vpop.f32.mrb[0].mxu0
      %2430 = vmatprep.mubr.f32.mxu0 0.0
      %2431 = vmatmul.mubr.f32.gmra.mrb[0].mxu0 %v2218
      %v2432 = vpop.f32.mrb[0].mxu0
      %v2433 = vadd.f32 0.0, %v2432
      %v2434 = vpop.f32.mrb[0].mxu0
      %2435 = vmatprep.mubr.f32.mxu0 0.0
      %2436 = vmatmul.mubr.f32.gmra.mrb[0].mxu0 %v2221
      %v2437 = vpop.f32.mrb[0].mxu0
      %v2438 = vadd.f32 0.0, %v2437
      %v2439 = vpop.f32.mrb[0].mxu0
      %2440 = vmatprep.mubr.f32.mxu0 0.0
      %2441 = vmatmul.mubr.f32.gmra.mrb[0].mxu0 %v2224
      %v2442 = vpop.f32.mrb[0].mxu0
      %v2443 = vadd.f32 0.0, %v2442
      %v2444 = vpop.f32.mrb[0].mxu0
      %2445 = vmatprep.mubr.f32.mxu0 0.0
      %2446 = vmatmul.mubr.f32.gmra.mrb[0].mxu0 %v2227
      %v2447 = vpop.f32.mrb[0].mxu0
      %v2448 = vadd.f32 0.0, %v2447
      %v2449 = vpop.f32.mrb[0].mxu0
      %2450 = vmatprep.mubr.f32.mxu0 0.0
      %2451 = vmatmul.mubr.f32.gmra.mrb[0].mxu0 %v2230
      %v2452 = vpop.f32.mrb[0].mxu0
      %v2453 = vadd.f32 0.0, %v2452
      %v2454 = vpop.f32.mrb[0].mxu0
      %2455 = vmatprep.mubr.f32.mxu0 0.0
      %2456 = vmatmul.mubr.f32.gmra.mrb[0].mxu0 %v2233
      %v2457 = vpop.f32.mrb[0].mxu0
      %v2458 = vadd.f32 0.0, %v2457
      %v2459 = vpop.f32.mrb[0].mxu0
      %2460 = vmatprep.mubr.f32.mxu0 0.0
      %2461 = vmatmul.mubr.f32.gmra.mrb[0].mxu0 %v2236
      %v2462 = vpop.f32.mrb[0].mxu0
      %v2463 = vadd.f32 0.0, %v2462
      %v2464 = vpop.f32.mrb[0].mxu0
      %2465 = vdwg.mxu0
      %v2466 = vadd.f32 %v2108, %v2308
      %v2467 = vadd.f32 %v2109, %v2313
      %v2468 = vadd.f32 %v2110, %v2318
      %v2469 = vadd.f32 %v2111, %v2323
      %v2470 = vadd.f32 %v2112, %v2328
      %v2471 = vadd.f32 %v2113, %v2333
      %v2472 = vadd.f32 %v2114, %v2338
      %v2473 = vadd.f32 %v2115, %v2343
      %v2474 = vadd.f32 %v2116, %v2348
      %v2475 = vadd.f32 %v2117, %v2353
      %v2476 = vadd.f32 %v2118, %v2358
      %v2477 = vadd.f32 %v2119, %v2363
      %v2478 = vadd.f32 %v2120, %v2368
      %v2479 = vadd.f32 %v2121, %v2373
      %v2480 = vadd.f32 %v2122, %v2378
      %v2481 = vadd.f32 %v2123, %v2383
      %v2482 = vadd.f32 %v2124, %v2388
      %v2483 = vadd.f32 %v2125, %v2393
      %v2484 = vadd.f32 %v2126, %v2398
      %v2485 = vadd.f32 %v2127, %v2403
      %v2486 = vadd.f32 %v2128, %v2408
      %v2487 = vadd.f32 %v2129, %v2413
      %v2488 = vadd.f32 %v2130, %v2418
      %v2489 = vadd.f32 %v2131, %v2423
      %v2490 = vadd.f32 %v2132, %v2428
      %v2491 = vadd.f32 %v2133, %v2433
      %v2492 = vadd.f32 %v2134, %v2438
      %v2493 = vadd.f32 %v2135, %v2443
      %v2494 = vadd.f32 %v2136, %v2448
      %v2495 = vadd.f32 %v2137, %v2453
      %v2496 = vadd.f32 %v2138, %v2458
      %v2497 = vadd.f32 %v2139, %v2463
      %2498 = vst [vmem:[#allocation2] sm:$0xff] %v2466
      %2499 = vst [vmem:[#allocation2 + $0x8] sm:$0xff] %v2467
      %2500 = vst [vmem:[#allocation2 + $0x10] sm:$0xff] %v2468
      %2501 = vst [vmem:[#allocation2 + $0x18] sm:$0xff] %v2469
      %2502 = vst [vmem:[#allocation2 + $0x20] sm:$0xff] %v2470
      %2503 = vst [vmem:[#allocation2 + $0x28] sm:$0xff] %v2471
      %2504 = vst [vmem:[#allocation2 + $0x30] sm:$0xff] %v2472
      %2505 = vst [vmem:[#allocation2 + $0x38] sm:$0xff] %v2473
      %2506 = vst [vmem:[#allocation2 + $0x40] sm:$0xff] %v2474
      %2507 = vst [vmem:[#allocation2 + $0x48] sm:$0xff] %v2475
      %2508 = vst [vmem:[#allocation2 + $0x50] sm:$0xff] %v2476
      %2509 = vst [vmem:[#allocation2 + $0x58] sm:$0xff] %v2477
      %2510 = vst [vmem:[#allocation2 + $0x60] sm:$0xff] %v2478
      %2511 = vst [vmem:[#allocation2 + $0x68] sm:$0xff] %v2479
      %2512 = vst [vmem:[#allocation2 + $0x70] sm:$0xff] %v2480
      %2513 = vst [vmem:[#allocation2 + $0x78] sm:$0xff] %v2481
      %2514 = vst [vmem:[#allocation2 + $0x80] sm:$0xff] %v2482
      %2515 = vst [vmem:[#allocation2 + $0x88] sm:$0xff] %v2483
      %2516 = vst [vmem:[#allocation2 + $0x90] sm:$0xff] %v2484
      %2517 = vst [vmem:[#allocation2 + $0x98] sm:$0xff] %v2485
      %2518 = vst [vmem:[#allocation2 + $0xa0] sm:$0xff] %v2486
      %2519 = vst [vmem:[#allocation2 + $0xa8] sm:$0xff] %v2487
      %2520 = vst [vmem:[#allocation2 + $0xb0] sm:$0xff] %v2488
      %2521 = vst [vmem:[#allocation2 + $0xb8] sm:$0xff] %v2489
      %2522 = vst [vmem:[#allocation2 + $0xc0] sm:$0xff] %v2490
      %2523 = vst [vmem:[#allocation2 + $0xc8] sm:$0xff] %v2491
      %2524 = vst [vmem:[#allocation2 + $0xd0] sm:$0xff] %v2492
      %2525 = vst [vmem:[#allocation2 + $0xd8] sm:$0xff] %v2493
      %2526 = vst [vmem:[#allocation2 + $0xe0] sm:$0xff] %v2494
      %2527 = vst [vmem:[#allocation2 + $0xe8] sm:$0xff] %v2495
      %2528 = vst [vmem:[#allocation2 + $0xf0] sm:$0xff] %v2496
      %2529 = vst [vmem:[#allocation2 + $0xf8] sm:$0xff] %v2497
      %v2530 = vld [vmem:[%s1621 + $0x2] sm:$0xff]
      %v2531 = vld [vmem:[%s1621 + $0xa] sm:$0xff]
      %v2532 = vld [vmem:[%s1621 + $0x1a] sm:$0xff]
      %v2533 = vld [vmem:[%s1621 + $0x22] sm:$0xff]
      %v2534 = vld [vmem:[%s1621 + $0x32] sm:$0xff]
      %v2535 = vld [vmem:[%s1621 + $0x3a] sm:$0xff]
      %v2536 = vld [vmem:[%s1621 + $0x4a] sm:$0xff]
      %v2537 = vld [vmem:[%s1621 + $0x52] sm:$0xff]
      %v2538 = vld [vmem:[%s1621 + $0x62] sm:$0xff]
      %v2539 = vld [vmem:[%s1621 + $0x6a] sm:$0xff]
      %v2540 = vld [vmem:[%s1621 + $0x7a] sm:$0xff]
      %v2541 = vld [vmem:[%s1621 + $0x82] sm:$0xff]
      %v2542 = vld [vmem:[%s1621 + $0x92] sm:$0xff]
      %v2543 = vld [vmem:[%s1621 + $0x9a] sm:$0xff]
      %v2544 = vld [vmem:[%s1621 + $0xaa] sm:$0xff]
      %v2545 = vld [vmem:[%s1621 + $0xb2] sm:$0xff]
      %v2546 = vld [vmem:[%s1621 + $0xc2] sm:$0xff]
      %v2547 = vld [vmem:[%s1621 + $0xca] sm:$0xff]
      %v2548 = vld [vmem:[%s1621 + $0xda] sm:$0xff]
      %v2549 = vld [vmem:[%s1621 + $0xe2] sm:$0xff]
      %v2550 = vld [vmem:[%s1621 + $0xf2] sm:$0xff]
      %v2551 = vld [vmem:[%s1621 + $0xfa] sm:$0xff]
      %v2552 = vld [vmem:[%s1621 + $0x10a] sm:$0xff]
      %v2553 = vld [vmem:[%s1621 + $0x112] sm:$0xff]
      %v2554 = vld [vmem:[%s1621 + $0x122] sm:$0xff]
      %v2555 = vld [vmem:[%s1621 + $0x12a] sm:$0xff]
      %v2556 = vld [vmem:[%s1621 + $0x13a] sm:$0xff]
      %v2557 = vld [vmem:[%s1621 + $0x142] sm:$0xff]
      %v2558 = vld [vmem:[%s1621 + $0x152] sm:$0xff]
      %v2559 = vld [vmem:[%s1621 + $0x15a] sm:$0xff]
      %v2560 = vld [vmem:[%s1621 + $0x16a] sm:$0xff]
      %v2561 = vld [vmem:[%s1621 + $0x172] sm:$0xff]
      %v2562 = vld [vmem:[#allocation2] sm:$0xff]
      %v2563 = vld [vmem:[#allocation2 + $0x8] sm:$0xff]
      %v2564 = vld [vmem:[#allocation2 + $0x10] sm:$0xff]
      %v2565 = vld [vmem:[#allocation2 + $0x18] sm:$0xff]
      %v2566 = vld [vmem:[#allocation2 + $0x20] sm:$0xff]
      %v2567 = vld [vmem:[#allocation2 + $0x28] sm:$0xff]
      %v2568 = vld [vmem:[#allocation2 + $0x30] sm:$0xff]
      %v2569 = vld [vmem:[#allocation2 + $0x38] sm:$0xff]
      %v2570 = vld [vmem:[#allocation2 + $0x40] sm:$0xff]
      %v2571 = vld [vmem:[#allocation2 + $0x48] sm:$0xff]
      %v2572 = vld [vmem:[#allocation2 + $0x50] sm:$0xff]
      %v2573 = vld [vmem:[#allocation2 + $0x58] sm:$0xff]
      %v2574 = vld [vmem:[#allocation2 + $0x60] sm:$0xff]
      %v2575 = vld [vmem:[#allocation2 + $0x68] sm:$0xff]
      %v2576 = vld [vmem:[#allocation2 + $0x70] sm:$0xff]
      %v2577 = vld [vmem:[#allocation2 + $0x78] sm:$0xff]
      %v2578 = vld [vmem:[#allocation2 + $0x80] sm:$0xff]
      %v2579 = vld [vmem:[#allocation2 + $0x88] sm:$0xff]
      %v2580 = vld [vmem:[#allocation2 + $0x90] sm:$0xff]
      %v2581 = vld [vmem:[#allocation2 + $0x98] sm:$0xff]
      %v2582 = vld [vmem:[#allocation2 + $0xa0] sm:$0xff]
      %v2583 = vld [vmem:[#allocation2 + $0xa8] sm:$0xff]
      %v2584 = vld [vmem:[#allocation2 + $0xb0] sm:$0xff]
      %v2585 = vld [vmem:[#allocation2 + $0xb8] sm:$0xff]
      %v2586 = vld [vmem:[#allocation2 + $0xc0] sm:$0xff]
      %v2587 = vld [vmem:[#allocation2 + $0xc8] sm:$0xff]
      %v2588 = vld [vmem:[#allocation2 + $0xd0] sm:$0xff]
      %v2589 = vld [vmem:[#allocation2 + $0xd8] sm:$0xff]
      %v2590 = vld [vmem:[#allocation2 + $0xe0] sm:$0xff]
      %v2591 = vld [vmem:[#allocation2 + $0xe8] sm:$0xff]
      %v2592 = vld [vmem:[#allocation2 + $0xf0] sm:$0xff]
      %v2593 = vld [vmem:[#allocation2 + $0xf8] sm:$0xff]
      %s2594 = scalar_lea.vmem %s1, 20
      %v2595 = vld [vmem:[%s2594] sm:$0xf]
      %v2597 = vsel %vm321, %v2530, 0
      %v2600 = vsel %vm321, %v2531, 0
      %v2603 = vsel %vm321, %v2532, 0
      %v2606 = vsel %vm321, %v2533, 0
      %v2609 = vsel %vm321, %v2534, 0
      %v2612 = vsel %vm321, %v2535, 0
      %v2615 = vsel %vm321, %v2536, 0
      %v2618 = vsel %vm321, %v2537, 0
      %v2621 = vsel %vm321, %v2538, 0
      %v2624 = vsel %vm321, %v2539, 0
      %v2627 = vsel %vm321, %v2540, 0
      %v2630 = vsel %vm321, %v2541, 0
      %v2633 = vsel %vm321, %v2542, 0
      %v2636 = vsel %vm321, %v2543, 0
      %v2639 = vsel %vm321, %v2544, 0
      %v2642 = vsel %vm321, %v2545, 0
      %v2645 = vsel %vm321, %v2546, 0
      %v2648 = vsel %vm321, %v2547, 0
      %v2651 = vsel %vm321, %v2548, 0
      %v2654 = vsel %vm321, %v2549, 0
      %v2657 = vsel %vm321, %v2550, 0
      %v2660 = vsel %vm321, %v2551, 0
      %v2663 = vsel %vm321, %v2552, 0
      %v2666 = vsel %vm321, %v2553, 0
      %v2669 = vsel %vm321, %v2554, 0
      %v2672 = vsel %vm321, %v2555, 0
      %v2675 = vsel %vm321, %v2556, 0
      %v2678 = vsel %vm321, %v2557, 0
      %v2681 = vsel %vm321, %v2558, 0
      %v2684 = vsel %vm321, %v2559, 0
      %v2687 = vsel %vm321, %v2560, 0
      %v2690 = vsel %vm321, %v2561, 0
      %v2693 = vsel %vm418, %v2595, 0
      %2695 = vmatprep.subr.mxu0 0.0
      %2696 = vmatpush1.msra.mxu0 %v2693
      %2697 = vmatprep.subr.mxu0 0.0
      %2698 = vmatpush1.msra.mxu0 0.0
      %2699 = vmatprep.subr.mxu0 0.0
      %2700 = vmatpush1.msra.mxu0 0.0
      %2701 = vmatprep.subr.mxu0 0.0
      %2702 = vmatpush1.msra.mxu0 0.0
      %2703 = vmatprep.subr.mxu0 0.0
      %2704 = vmatpush1.msra.mxu0 0.0
      %2705 = vmatprep.subr.mxu0 0.0
      %2706 = vmatpush1.msra.mxu0 0.0
      %2707 = vmatprep.subr.mxu0 0.0
      %2708 = vmatpush1.msra.mxu0 0.0
      %2709 = vmatprep.subr.mxu0 0.0
      %2710 = vmatpush1.msra.mxu0 0.0
      %2711 = vmatprep.subr.mxu0 0.0
      %2712 = vmatpush1.msra.mxu0 0.0
      %2713 = vmatprep.subr.mxu0 0.0
      %2714 = vmatpush1.msra.mxu0 0.0
      %2715 = vmatprep.subr.mxu0 0.0
      %2716 = vmatpush1.msra.mxu0 0.0
      %2717 = vmatprep.subr.mxu0 0.0
      %2718 = vmatpush1.msra.mxu0 0.0
      %2719 = vmatprep.subr.mxu0 0.0
      %2720 = vmatpush1.msra.mxu0 0.0
      %2721 = vmatprep.subr.mxu0 0.0
      %2722 = vmatpush1.msra.mxu0 0.0
      %2723 = vmatprep.subr.mxu0 0.0
      %2724 = vmatpush1.msra.mxu0 0.0
      %2725 = vmatprep.subr.mxu0 0.0
      %2726 = vmatpush1.msra.mxu0 0.0
      %2727 = vmatprep.subr.mxu0 0.0
      %2728 = vmatpush1.msra.mxu0 0.0
      %2729 = vmatprep.subr.mxu0 0.0
      %2730 = vmatpush1.msra.mxu0 0.0
      %2731 = vmatprep.subr.mxu0 0.0
      %2732 = vmatpush1.msra.mxu0 0.0
      %2733 = vmatprep.subr.mxu0 0.0
      %2734 = vmatpush1.msra.mxu0 0.0
      %2735 = vmatprep.subr.mxu0 0.0
      %2736 = vmatpush1.msra.mxu0 0.0
      %2737 = vmatprep.subr.mxu0 0.0
      %2738 = vmatpush1.msra.mxu0 0.0
      %2739 = vmatprep.subr.mxu0 0.0
      %2740 = vmatpush1.msra.mxu0 0.0
      %2741 = vmatprep.subr.mxu0 0.0
      %2742 = vmatpush1.msra.mxu0 0.0
      %2743 = vmatprep.subr.mxu0 0.0
      %2744 = vmatpush1.msra.mxu0 0.0
      %2745 = vmatprep.subr.mxu0 0.0
      %2746 = vmatpush1.msra.mxu0 0.0
      %2747 = vmatprep.subr.mxu0 0.0
      %2748 = vmatpush1.msra.mxu0 0.0
      %2749 = vmatprep.subr.mxu0 0.0
      %2750 = vmatpush1.msra.mxu0 0.0
      %2751 = vmatprep.subr.mxu0 0.0
      %2752 = vmatpush1.msra.mxu0 0.0
      %2753 = vmatprep.subr.mxu0 0.0
      %2754 = vmatpush1.msra.mxu0 0.0
      %2755 = vmatprep.subr.mxu0 0.0
      %2756 = vmatpush1.msra.mxu0 0.0
      %2757 = vmatprep.subr.mxu0 0.0
      %2758 = vmatpush1.msra.mxu0 0.0
      %2759 = vmatprep.mubr.f32.mxu0 0.0
      %2760 = vmatmul.mubr.f32.gmra.mrb[0].mxu0 %v2597
      %v2761 = vpop.f32.mrb[0].mxu0
      %v2762 = vadd.f32 0.0, %v2761
      %v2763 = vpop.f32.mrb[0].mxu0
      %2764 = vmatprep.mubr.f32.mxu0 0.0
      %2765 = vmatmul.mubr.f32.gmra.mrb[0].mxu0 %v2600
      %v2766 = vpop.f32.mrb[0].mxu0
      %v2767 = vadd.f32 0.0, %v2766
      %v2768 = vpop.f32.mrb[0].mxu0
      %2769 = vmatprep.mubr.f32.mxu0 0.0
      %2770 = vmatmul.mubr.f32.gmra.mrb[0].mxu0 %v2603
      %v2771 = vpop.f32.mrb[0].mxu0
      %v2772 = vadd.f32 0.0, %v2771
      %v2773 = vpop.f32.mrb[0].mxu0
      %2774 = vmatprep.mubr.f32.mxu0 0.0
      %2775 = vmatmul.mubr.f32.gmra.mrb[0].mxu0 %v2606
      %v2776 = vpop.f32.mrb[0].mxu0
      %v2777 = vadd.f32 0.0, %v2776
      %v2778 = vpop.f32.mrb[0].mxu0
      %2779 = vmatprep.mubr.f32.mxu0 0.0
      %2780 = vmatmul.mubr.f32.gmra.mrb[0].mxu0 %v2609
      %v2781 = vpop.f32.mrb[0].mxu0
      %v2782 = vadd.f32 0.0, %v2781
      %v2783 = vpop.f32.mrb[0].mxu0
      %2784 = vmatprep.mubr.f32.mxu0 0.0
      %2785 = vmatmul.mubr.f32.gmra.mrb[0].mxu0 %v2612
      %v2786 = vpop.f32.mrb[0].mxu0
      %v2787 = vadd.f32 0.0, %v2786
      %v2788 = vpop.f32.mrb[0].mxu0
      %2789 = vmatprep.mubr.f32.mxu0 0.0
      %2790 = vmatmul.mubr.f32.gmra.mrb[0].mxu0 %v2615
      %v2791 = vpop.f32.mrb[0].mxu0
      %v2792 = vadd.f32 0.0, %v2791
      %v2793 = vpop.f32.mrb[0].mxu0
      %2794 = vmatprep.mubr.f32.mxu0 0.0
      %2795 = vmatmul.mubr.f32.gmra.mrb[0].mxu0 %v2618
      %v2796 = vpop.f32.mrb[0].mxu0
      %v2797 = vadd.f32 0.0, %v2796
      %v2798 = vpop.f32.mrb[0].mxu0
      %2799 = vmatprep.mubr.f32.mxu0 0.0
      %2800 = vmatmul.mubr.f32.gmra.mrb[0].mxu0 %v2621
      %v2801 = vpop.f32.mrb[0].mxu0
      %v2802 = vadd.f32 0.0, %v2801
      %v2803 = vpop.f32.mrb[0].mxu0
      %2804 = vmatprep.mubr.f32.mxu0 0.0
      %2805 = vmatmul.mubr.f32.gmra.mrb[0].mxu0 %v2624
      %v2806 = vpop.f32.mrb[0].mxu0
      %v2807 = vadd.f32 0.0, %v2806
      %v2808 = vpop.f32.mrb[0].mxu0
      %2809 = vmatprep.mubr.f32.mxu0 0.0
      %2810 = vmatmul.mubr.f32.gmra.mrb[0].mxu0 %v2627
      %v2811 = vpop.f32.mrb[0].mxu0
      %v2812 = vadd.f32 0.0, %v2811
      %v2813 = vpop.f32.mrb[0].mxu0
      %2814 = vmatprep.mubr.f32.mxu0 0.0
      %2815 = vmatmul.mubr.f32.gmra.mrb[0].mxu0 %v2630
      %v2816 = vpop.f32.mrb[0].mxu0
      %v2817 = vadd.f32 0.0, %v2816
      %v2818 = vpop.f32.mrb[0].mxu0
      %2819 = vmatprep.mubr.f32.mxu0 0.0
      %2820 = vmatmul.mubr.f32.gmra.mrb[0].mxu0 %v2633
      %v2821 = vpop.f32.mrb[0].mxu0
      %v2822 = vadd.f32 0.0, %v2821
      %v2823 = vpop.f32.mrb[0].mxu0
      %2824 = vmatprep.mubr.f32.mxu0 0.0
      %2825 = vmatmul.mubr.f32.gmra.mrb[0].mxu0 %v2636
      %v2826 = vpop.f32.mrb[0].mxu0
      %v2827 = vadd.f32 0.0, %v2826
      %v2828 = vpop.f32.mrb[0].mxu0
      %2829 = vmatprep.mubr.f32.mxu0 0.0
      %2830 = vmatmul.mubr.f32.gmra.mrb[0].mxu0 %v2639
      %v2831 = vpop.f32.mrb[0].mxu0
      %v2832 = vadd.f32 0.0, %v2831
      %v2833 = vpop.f32.mrb[0].mxu0
      %2834 = vmatprep.mubr.f32.mxu0 0.0
      %2835 = vmatmul.mubr.f32.gmra.mrb[0].mxu0 %v2642
      %v2836 = vpop.f32.mrb[0].mxu0
      %v2837 = vadd.f32 0.0, %v2836
      %v2838 = vpop.f32.mrb[0].mxu0
      %2839 = vmatprep.mubr.f32.mxu0 0.0
      %2840 = vmatmul.mubr.f32.gmra.mrb[0].mxu0 %v2645
      %v2841 = vpop.f32.mrb[0].mxu0
      %v2842 = vadd.f32 0.0, %v2841
      %v2843 = vpop.f32.mrb[0].mxu0
      %2844 = vmatprep.mubr.f32.mxu0 0.0
      %2845 = vmatmul.mubr.f32.gmra.mrb[0].mxu0 %v2648
      %v2846 = vpop.f32.mrb[0].mxu0
      %v2847 = vadd.f32 0.0, %v2846
      %v2848 = vpop.f32.mrb[0].mxu0
      %2849 = vmatprep.mubr.f32.mxu0 0.0
      %2850 = vmatmul.mubr.f32.gmra.mrb[0].mxu0 %v2651
      %v2851 = vpop.f32.mrb[0].mxu0
      %v2852 = vadd.f32 0.0, %v2851
      %v2853 = vpop.f32.mrb[0].mxu0
      %2854 = vmatprep.mubr.f32.mxu0 0.0
      %2855 = vmatmul.mubr.f32.gmra.mrb[0].mxu0 %v2654
      %v2856 = vpop.f32.mrb[0].mxu0
      %v2857 = vadd.f32 0.0, %v2856
      %v2858 = vpop.f32.mrb[0].mxu0
      %2859 = vmatprep.mubr.f32.mxu0 0.0
      %2860 = vmatmul.mubr.f32.gmra.mrb[0].mxu0 %v2657
      %v2861 = vpop.f32.mrb[0].mxu0
      %v2862 = vadd.f32 0.0, %v2861
      %v2863 = vpop.f32.mrb[0].mxu0
      %2864 = vmatprep.mubr.f32.mxu0 0.0
      %2865 = vmatmul.mubr.f32.gmra.mrb[0].mxu0 %v2660
      %v2866 = vpop.f32.mrb[0].mxu0
      %v2867 = vadd.f32 0.0, %v2866
      %v2868 = vpop.f32.mrb[0].mxu0
      %2869 = vmatprep.mubr.f32.mxu0 0.0
      %2870 = vmatmul.mubr.f32.gmra.mrb[0].mxu0 %v2663
      %v2871 = vpop.f32.mrb[0].mxu0
      %v2872 = vadd.f32 0.0, %v2871
      %v2873 = vpop.f32.mrb[0].mxu0
      %2874 = vmatprep.mubr.f32.mxu0 0.0
      %2875 = vmatmul.mubr.f32.gmra.mrb[0].mxu0 %v2666
      %v2876 = vpop.f32.mrb[0].mxu0
      %v2877 = vadd.f32 0.0, %v2876
      %v2878 = vpop.f32.mrb[0].mxu0
      %2879 = vmatprep.mubr.f32.mxu0 0.0
      %2880 = vmatmul.mubr.f32.gmra.mrb[0].mxu0 %v2669
      %v2881 = vpop.f32.mrb[0].mxu0
      %v2882 = vadd.f32 0.0, %v2881
      %v2883 = vpop.f32.mrb[0].mxu0
      %2884 = vmatprep.mubr.f32.mxu0 0.0
      %2885 = vmatmul.mubr.f32.gmra.mrb[0].mxu0 %v2672
      %v2886 = vpop.f32.mrb[0].mxu0
      %v2887 = vadd.f32 0.0, %v2886
      %v2888 = vpop.f32.mrb[0].mxu0
      %2889 = vmatprep.mubr.f32.mxu0 0.0
      %2890 = vmatmul.mubr.f32.gmra.mrb[0].mxu0 %v2675
      %v2891 = vpop.f32.mrb[0].mxu0
      %v2892 = vadd.f32 0.0, %v2891
      %v2893 = vpop.f32.mrb[0].mxu0
      %2894 = vmatprep.mubr.f32.mxu0 0.0
      %2895 = vmatmul.mubr.f32.gmra.mrb[0].mxu0 %v2678
      %v2896 = vpop.f32.mrb[0].mxu0
      %v2897 = vadd.f32 0.0, %v2896
      %v2898 = vpop.f32.mrb[0].mxu0
      %2899 = vmatprep.mubr.f32.mxu0 0.0
      %2900 = vmatmul.mubr.f32.gmra.mrb[0].mxu0 %v2681
      %v2901 = vpop.f32.mrb[0].mxu0
      %v2902 = vadd.f32 0.0, %v2901
      %v2903 = vpop.f32.mrb[0].mxu0
      %2904 = vmatprep.mubr.f32.mxu0 0.0
      %2905 = vmatmul.mubr.f32.gmra.mrb[0].mxu0 %v2684
      %v2906 = vpop.f32.mrb[0].mxu0
      %v2907 = vadd.f32 0.0, %v2906
      %v2908 = vpop.f32.mrb[0].mxu0
      %2909 = vmatprep.mubr.f32.mxu0 0.0
      %2910 = vmatmul.mubr.f32.gmra.mrb[0].mxu0 %v2687
      %v2911 = vpop.f32.mrb[0].mxu0
      %v2912 = vadd.f32 0.0, %v2911
      %v2913 = vpop.f32.mrb[0].mxu0
      %2914 = vmatprep.mubr.f32.mxu0 0.0
      %2915 = vmatmul.mubr.f32.gmra.mrb[0].mxu0 %v2690
      %v2916 = vpop.f32.mrb[0].mxu0
      %v2917 = vadd.f32 0.0, %v2916
      %v2918 = vpop.f32.mrb[0].mxu0
      %2919 = vdwg.mxu0
      %v2920 = vadd.f32 %v2562, %v2762
      %v2921 = vadd.f32 %v2563, %v2767
      %v2922 = vadd.f32 %v2564, %v2772
      %v2923 = vadd.f32 %v2565, %v2777
      %v2924 = vadd.f32 %v2566, %v2782
      %v2925 = vadd.f32 %v2567, %v2787
      %v2926 = vadd.f32 %v2568, %v2792
      %v2927 = vadd.f32 %v2569, %v2797
      %v2928 = vadd.f32 %v2570, %v2802
      %v2929 = vadd.f32 %v2571, %v2807
      %v2930 = vadd.f32 %v2572, %v2812
      %v2931 = vadd.f32 %v2573, %v2817
      %v2932 = vadd.f32 %v2574, %v2822
      %v2933 = vadd.f32 %v2575, %v2827
      %v2934 = vadd.f32 %v2576, %v2832
      %v2935 = vadd.f32 %v2577, %v2837
      %v2936 = vadd.f32 %v2578, %v2842
      %v2937 = vadd.f32 %v2579, %v2847
      %v2938 = vadd.f32 %v2580, %v2852
      %v2939 = vadd.f32 %v2581, %v2857
      %v2940 = vadd.f32 %v2582, %v2862
      %v2941 = vadd.f32 %v2583, %v2867
      %v2942 = vadd.f32 %v2584, %v2872
      %v2943 = vadd.f32 %v2585, %v2877
      %v2944 = vadd.f32 %v2586, %v2882
      %v2945 = vadd.f32 %v2587, %v2887
      %v2946 = vadd.f32 %v2588, %v2892
      %v2947 = vadd.f32 %v2589, %v2897
      %v2948 = vadd.f32 %v2590, %v2902
      %v2949 = vadd.f32 %v2591, %v2907
      %v2950 = vadd.f32 %v2592, %v2912
      %v2951 = vadd.f32 %v2593, %v2917
      %2952 = vst [vmem:[#allocation2] sm:$0xff] %v2920
      %2953 = vst [vmem:[#allocation2 + $0x8] sm:$0xff] %v2921
      %2954 = vst [vmem:[#allocation2 + $0x10] sm:$0xff] %v2922
      %2955 = vst [vmem:[#allocation2 + $0x18] sm:$0xff] %v2923
      %2956 = vst [vmem:[#allocation2 + $0x20] sm:$0xff] %v2924
      %2957 = vst [vmem:[#allocation2 + $0x28] sm:$0xff] %v2925
      %2958 = vst [vmem:[#allocation2 + $0x30] sm:$0xff] %v2926
      %2959 = vst [vmem:[#allocation2 + $0x38] sm:$0xff] %v2927
      %2960 = vst [vmem:[#allocation2 + $0x40] sm:$0xff] %v2928
      %2961 = vst [vmem:[#allocation2 + $0x48] sm:$0xff] %v2929
      %2962 = vst [vmem:[#allocation2 + $0x50] sm:$0xff] %v2930
      %2963 = vst [vmem:[#allocation2 + $0x58] sm:$0xff] %v2931
      %2964 = vst [vmem:[#allocation2 + $0x60] sm:$0xff] %v2932
      %2965 = vst [vmem:[#allocation2 + $0x68] sm:$0xff] %v2933
      %2966 = vst [vmem:[#allocation2 + $0x70] sm:$0xff] %v2934
      %2967 = vst [vmem:[#allocation2 + $0x78] sm:$0xff] %v2935
      %2968 = vst [vmem:[#allocation2 + $0x80] sm:$0xff] %v2936
      %2969 = vst [vmem:[#allocation2 + $0x88] sm:$0xff] %v2937
      %2970 = vst [vmem:[#allocation2 + $0x90] sm:$0xff] %v2938
      %2971 = vst [vmem:[#allocation2 + $0x98] sm:$0xff] %v2939
      %2972 = vst [vmem:[#allocation2 + $0xa0] sm:$0xff] %v2940
      %2973 = vst [vmem:[#allocation2 + $0xa8] sm:$0xff] %v2941
      %2974 = vst [vmem:[#allocation2 + $0xb0] sm:$0xff] %v2942
      %2975 = vst [vmem:[#allocation2 + $0xb8] sm:$0xff] %v2943
      %2976 = vst [vmem:[#allocation2 + $0xc0] sm:$0xff] %v2944
      %2977 = vst [vmem:[#allocation2 + $0xc8] sm:$0xff] %v2945
      %2978 = vst [vmem:[#allocation2 + $0xd0] sm:$0xff] %v2946
      %2979 = vst [vmem:[#allocation2 + $0xd8] sm:$0xff] %v2947
      %2980 = vst [vmem:[#allocation2 + $0xe0] sm:$0xff] %v2948
      %2981 = vst [vmem:[#allocation2 + $0xe8] sm:$0xff] %v2949
      %2982 = vst [vmem:[#allocation2 + $0xf0] sm:$0xff] %v2950
      %2983 = vst [vmem:[#allocation2 + $0xf8] sm:$0xff] %v2951
      %s2984 = sadd.s32 %s221, 2
      %s2985 = smul.u32 %s2984, 24
      %s2986 = scalar_lea.vmem %s210, %s2985
      %v2987 = vld [vmem:[%s2986] sm:$0xff]
      %v2988 = vld [vmem:[%s2986 + $0x8] sm:$0xff]
      %v2989 = vld [vmem:[%s2986 + $0x18] sm:$0xff]
      %v2990 = vld [vmem:[%s2986 + $0x20] sm:$0xff]
      %v2991 = vld [vmem:[%s2986 + $0x30] sm:$0xff]
      %v2992 = vld [vmem:[%s2986 + $0x38] sm:$0xff]
      %v2993 = vld [vmem:[%s2986 + $0x48] sm:$0xff]
      %v2994 = vld [vmem:[%s2986 + $0x50] sm:$0xff]
      %v2995 = vld [vmem:[%s2986 + $0x60] sm:$0xff]
      %v2996 = vld [vmem:[%s2986 + $0x68] sm:$0xff]
      %v2997 = vld [vmem:[%s2986 + $0x78] sm:$0xff]
      %v2998 = vld [vmem:[%s2986 + $0x80] sm:$0xff]
      %v2999 = vld [vmem:[%s2986 + $0x90] sm:$0xff]
      %v3000 = vld [vmem:[%s2986 + $0x98] sm:$0xff]
      %v3001 = vld [vmem:[%s2986 + $0xa8] sm:$0xff]
      %v3002 = vld [vmem:[%s2986 + $0xb0] sm:$0xff]
      %v3003 = vld [vmem:[%s2986 + $0xc0] sm:$0xff]
      %v3004 = vld [vmem:[%s2986 + $0xc8] sm:$0xff]
      %v3005 = vld [vmem:[%s2986 + $0xd8] sm:$0xff]
      %v3006 = vld [vmem:[%s2986 + $0xe0] sm:$0xff]
      %v3007 = vld [vmem:[%s2986 + $0xf0] sm:$0xff]
      %v3008 = vld [vmem:[%s2986 + $0xf8] sm:$0xff]
      %v3009 = vld [vmem:[%s2986 + $0x108] sm:$0xff]
      %v3010 = vld [vmem:[%s2986 + $0x110] sm:$0xff]
      %v3011 = vld [vmem:[%s2986 + $0x120] sm:$0xff]
      %v3012 = vld [vmem:[%s2986 + $0x128] sm:$0xff]
      %v3013 = vld [vmem:[%s2986 + $0x138] sm:$0xff]
      %v3014 = vld [vmem:[%s2986 + $0x140] sm:$0xff]
      %v3015 = vld [vmem:[%s2986 + $0x150] sm:$0xff]
      %v3016 = vld [vmem:[%s2986 + $0x158] sm:$0xff]
      %v3017 = vld [vmem:[%s2986 + $0x168] sm:$0xff]
      %v3018 = vld [vmem:[%s2986 + $0x170] sm:$0xff]
      %v3019 = vld [vmem:[#allocation2] sm:$0xff]
      %v3020 = vld [vmem:[#allocation2 + $0x8] sm:$0xff]
      %v3021 = vld [vmem:[#allocation2 + $0x10] sm:$0xff]
      %v3022 = vld [vmem:[#allocation2 + $0x18] sm:$0xff]
      %v3023 = vld [vmem:[#allocation2 + $0x20] sm:$0xff]
      %v3024 = vld [vmem:[#allocation2 + $0x28] sm:$0xff]
      %v3025 = vld [vmem:[#allocation2 + $0x30] sm:$0xff]
      %v3026 = vld [vmem:[#allocation2 + $0x38] sm:$0xff]
      %v3027 = vld [vmem:[#allocation2 + $0x40] sm:$0xff]
      %v3028 = vld [vmem:[#allocation2 + $0x48] sm:$0xff]
      %v3029 = vld [vmem:[#allocation2 + $0x50] sm:$0xff]
      %v3030 = vld [vmem:[#allocation2 + $0x58] sm:$0xff]
      %v3031 = vld [vmem:[#allocation2 + $0x60] sm:$0xff]
      %v3032 = vld [vmem:[#allocation2 + $0x68] sm:$0xff]
      %v3033 = vld [vmem:[#allocation2 + $0x70] sm:$0xff]
      %v3034 = vld [vmem:[#allocation2 + $0x78] sm:$0xff]
      %v3035 = vld [vmem:[#allocation2 + $0x80] sm:$0xff]
      %v3036 = vld [vmem:[#allocation2 + $0x88] sm:$0xff]
      %v3037 = vld [vmem:[#allocation2 + $0x90] sm:$0xff]
      %v3038 = vld [vmem:[#allocation2 + $0x98] sm:$0xff]
      %v3039 = vld [vmem:[#allocation2 + $0xa0] sm:$0xff]
      %v3040 = vld [vmem:[#allocation2 + $0xa8] sm:$0xff]
      %v3041 = vld [vmem:[#allocation2 + $0xb0] sm:$0xff]
      %v3042 = vld [vmem:[#allocation2 + $0xb8] sm:$0xff]
      %v3043 = vld [vmem:[#allocation2 + $0xc0] sm:$0xff]
      %v3044 = vld [vmem:[#allocation2 + $0xc8] sm:$0xff]
      %v3045 = vld [vmem:[#allocation2 + $0xd0] sm:$0xff]
      %v3046 = vld [vmem:[#allocation2 + $0xd8] sm:$0xff]
      %v3047 = vld [vmem:[#allocation2 + $0xe0] sm:$0xff]
      %v3048 = vld [vmem:[#allocation2 + $0xe8] sm:$0xff]
      %v3049 = vld [vmem:[#allocation2 + $0xf0] sm:$0xff]
      %v3050 = vld [vmem:[#allocation2 + $0xf8] sm:$0xff]
      %s3051 = scalar_lea.vmem %s1, 24
      %v3052 = vld [vmem:[%s3051] sm:$0xf]
      %v3054 = vsel %vm321, %v2987, 0
      %v3057 = vsel %vm321, %v2988, 0
      %v3060 = vsel %vm321, %v2989, 0
      %v3063 = vsel %vm321, %v2990, 0
      %v3066 = vsel %vm321, %v2991, 0
      %v3069 = vsel %vm321, %v2992, 0
      %v3072 = vsel %vm321, %v2993, 0
      %v3075 = vsel %vm321, %v2994, 0
      %v3078 = vsel %vm321, %v2995, 0
      %v3081 = vsel %vm321, %v2996, 0
      %v3084 = vsel %vm321, %v2997, 0
      %v3087 = vsel %vm321, %v2998, 0
      %v3090 = vsel %vm321, %v2999, 0
      %v3093 = vsel %vm321, %v3000, 0
      %v3096 = vsel %vm321, %v3001, 0
      %v3099 = vsel %vm321, %v3002, 0
      %v3102 = vsel %vm321, %v3003, 0
      %v3105 = vsel %vm321, %v3004, 0
      %v3108 = vsel %vm321, %v3005, 0
      %v3111 = vsel %vm321, %v3006, 0
      %v3114 = vsel %vm321, %v3007, 0
      %v3117 = vsel %vm321, %v3008, 0
      %v3120 = vsel %vm321, %v3009, 0
      %v3123 = vsel %vm321, %v3010, 0
      %v3126 = vsel %vm321, %v3011, 0
      %v3129 = vsel %vm321, %v3012, 0
      %v3132 = vsel %vm321, %v3013, 0
      %v3135 = vsel %vm321, %v3014, 0
      %v3138 = vsel %vm321, %v3015, 0
      %v3141 = vsel %vm321, %v3016, 0
      %v3144 = vsel %vm321, %v3017, 0
      %v3147 = vsel %vm321, %v3018, 0
      %v3150 = vsel %vm418, %v3052, 0
      %3152 = vmatprep.subr.mxu0 0.0
      %3153 = vmatpush1.msra.mxu0 %v3150
      %3154 = vmatprep.subr.mxu0 0.0
      %3155 = vmatpush1.msra.mxu0 0.0
      %3156 = vmatprep.subr.mxu0 0.0
      %3157 = vmatpush1.msra.mxu0 0.0
      %3158 = vmatprep.subr.mxu0 0.0
      %3159 = vmatpush1.msra.mxu0 0.0
      %3160 = vmatprep.subr.mxu0 0.0
      %3161 = vmatpush1.msra.mxu0 0.0
      %3162 = vmatprep.subr.mxu0 0.0
      %3163 = vmatpush1.msra.mxu0 0.0
      %3164 = vmatprep.subr.mxu0 0.0
      %3165 = vmatpush1.msra.mxu0 0.0
      %3166 = vmatprep.subr.mxu0 0.0
      %3167 = vmatpush1.msra.mxu0 0.0
      %3168 = vmatprep.subr.mxu0 0.0
      %3169 = vmatpush1.msra.mxu0 0.0
      %3170 = vmatprep.subr.mxu0 0.0
      %3171 = vmatpush1.msra.mxu0 0.0
      %3172 = vmatprep.subr.mxu0 0.0
      %3173 = vmatpush1.msra.mxu0 0.0
      %3174 = vmatprep.subr.mxu0 0.0
      %3175 = vmatpush1.msra.mxu0 0.0
      %3176 = vmatprep.subr.mxu0 0.0
      %3177 = vmatpush1.msra.mxu0 0.0
      %3178 = vmatprep.subr.mxu0 0.0
      %3179 = vmatpush1.msra.mxu0 0.0
      %3180 = vmatprep.subr.mxu0 0.0
      %3181 = vmatpush1.msra.mxu0 0.0
      %3182 = vmatprep.subr.mxu0 0.0
      %3183 = vmatpush1.msra.mxu0 0.0
      %3184 = vmatprep.subr.mxu0 0.0
      %3185 = vmatpush1.msra.mxu0 0.0
      %3186 = vmatprep.subr.mxu0 0.0
      %3187 = vmatpush1.msra.mxu0 0.0
      %3188 = vmatprep.subr.mxu0 0.0
      %3189 = vmatpush1.msra.mxu0 0.0
      %3190 = vmatprep.subr.mxu0 0.0
      %3191 = vmatpush1.msra.mxu0 0.0
      %3192 = vmatprep.subr.mxu0 0.0
      %3193 = vmatpush1.msra.mxu0 0.0
      %3194 = vmatprep.subr.mxu0 0.0
      %3195 = vmatpush1.msra.mxu0 0.0
      %3196 = vmatprep.subr.mxu0 0.0
      %3197 = vmatpush1.msra.mxu0 0.0
      %3198 = vmatprep.subr.mxu0 0.0
      %3199 = vmatpush1.msra.mxu0 0.0
      %3200 = vmatprep.subr.mxu0 0.0
      %3201 = vmatpush1.msra.mxu0 0.0
      %3202 = vmatprep.subr.mxu0 0.0
      %3203 = vmatpush1.msra.mxu0 0.0
      %3204 = vmatprep.subr.mxu0 0.0
      %3205 = vmatpush1.msra.mxu0 0.0
      %3206 = vmatprep.subr.mxu0 0.0
      %3207 = vmatpush1.msra.mxu0 0.0
      %3208 = vmatprep.subr.mxu0 0.0
      %3209 = vmatpush1.msra.mxu0 0.0
      %3210 = vmatprep.subr.mxu0 0.0
      %3211 = vmatpush1.msra.mxu0 0.0
      %3212 = vmatprep.subr.mxu0 0.0
      %3213 = vmatpush1.msra.mxu0 0.0
      %3214 = vmatprep.subr.mxu0 0.0
      %3215 = vmatpush1.msra.mxu0 0.0
      %3216 = vmatprep.mubr.f32.mxu0 0.0
      %3217 = vmatmul.mubr.f32.gmra.mrb[0].mxu0 %v3054
      %v3218 = vpop.f32.mrb[0].mxu0
      %v3219 = vadd.f32 0.0, %v3218
      %v3220 = vpop.f32.mrb[0].mxu0
      %3221 = vmatprep.mubr.f32.mxu0 0.0
      %3222 = vmatmul.mubr.f32.gmra.mrb[0].mxu0 %v3057
      %v3223 = vpop.f32.mrb[0].mxu0
      %v3224 = vadd.f32 0.0, %v3223
      %v3225 = vpop.f32.mrb[0].mxu0
      %3226 = vmatprep.mubr.f32.mxu0 0.0
      %3227 = vmatmul.mubr.f32.gmra.mrb[0].mxu0 %v3060
      %v3228 = vpop.f32.mrb[0].mxu0
      %v3229 = vadd.f32 0.0, %v3228
      %v3230 = vpop.f32.mrb[0].mxu0
      %3231 = vmatprep.mubr.f32.mxu0 0.0
      %3232 = vmatmul.mubr.f32.gmra.mrb[0].mxu0 %v3063
      %v3233 = vpop.f32.mrb[0].mxu0
      %v3234 = vadd.f32 0.0, %v3233
      %v3235 = vpop.f32.mrb[0].mxu0
      %3236 = vmatprep.mubr.f32.mxu0 0.0
      %3237 = vmatmul.mubr.f32.gmra.mrb[0].mxu0 %v3066
      %v3238 = vpop.f32.mrb[0].mxu0
      %v3239 = vadd.f32 0.0, %v3238
      %v3240 = vpop.f32.mrb[0].mxu0
      %3241 = vmatprep.mubr.f32.mxu0 0.0
      %3242 = vmatmul.mubr.f32.gmra.mrb[0].mxu0 %v3069
      %v3243 = vpop.f32.mrb[0].mxu0
      %v3244 = vadd.f32 0.0, %v3243
      %v3245 = vpop.f32.mrb[0].mxu0
      %3246 = vmatprep.mubr.f32.mxu0 0.0
      %3247 = vmatmul.mubr.f32.gmra.mrb[0].mxu0 %v3072
      %v3248 = vpop.f32.mrb[0].mxu0
      %v3249 = vadd.f32 0.0, %v3248
      %v3250 = vpop.f32.mrb[0].mxu0
      %3251 = vmatprep.mubr.f32.mxu0 0.0
      %3252 = vmatmul.mubr.f32.gmra.mrb[0].mxu0 %v3075
      %v3253 = vpop.f32.mrb[0].mxu0
      %v3254 = vadd.f32 0.0, %v3253
      %v3255 = vpop.f32.mrb[0].mxu0
      %3256 = vmatprep.mubr.f32.mxu0 0.0
      %3257 = vmatmul.mubr.f32.gmra.mrb[0].mxu0 %v3078
      %v3258 = vpop.f32.mrb[0].mxu0
      %v3259 = vadd.f32 0.0, %v3258
      %v3260 = vpop.f32.mrb[0].mxu0
      %3261 = vmatprep.mubr.f32.mxu0 0.0
      %3262 = vmatmul.mubr.f32.gmra.mrb[0].mxu0 %v3081
      %v3263 = vpop.f32.mrb[0].mxu0
      %v3264 = vadd.f32 0.0, %v3263
      %v3265 = vpop.f32.mrb[0].mxu0
      %3266 = vmatprep.mubr.f32.mxu0 0.0
      %3267 = vmatmul.mubr.f32.gmra.mrb[0].mxu0 %v3084
      %v3268 = vpop.f32.mrb[0].mxu0
      %v3269 = vadd.f32 0.0, %v3268
      %v3270 = vpop.f32.mrb[0].mxu0
      %3271 = vmatprep.mubr.f32.mxu0 0.0
      %3272 = vmatmul.mubr.f32.gmra.mrb[0].mxu0 %v3087
      %v3273 = vpop.f32.mrb[0].mxu0
      %v3274 = vadd.f32 0.0, %v3273
      %v3275 = vpop.f32.mrb[0].mxu0
      %3276 = vmatprep.mubr.f32.mxu0 0.0
      %3277 = vmatmul.mubr.f32.gmra.mrb[0].mxu0 %v3090
      %v3278 = vpop.f32.mrb[0].mxu0
      %v3279 = vadd.f32 0.0, %v3278
      %v3280 = vpop.f32.mrb[0].mxu0
      %3281 = vmatprep.mubr.f32.mxu0 0.0
      %3282 = vmatmul.mubr.f32.gmra.mrb[0].mxu0 %v3093
      %v3283 = vpop.f32.mrb[0].mxu0
      %v3284 = vadd.f32 0.0, %v3283
      %v3285 = vpop.f32.mrb[0].mxu0
      %3286 = vmatprep.mubr.f32.mxu0 0.0
      %3287 = vmatmul.mubr.f32.gmra.mrb[0].mxu0 %v3096
      %v3288 = vpop.f32.mrb[0].mxu0
      %v3289 = vadd.f32 0.0, %v3288
      %v3290 = vpop.f32.mrb[0].mxu0
      %3291 = vmatprep.mubr.f32.mxu0 0.0
      %3292 = vmatmul.mubr.f32.gmra.mrb[0].mxu0 %v3099
      %v3293 = vpop.f32.mrb[0].mxu0
      %v3294 = vadd.f32 0.0, %v3293
      %v3295 = vpop.f32.mrb[0].mxu0
      %3296 = vmatprep.mubr.f32.mxu0 0.0
      %3297 = vmatmul.mubr.f32.gmra.mrb[0].mxu0 %v3102
      %v3298 = vpop.f32.mrb[0].mxu0
      %v3299 = vadd.f32 0.0, %v3298
      %v3300 = vpop.f32.mrb[0].mxu0
      %3301 = vmatprep.mubr.f32.mxu0 0.0
      %3302 = vmatmul.mubr.f32.gmra.mrb[0].mxu0 %v3105
      %v3303 = vpop.f32.mrb[0].mxu0
      %v3304 = vadd.f32 0.0, %v3303
      %v3305 = vpop.f32.mrb[0].mxu0
      %3306 = vmatprep.mubr.f32.mxu0 0.0
      %3307 = vmatmul.mubr.f32.gmra.mrb[0].mxu0 %v3108
      %v3308 = vpop.f32.mrb[0].mxu0
      %v3309 = vadd.f32 0.0, %v3308
      %v3310 = vpop.f32.mrb[0].mxu0
      %3311 = vmatprep.mubr.f32.mxu0 0.0
      %3312 = vmatmul.mubr.f32.gmra.mrb[0].mxu0 %v3111
      %v3313 = vpop.f32.mrb[0].mxu0
      %v3314 = vadd.f32 0.0, %v3313
      %v3315 = vpop.f32.mrb[0].mxu0
      %3316 = vmatprep.mubr.f32.mxu0 0.0
      %3317 = vmatmul.mubr.f32.gmra.mrb[0].mxu0 %v3114
      %v3318 = vpop.f32.mrb[0].mxu0
      %v3319 = vadd.f32 0.0, %v3318
      %v3320 = vpop.f32.mrb[0].mxu0
      %3321 = vmatprep.mubr.f32.mxu0 0.0
      %3322 = vmatmul.mubr.f32.gmra.mrb[0].mxu0 %v3117
      %v3323 = vpop.f32.mrb[0].mxu0
      %v3324 = vadd.f32 0.0, %v3323
      %v3325 = vpop.f32.mrb[0].mxu0
      %3326 = vmatprep.mubr.f32.mxu0 0.0
      %3327 = vmatmul.mubr.f32.gmra.mrb[0].mxu0 %v3120
      %v3328 = vpop.f32.mrb[0].mxu0
      %v3329 = vadd.f32 0.0, %v3328
      %v3330 = vpop.f32.mrb[0].mxu0
      %3331 = vmatprep.mubr.f32.mxu0 0.0
      %3332 = vmatmul.mubr.f32.gmra.mrb[0].mxu0 %v3123
      %v3333 = vpop.f32.mrb[0].mxu0
      %v3334 = vadd.f32 0.0, %v3333
      %v3335 = vpop.f32.mrb[0].mxu0
      %3336 = vmatprep.mubr.f32.mxu0 0.0
      %3337 = vmatmul.mubr.f32.gmra.mrb[0].mxu0 %v3126
      %v3338 = vpop.f32.mrb[0].mxu0
      %v3339 = vadd.f32 0.0, %v3338
      %v3340 = vpop.f32.mrb[0].mxu0
      %3341 = vmatprep.mubr.f32.mxu0 0.0
      %3342 = vmatmul.mubr.f32.gmra.mrb[0].mxu0 %v3129
      %v3343 = vpop.f32.mrb[0].mxu0
      %v3344 = vadd.f32 0.0, %v3343
      %v3345 = vpop.f32.mrb[0].mxu0
      %3346 = vmatprep.mubr.f32.mxu0 0.0
      %3347 = vmatmul.mubr.f32.gmra.mrb[0].mxu0 %v3132
      %v3348 = vpop.f32.mrb[0].mxu0
      %v3349 = vadd.f32 0.0, %v3348
      %v3350 = vpop.f32.mrb[0].mxu0
      %3351 = vmatprep.mubr.f32.mxu0 0.0
      %3352 = vmatmul.mubr.f32.gmra.mrb[0].mxu0 %v3135
      %v3353 = vpop.f32.mrb[0].mxu0
      %v3354 = vadd.f32 0.0, %v3353
      %v3355 = vpop.f32.mrb[0].mxu0
      %3356 = vmatprep.mubr.f32.mxu0 0.0
      %3357 = vmatmul.mubr.f32.gmra.mrb[0].mxu0 %v3138
      %v3358 = vpop.f32.mrb[0].mxu0
      %v3359 = vadd.f32 0.0, %v3358
      %v3360 = vpop.f32.mrb[0].mxu0
      %3361 = vmatprep.mubr.f32.mxu0 0.0
      %3362 = vmatmul.mubr.f32.gmra.mrb[0].mxu0 %v3141
      %v3363 = vpop.f32.mrb[0].mxu0
      %v3364 = vadd.f32 0.0, %v3363
      %v3365 = vpop.f32.mrb[0].mxu0
      %3366 = vmatprep.mubr.f32.mxu0 0.0
      %3367 = vmatmul.mubr.f32.gmra.mrb[0].mxu0 %v3144
      %v3368 = vpop.f32.mrb[0].mxu0
      %v3369 = vadd.f32 0.0, %v3368
      %v3370 = vpop.f32.mrb[0].mxu0
      %3371 = vmatprep.mubr.f32.mxu0 0.0
      %3372 = vmatmul.mubr.f32.gmra.mrb[0].mxu0 %v3147
      %v3373 = vpop.f32.mrb[0].mxu0
      %v3374 = vadd.f32 0.0, %v3373
      %v3375 = vpop.f32.mrb[0].mxu0
      %3376 = vdwg.mxu0
      %v3377 = vadd.f32 %v3019, %v3219
      %v3378 = vadd.f32 %v3020, %v3224
      %v3379 = vadd.f32 %v3021, %v3229
      %v3380 = vadd.f32 %v3022, %v3234
      %v3381 = vadd.f32 %v3023, %v3239
      %v3382 = vadd.f32 %v3024, %v3244
      %v3383 = vadd.f32 %v3025, %v3249
      %v3384 = vadd.f32 %v3026, %v3254
      %v3385 = vadd.f32 %v3027, %v3259
      %v3386 = vadd.f32 %v3028, %v3264
      %v3387 = vadd.f32 %v3029, %v3269
      %v3388 = vadd.f32 %v3030, %v3274
      %v3389 = vadd.f32 %v3031, %v3279
      %v3390 = vadd.f32 %v3032, %v3284
      %v3391 = vadd.f32 %v3033, %v3289
      %v3392 = vadd.f32 %v3034, %v3294
      %v3393 = vadd.f32 %v3035, %v3299
      %v3394 = vadd.f32 %v3036, %v3304
      %v3395 = vadd.f32 %v3037, %v3309
      %v3396 = vadd.f32 %v3038, %v3314
      %v3397 = vadd.f32 %v3039, %v3319
      %v3398 = vadd.f32 %v3040, %v3324
      %v3399 = vadd.f32 %v3041, %v3329
      %v3400 = vadd.f32 %v3042, %v3334
      %v3401 = vadd.f32 %v3043, %v3339
      %v3402 = vadd.f32 %v3044, %v3344
      %v3403 = vadd.f32 %v3045, %v3349
      %v3404 = vadd.f32 %v3046, %v3354
      %v3405 = vadd.f32 %v3047, %v3359
      %v3406 = vadd.f32 %v3048, %v3364
      %v3407 = vadd.f32 %v3049, %v3369
      %v3408 = vadd.f32 %v3050, %v3374
      %3409 = vst [vmem:[#allocation2] sm:$0xff] %v3377
      %3410 = vst [vmem:[#allocation2 + $0x8] sm:$0xff] %v3378
      %3411 = vst [vmem:[#allocation2 + $0x10] sm:$0xff] %v3379
      %3412 = vst [vmem:[#allocation2 + $0x18] sm:$0xff] %v3380
      %3413 = vst [vmem:[#allocation2 + $0x20] sm:$0xff] %v3381
      %3414 = vst [vmem:[#allocation2 + $0x28] sm:$0xff] %v3382
      %3415 = vst [vmem:[#allocation2 + $0x30] sm:$0xff] %v3383
      %3416 = vst [vmem:[#allocation2 + $0x38] sm:$0xff] %v3384
      %3417 = vst [vmem:[#allocation2 + $0x40] sm:$0xff] %v3385
      %3418 = vst [vmem:[#allocation2 + $0x48] sm:$0xff] %v3386
      %3419 = vst [vmem:[#allocation2 + $0x50] sm:$0xff] %v3387
      %3420 = vst [vmem:[#allocation2 + $0x58] sm:$0xff] %v3388
      %3421 = vst [vmem:[#allocation2 + $0x60] sm:$0xff] %v3389
      %3422 = vst [vmem:[#allocation2 + $0x68] sm:$0xff] %v3390
      %3423 = vst [vmem:[#allocation2 + $0x70] sm:$0xff] %v3391
      %3424 = vst [vmem:[#allocation2 + $0x78] sm:$0xff] %v3392
      %3425 = vst [vmem:[#allocation2 + $0x80] sm:$0xff] %v3393
      %3426 = vst [vmem:[#allocation2 + $0x88] sm:$0xff] %v3394
      %3427 = vst [vmem:[#allocation2 + $0x90] sm:$0xff] %v3395
      %3428 = vst [vmem:[#allocation2 + $0x98] sm:$0xff] %v3396
      %3429 = vst [vmem:[#allocation2 + $0xa0] sm:$0xff] %v3397
      %3430 = vst [vmem:[#allocation2 + $0xa8] sm:$0xff] %v3398
      %3431 = vst [vmem:[#allocation2 + $0xb0] sm:$0xff] %v3399
      %3432 = vst [vmem:[#allocation2 + $0xb8] sm:$0xff] %v3400
      %3433 = vst [vmem:[#allocation2 + $0xc0] sm:$0xff] %v3401
      %3434 = vst [vmem:[#allocation2 + $0xc8] sm:$0xff] %v3402
      %3435 = vst [vmem:[#allocation2 + $0xd0] sm:$0xff] %v3403
      %3436 = vst [vmem:[#allocation2 + $0xd8] sm:$0xff] %v3404
      %3437 = vst [vmem:[#allocation2 + $0xe0] sm:$0xff] %v3405
      %3438 = vst [vmem:[#allocation2 + $0xe8] sm:$0xff] %v3406
      %3439 = vst [vmem:[#allocation2 + $0xf0] sm:$0xff] %v3407
      %3440 = vst [vmem:[#allocation2 + $0xf8] sm:$0xff] %v3408
      %v3441 = vld [vmem:[%s2986 + $0x1] sm:$0xff]
      %v3442 = vld [vmem:[%s2986 + $0x9] sm:$0xff]
      %v3443 = vld [vmem:[%s2986 + $0x19] sm:$0xff]
      %v3444 = vld [vmem:[%s2986 + $0x21] sm:$0xff]
      %v3445 = vld [vmem:[%s2986 + $0x31] sm:$0xff]
      %v3446 = vld [vmem:[%s2986 + $0x39] sm:$0xff]
      %v3447 = vld [vmem:[%s2986 + $0x49] sm:$0xff]
      %v3448 = vld [vmem:[%s2986 + $0x51] sm:$0xff]
      %v3449 = vld [vmem:[%s2986 + $0x61] sm:$0xff]
      %v3450 = vld [vmem:[%s2986 + $0x69] sm:$0xff]
      %v3451 = vld [vmem:[%s2986 + $0x79] sm:$0xff]
      %v3452 = vld [vmem:[%s2986 + $0x81] sm:$0xff]
      %v3453 = vld [vmem:[%s2986 + $0x91] sm:$0xff]
      %v3454 = vld [vmem:[%s2986 + $0x99] sm:$0xff]
      %v3455 = vld [vmem:[%s2986 + $0xa9] sm:$0xff]
      %v3456 = vld [vmem:[%s2986 + $0xb1] sm:$0xff]
      %v3457 = vld [vmem:[%s2986 + $0xc1] sm:$0xff]
      %v3458 = vld [vmem:[%s2986 + $0xc9] sm:$0xff]
      %v3459 = vld [vmem:[%s2986 + $0xd9] sm:$0xff]
      %v3460 = vld [vmem:[%s2986 + $0xe1] sm:$0xff]
      %v3461 = vld [vmem:[%s2986 + $0xf1] sm:$0xff]
      %v3462 = vld [vmem:[%s2986 + $0xf9] sm:$0xff]
      %v3463 = vld [vmem:[%s2986 + $0x109] sm:$0xff]
      %v3464 = vld [vmem:[%s2986 + $0x111] sm:$0xff]
      %v3465 = vld [vmem:[%s2986 + $0x121] sm:$0xff]
      %v3466 = vld [vmem:[%s2986 + $0x129] sm:$0xff]
      %v3467 = vld [vmem:[%s2986 + $0x139] sm:$0xff]
      %v3468 = vld [vmem:[%s2986 + $0x141] sm:$0xff]
      %v3469 = vld [vmem:[%s2986 + $0x151] sm:$0xff]
      %v3470 = vld [vmem:[%s2986 + $0x159] sm:$0xff]
      %v3471 = vld [vmem:[%s2986 + $0x169] sm:$0xff]
      %v3472 = vld [vmem:[%s2986 + $0x171] sm:$0xff]
      %v3473 = vld [vmem:[#allocation2] sm:$0xff]
      %v3474 = vld [vmem:[#allocation2 + $0x8] sm:$0xff]
      %v3475 = vld [vmem:[#allocation2 + $0x10] sm:$0xff]
      %v3476 = vld [vmem:[#allocation2 + $0x18] sm:$0xff]
      %v3477 = vld [vmem:[#allocation2 + $0x20] sm:$0xff]
      %v3478 = vld [vmem:[#allocation2 + $0x28] sm:$0xff]
      %v3479 = vld [vmem:[#allocation2 + $0x30] sm:$0xff]
      %v3480 = vld [vmem:[#allocation2 + $0x38] sm:$0xff]
      %v3481 = vld [vmem:[#allocation2 + $0x40] sm:$0xff]
      %v3482 = vld [vmem:[#allocation2 + $0x48] sm:$0xff]
      %v3483 = vld [vmem:[#allocation2 + $0x50] sm:$0xff]
      %v3484 = vld [vmem:[#allocation2 + $0x58] sm:$0xff]
      %v3485 = vld [vmem:[#allocation2 + $0x60] sm:$0xff]
      %v3486 = vld [vmem:[#allocation2 + $0x68] sm:$0xff]
      %v3487 = vld [vmem:[#allocation2 + $0x70] sm:$0xff]
      %v3488 = vld [vmem:[#allocation2 + $0x78] sm:$0xff]
      %v3489 = vld [vmem:[#allocation2 + $0x80] sm:$0xff]
      %v3490 = vld [vmem:[#allocation2 + $0x88] sm:$0xff]
      %v3491 = vld [vmem:[#allocation2 + $0x90] sm:$0xff]
      %v3492 = vld [vmem:[#allocation2 + $0x98] sm:$0xff]
      %v3493 = vld [vmem:[#allocation2 + $0xa0] sm:$0xff]
      %v3494 = vld [vmem:[#allocation2 + $0xa8] sm:$0xff]
      %v3495 = vld [vmem:[#allocation2 + $0xb0] sm:$0xff]
      %v3496 = vld [vmem:[#allocation2 + $0xb8] sm:$0xff]
      %v3497 = vld [vmem:[#allocation2 + $0xc0] sm:$0xff]
      %v3498 = vld [vmem:[#allocation2 + $0xc8] sm:$0xff]
      %v3499 = vld [vmem:[#allocation2 + $0xd0] sm:$0xff]
      %v3500 = vld [vmem:[#allocation2 + $0xd8] sm:$0xff]
      %v3501 = vld [vmem:[#allocation2 + $0xe0] sm:$0xff]
      %v3502 = vld [vmem:[#allocation2 + $0xe8] sm:$0xff]
      %v3503 = vld [vmem:[#allocation2 + $0xf0] sm:$0xff]
      %v3504 = vld [vmem:[#allocation2 + $0xf8] sm:$0xff]
      %s3505 = scalar_lea.vmem %s1, 28
      %v3506 = vld [vmem:[%s3505] sm:$0xf]
      %v3508 = vsel %vm321, %v3441, 0
      %v3511 = vsel %vm321, %v3442, 0
      %v3514 = vsel %vm321, %v3443, 0
      %v3517 = vsel %vm321, %v3444, 0
      %v3520 = vsel %vm321, %v3445, 0
      %v3523 = vsel %vm321, %v3446, 0
      %v3526 = vsel %vm321, %v3447, 0
      %v3529 = vsel %vm321, %v3448, 0
      %v3532 = vsel %vm321, %v3449, 0
      %v3535 = vsel %vm321, %v3450, 0
      %v3538 = vsel %vm321, %v3451, 0
      %v3541 = vsel %vm321, %v3452, 0
      %v3544 = vsel %vm321, %v3453, 0
      %v3547 = vsel %vm321, %v3454, 0
      %v3550 = vsel %vm321, %v3455, 0
      %v3553 = vsel %vm321, %v3456, 0
      %v3556 = vsel %vm321, %v3457, 0
      %v3559 = vsel %vm321, %v3458, 0
      %v3562 = vsel %vm321, %v3459, 0
      %v3565 = vsel %vm321, %v3460, 0
      %v3568 = vsel %vm321, %v3461, 0
      %v3571 = vsel %vm321, %v3462, 0
      %v3574 = vsel %vm321, %v3463, 0
      %v3577 = vsel %vm321, %v3464, 0
      %v3580 = vsel %vm321, %v3465, 0
      %v3583 = vsel %vm321, %v3466, 0
      %v3586 = vsel %vm321, %v3467, 0
      %v3589 = vsel %vm321, %v3468, 0
      %v3592 = vsel %vm321, %v3469, 0
      %v3595 = vsel %vm321, %v3470, 0
      %v3598 = vsel %vm321, %v3471, 0
      %v3601 = vsel %vm321, %v3472, 0
      %v3604 = vsel %vm418, %v3506, 0
      %3606 = vmatprep.subr.mxu0 0.0
      %3607 = vmatpush1.msra.mxu0 %v3604
      %3608 = vmatprep.subr.mxu0 0.0
      %3609 = vmatpush1.msra.mxu0 0.0
      %3610 = vmatprep.subr.mxu0 0.0
      %3611 = vmatpush1.msra.mxu0 0.0
      %3612 = vmatprep.subr.mxu0 0.0
      %3613 = vmatpush1.msra.mxu0 0.0
      %3614 = vmatprep.subr.mxu0 0.0
      %3615 = vmatpush1.msra.mxu0 0.0
      %3616 = vmatprep.subr.mxu0 0.0
      %3617 = vmatpush1.msra.mxu0 0.0
      %3618 = vmatprep.subr.mxu0 0.0
      %3619 = vmatpush1.msra.mxu0 0.0
      %3620 = vmatprep.subr.mxu0 0.0
      %3621 = vmatpush1.msra.mxu0 0.0
      %3622 = vmatprep.subr.mxu0 0.0
      %3623 = vmatpush1.msra.mxu0 0.0
      %3624 = vmatprep.subr.mxu0 0.0
      %3625 = vmatpush1.msra.mxu0 0.0
      %3626 = vmatprep.subr.mxu0 0.0
      %3627 = vmatpush1.msra.mxu0 0.0
      %3628 = vmatprep.subr.mxu0 0.0
      %3629 = vmatpush1.msra.mxu0 0.0
      %3630 = vmatprep.subr.mxu0 0.0
      %3631 = vmatpush1.msra.mxu0 0.0
      %3632 = vmatprep.subr.mxu0 0.0
      %3633 = vmatpush1.msra.mxu0 0.0
      %3634 = vmatprep.subr.mxu0 0.0
      %3635 = vmatpush1.msra.mxu0 0.0
      %3636 = vmatprep.subr.mxu0 0.0
      %3637 = vmatpush1.msra.mxu0 0.0
      %3638 = vmatprep.subr.mxu0 0.0
      %3639 = vmatpush1.msra.mxu0 0.0
      %3640 = vmatprep.subr.mxu0 0.0
      %3641 = vmatpush1.msra.mxu0 0.0
      %3642 = vmatprep.subr.mxu0 0.0
      %3643 = vmatpush1.msra.mxu0 0.0
      %3644 = vmatprep.subr.mxu0 0.0
      %3645 = vmatpush1.msra.mxu0 0.0
      %3646 = vmatprep.subr.mxu0 0.0
      %3647 = vmatpush1.msra.mxu0 0.0
      %3648 = vmatprep.subr.mxu0 0.0
      %3649 = vmatpush1.msra.mxu0 0.0
      %3650 = vmatprep.subr.mxu0 0.0
      %3651 = vmatpush1.msra.mxu0 0.0
      %3652 = vmatprep.subr.mxu0 0.0
      %3653 = vmatpush1.msra.mxu0 0.0
      %3654 = vmatprep.subr.mxu0 0.0
      %3655 = vmatpush1.msra.mxu0 0.0
      %3656 = vmatprep.subr.mxu0 0.0
      %3657 = vmatpush1.msra.mxu0 0.0
      %3658 = vmatprep.subr.mxu0 0.0
      %3659 = vmatpush1.msra.mxu0 0.0
      %3660 = vmatprep.subr.mxu0 0.0
      %3661 = vmatpush1.msra.mxu0 0.0
      %3662 = vmatprep.subr.mxu0 0.0
      %3663 = vmatpush1.msra.mxu0 0.0
      %3664 = vmatprep.subr.mxu0 0.0
      %3665 = vmatpush1.msra.mxu0 0.0
      %3666 = vmatprep.subr.mxu0 0.0
      %3667 = vmatpush1.msra.mxu0 0.0
      %3668 = vmatprep.subr.mxu0 0.0
      %3669 = vmatpush1.msra.mxu0 0.0
      %3670 = vmatprep.mubr.f32.mxu0 0.0
      %3671 = vmatmul.mubr.f32.gmra.mrb[0].mxu0 %v3508
      %v3672 = vpop.f32.mrb[0].mxu0
      %v3673 = vadd.f32 0.0, %v3672
      %v3674 = vpop.f32.mrb[0].mxu0
      %3675 = vmatprep.mubr.f32.mxu0 0.0
      %3676 = vmatmul.mubr.f32.gmra.mrb[0].mxu0 %v3511
      %v3677 = vpop.f32.mrb[0].mxu0
      %v3678 = vadd.f32 0.0, %v3677
      %v3679 = vpop.f32.mrb[0].mxu0
      %3680 = vmatprep.mubr.f32.mxu0 0.0
      %3681 = vmatmul.mubr.f32.gmra.mrb[0].mxu0 %v3514
      %v3682 = vpop.f32.mrb[0].mxu0
      %v3683 = vadd.f32 0.0, %v3682
      %v3684 = vpop.f32.mrb[0].mxu0
      %3685 = vmatprep.mubr.f32.mxu0 0.0
      %3686 = vmatmul.mubr.f32.gmra.mrb[0].mxu0 %v3517
      %v3687 = vpop.f32.mrb[0].mxu0
      %v3688 = vadd.f32 0.0, %v3687
      %v3689 = vpop.f32.mrb[0].mxu0
      %3690 = vmatprep.mubr.f32.mxu0 0.0
      %3691 = vmatmul.mubr.f32.gmra.mrb[0].mxu0 %v3520
      %v3692 = vpop.f32.mrb[0].mxu0
      %v3693 = vadd.f32 0.0, %v3692
      %v3694 = vpop.f32.mrb[0].mxu0
      %3695 = vmatprep.mubr.f32.mxu0 0.0
      %3696 = vmatmul.mubr.f32.gmra.mrb[0].mxu0 %v3523
      %v3697 = vpop.f32.mrb[0].mxu0
      %v3698 = vadd.f32 0.0, %v3697
      %v3699 = vpop.f32.mrb[0].mxu0
      %3700 = vmatprep.mubr.f32.mxu0 0.0
      %3701 = vmatmul.mubr.f32.gmra.mrb[0].mxu0 %v3526
      %v3702 = vpop.f32.mrb[0].mxu0
      %v3703 = vadd.f32 0.0, %v3702
      %v3704 = vpop.f32.mrb[0].mxu0
      %3705 = vmatprep.mubr.f32.mxu0 0.0
      %3706 = vmatmul.mubr.f32.gmra.mrb[0].mxu0 %v3529
      %v3707 = vpop.f32.mrb[0].mxu0
      %v3708 = vadd.f32 0.0, %v3707
      %v3709 = vpop.f32.mrb[0].mxu0
      %3710 = vmatprep.mubr.f32.mxu0 0.0
      %3711 = vmatmul.mubr.f32.gmra.mrb[0].mxu0 %v3532
      %v3712 = vpop.f32.mrb[0].mxu0
      %v3713 = vadd.f32 0.0, %v3712
      %v3714 = vpop.f32.mrb[0].mxu0
      %3715 = vmatprep.mubr.f32.mxu0 0.0
      %3716 = vmatmul.mubr.f32.gmra.mrb[0].mxu0 %v3535
      %v3717 = vpop.f32.mrb[0].mxu0
      %v3718 = vadd.f32 0.0, %v3717
      %v3719 = vpop.f32.mrb[0].mxu0
      %3720 = vmatprep.mubr.f32.mxu0 0.0
      %3721 = vmatmul.mubr.f32.gmra.mrb[0].mxu0 %v3538
      %v3722 = vpop.f32.mrb[0].mxu0
      %v3723 = vadd.f32 0.0, %v3722
      %v3724 = vpop.f32.mrb[0].mxu0
      %3725 = vmatprep.mubr.f32.mxu0 0.0
      %3726 = vmatmul.mubr.f32.gmra.mrb[0].mxu0 %v3541
      %v3727 = vpop.f32.mrb[0].mxu0
      %v3728 = vadd.f32 0.0, %v3727
      %v3729 = vpop.f32.mrb[0].mxu0
      %3730 = vmatprep.mubr.f32.mxu0 0.0
      %3731 = vmatmul.mubr.f32.gmra.mrb[0].mxu0 %v3544
      %v3732 = vpop.f32.mrb[0].mxu0
      %v3733 = vadd.f32 0.0, %v3732
      %v3734 = vpop.f32.mrb[0].mxu0
      %3735 = vmatprep.mubr.f32.mxu0 0.0
      %3736 = vmatmul.mubr.f32.gmra.mrb[0].mxu0 %v3547
      %v3737 = vpop.f32.mrb[0].mxu0
      %v3738 = vadd.f32 0.0, %v3737
      %v3739 = vpop.f32.mrb[0].mxu0
      %3740 = vmatprep.mubr.f32.mxu0 0.0
      %3741 = vmatmul.mubr.f32.gmra.mrb[0].mxu0 %v3550
      %v3742 = vpop.f32.mrb[0].mxu0
      %v3743 = vadd.f32 0.0, %v3742
      %v3744 = vpop.f32.mrb[0].mxu0
      %3745 = vmatprep.mubr.f32.mxu0 0.0
      %3746 = vmatmul.mubr.f32.gmra.mrb[0].mxu0 %v3553
      %v3747 = vpop.f32.mrb[0].mxu0
      %v3748 = vadd.f32 0.0, %v3747
      %v3749 = vpop.f32.mrb[0].mxu0
      %3750 = vmatprep.mubr.f32.mxu0 0.0
      %3751 = vmatmul.mubr.f32.gmra.mrb[0].mxu0 %v3556
      %v3752 = vpop.f32.mrb[0].mxu0
      %v3753 = vadd.f32 0.0, %v3752
      %v3754 = vpop.f32.mrb[0].mxu0
      %3755 = vmatprep.mubr.f32.mxu0 0.0
      %3756 = vmatmul.mubr.f32.gmra.mrb[0].mxu0 %v3559
      %v3757 = vpop.f32.mrb[0].mxu0
      %v3758 = vadd.f32 0.0, %v3757
      %v3759 = vpop.f32.mrb[0].mxu0
      %3760 = vmatprep.mubr.f32.mxu0 0.0
      %3761 = vmatmul.mubr.f32.gmra.mrb[0].mxu0 %v3562
      %v3762 = vpop.f32.mrb[0].mxu0
      %v3763 = vadd.f32 0.0, %v3762
      %v3764 = vpop.f32.mrb[0].mxu0
      %3765 = vmatprep.mubr.f32.mxu0 0.0
      %3766 = vmatmul.mubr.f32.gmra.mrb[0].mxu0 %v3565
      %v3767 = vpop.f32.mrb[0].mxu0
      %v3768 = vadd.f32 0.0, %v3767
      %v3769 = vpop.f32.mrb[0].mxu0
      %3770 = vmatprep.mubr.f32.mxu0 0.0
      %3771 = vmatmul.mubr.f32.gmra.mrb[0].mxu0 %v3568
      %v3772 = vpop.f32.mrb[0].mxu0
      %v3773 = vadd.f32 0.0, %v3772
      %v3774 = vpop.f32.mrb[0].mxu0
      %3775 = vmatprep.mubr.f32.mxu0 0.0
      %3776 = vmatmul.mubr.f32.gmra.mrb[0].mxu0 %v3571
      %v3777 = vpop.f32.mrb[0].mxu0
      %v3778 = vadd.f32 0.0, %v3777
      %v3779 = vpop.f32.mrb[0].mxu0
      %3780 = vmatprep.mubr.f32.mxu0 0.0
      %3781 = vmatmul.mubr.f32.gmra.mrb[0].mxu0 %v3574
      %v3782 = vpop.f32.mrb[0].mxu0
      %v3783 = vadd.f32 0.0, %v3782
      %v3784 = vpop.f32.mrb[0].mxu0
      %3785 = vmatprep.mubr.f32.mxu0 0.0
      %3786 = vmatmul.mubr.f32.gmra.mrb[0].mxu0 %v3577
      %v3787 = vpop.f32.mrb[0].mxu0
      %v3788 = vadd.f32 0.0, %v3787
      %v3789 = vpop.f32.mrb[0].mxu0
      %3790 = vmatprep.mubr.f32.mxu0 0.0
      %3791 = vmatmul.mubr.f32.gmra.mrb[0].mxu0 %v3580
      %v3792 = vpop.f32.mrb[0].mxu0
      %v3793 = vadd.f32 0.0, %v3792
      %v3794 = vpop.f32.mrb[0].mxu0
      %3795 = vmatprep.mubr.f32.mxu0 0.0
      %3796 = vmatmul.mubr.f32.gmra.mrb[0].mxu0 %v3583
      %v3797 = vpop.f32.mrb[0].mxu0
      %v3798 = vadd.f32 0.0, %v3797
      %v3799 = vpop.f32.mrb[0].mxu0
      %3800 = vmatprep.mubr.f32.mxu0 0.0
      %3801 = vmatmul.mubr.f32.gmra.mrb[0].mxu0 %v3586
      %v3802 = vpop.f32.mrb[0].mxu0
      %v3803 = vadd.f32 0.0, %v3802
      %v3804 = vpop.f32.mrb[0].mxu0
      %3805 = vmatprep.mubr.f32.mxu0 0.0
      %3806 = vmatmul.mubr.f32.gmra.mrb[0].mxu0 %v3589
      %v3807 = vpop.f32.mrb[0].mxu0
      %v3808 = vadd.f32 0.0, %v3807
      %v3809 = vpop.f32.mrb[0].mxu0
      %3810 = vmatprep.mubr.f32.mxu0 0.0
      %3811 = vmatmul.mubr.f32.gmra.mrb[0].mxu0 %v3592
      %v3812 = vpop.f32.mrb[0].mxu0
      %v3813 = vadd.f32 0.0, %v3812
      %v3814 = vpop.f32.mrb[0].mxu0
      %3815 = vmatprep.mubr.f32.mxu0 0.0
      %3816 = vmatmul.mubr.f32.gmra.mrb[0].mxu0 %v3595
      %v3817 = vpop.f32.mrb[0].mxu0
      %v3818 = vadd.f32 0.0, %v3817
      %v3819 = vpop.f32.mrb[0].mxu0
      %3820 = vmatprep.mubr.f32.mxu0 0.0
      %3821 = vmatmul.mubr.f32.gmra.mrb[0].mxu0 %v3598
      %v3822 = vpop.f32.mrb[0].mxu0
      %v3823 = vadd.f32 0.0, %v3822
      %v3824 = vpop.f32.mrb[0].mxu0
      %3825 = vmatprep.mubr.f32.mxu0 0.0
      %3826 = vmatmul.mubr.f32.gmra.mrb[0].mxu0 %v3601
      %v3827 = vpop.f32.mrb[0].mxu0
      %v3828 = vadd.f32 0.0, %v3827
      %v3829 = vpop.f32.mrb[0].mxu0
      %3830 = vdwg.mxu0
      %v3831 = vadd.f32 %v3473, %v3673
      %v3832 = vadd.f32 %v3474, %v3678
      %v3833 = vadd.f32 %v3475, %v3683
      %v3834 = vadd.f32 %v3476, %v3688
      %v3835 = vadd.f32 %v3477, %v3693
      %v3836 = vadd.f32 %v3478, %v3698
      %v3837 = vadd.f32 %v3479, %v3703
      %v3838 = vadd.f32 %v3480, %v3708
      %v3839 = vadd.f32 %v3481, %v3713
      %v3840 = vadd.f32 %v3482, %v3718
      %v3841 = vadd.f32 %v3483, %v3723
      %v3842 = vadd.f32 %v3484, %v3728
      %v3843 = vadd.f32 %v3485, %v3733
      %v3844 = vadd.f32 %v3486, %v3738
      %v3845 = vadd.f32 %v3487, %v3743
      %v3846 = vadd.f32 %v3488, %v3748
      %v3847 = vadd.f32 %v3489, %v3753
      %v3848 = vadd.f32 %v3490, %v3758
      %v3849 = vadd.f32 %v3491, %v3763
      %v3850 = vadd.f32 %v3492, %v3768
      %v3851 = vadd.f32 %v3493, %v3773
      %v3852 = vadd.f32 %v3494, %v3778
      %v3853 = vadd.f32 %v3495, %v3783
      %v3854 = vadd.f32 %v3496, %v3788
      %v3855 = vadd.f32 %v3497, %v3793
      %v3856 = vadd.f32 %v3498, %v3798
      %v3857 = vadd.f32 %v3499, %v3803
      %v3858 = vadd.f32 %v3500, %v3808
      %v3859 = vadd.f32 %v3501, %v3813
      %v3860 = vadd.f32 %v3502, %v3818
      %v3861 = vadd.f32 %v3503, %v3823
      %v3862 = vadd.f32 %v3504, %v3828
      %3863 = vst [vmem:[#allocation2] sm:$0xff] %v3831
      %3864 = vst [vmem:[#allocation2 + $0x8] sm:$0xff] %v3832
      %3865 = vst [vmem:[#allocation2 + $0x10] sm:$0xff] %v3833
      %3866 = vst [vmem:[#allocation2 + $0x18] sm:$0xff] %v3834
      %3867 = vst [vmem:[#allocation2 + $0x20] sm:$0xff] %v3835
      %3868 = vst [vmem:[#allocation2 + $0x28] sm:$0xff] %v3836
      %3869 = vst [vmem:[#allocation2 + $0x30] sm:$0xff] %v3837
      %3870 = vst [vmem:[#allocation2 + $0x38] sm:$0xff] %v3838
      %3871 = vst [vmem:[#allocation2 + $0x40] sm:$0xff] %v3839
      %3872 = vst [vmem:[#allocation2 + $0x48] sm:$0xff] %v3840
      %3873 = vst [vmem:[#allocation2 + $0x50] sm:$0xff] %v3841
      %3874 = vst [vmem:[#allocation2 + $0x58] sm:$0xff] %v3842
      %3875 = vst [vmem:[#allocation2 + $0x60] sm:$0xff] %v3843
      %3876 = vst [vmem:[#allocation2 + $0x68] sm:$0xff] %v3844
      %3877 = vst [vmem:[#allocation2 + $0x70] sm:$0xff] %v3845
      %3878 = vst [vmem:[#allocation2 + $0x78] sm:$0xff] %v3846
      %3879 = vst [vmem:[#allocation2 + $0x80] sm:$0xff] %v3847
      %3880 = vst [vmem:[#allocation2 + $0x88] sm:$0xff] %v3848
      %3881 = vst [vmem:[#allocation2 + $0x90] sm:$0xff] %v3849
      %3882 = vst [vmem:[#allocation2 + $0x98] sm:$0xff] %v3850
      %3883 = vst [vmem:[#allocation2 + $0xa0] sm:$0xff] %v3851
      %3884 = vst [vmem:[#allocation2 + $0xa8] sm:$0xff] %v3852
      %3885 = vst [vmem:[#allocation2 + $0xb0] sm:$0xff] %v3853
      %3886 = vst [vmem:[#allocation2 + $0xb8] sm:$0xff] %v3854
      %3887 = vst [vmem:[#allocation2 + $0xc0] sm:$0xff] %v3855
      %3888 = vst [vmem:[#allocation2 + $0xc8] sm:$0xff] %v3856
      %3889 = vst [vmem:[#allocation2 + $0xd0] sm:$0xff] %v3857
      %3890 = vst [vmem:[#allocation2 + $0xd8] sm:$0xff] %v3858
      %3891 = vst [vmem:[#allocation2 + $0xe0] sm:$0xff] %v3859
      %3892 = vst [vmem:[#allocation2 + $0xe8] sm:$0xff] %v3860
      %3893 = vst [vmem:[#allocation2 + $0xf0] sm:$0xff] %v3861
      %3894 = vst [vmem:[#allocation2 + $0xf8] sm:$0xff] %v3862
      %v3895 = vld [vmem:[%s2986 + $0x2] sm:$0xff]
      %v3896 = vld [vmem:[%s2986 + $0xa] sm:$0xff]
      %v3897 = vld [vmem:[%s2986 + $0x1a] sm:$0xff]
      %v3898 = vld [vmem:[%s2986 + $0x22] sm:$0xff]
      %v3899 = vld [vmem:[%s2986 + $0x32] sm:$0xff]
      %v3900 = vld [vmem:[%s2986 + $0x3a] sm:$0xff]
      %v3901 = vld [vmem:[%s2986 + $0x4a] sm:$0xff]
      %v3902 = vld [vmem:[%s2986 + $0x52] sm:$0xff]
      %v3903 = vld [vmem:[%s2986 + $0x62] sm:$0xff]
      %v3904 = vld [vmem:[%s2986 + $0x6a] sm:$0xff]
      %v3905 = vld [vmem:[%s2986 + $0x7a] sm:$0xff]
      %v3906 = vld [vmem:[%s2986 + $0x82] sm:$0xff]
      %v3907 = vld [vmem:[%s2986 + $0x92] sm:$0xff]
      %v3908 = vld [vmem:[%s2986 + $0x9a] sm:$0xff]
      %v3909 = vld [vmem:[%s2986 + $0xaa] sm:$0xff]
      %v3910 = vld [vmem:[%s2986 + $0xb2] sm:$0xff]
      %v3911 = vld [vmem:[%s2986 + $0xc2] sm:$0xff]
      %v3912 = vld [vmem:[%s2986 + $0xca] sm:$0xff]
      %v3913 = vld [vmem:[%s2986 + $0xda] sm:$0xff]
      %v3914 = vld [vmem:[%s2986 + $0xe2] sm:$0xff]
      %v3915 = vld [vmem:[%s2986 + $0xf2] sm:$0xff]
      %v3916 = vld [vmem:[%s2986 + $0xfa] sm:$0xff]
      %v3917 = vld [vmem:[%s2986 + $0x10a] sm:$0xff]
      %v3918 = vld [vmem:[%s2986 + $0x112] sm:$0xff]
      %v3919 = vld [vmem:[%s2986 + $0x122] sm:$0xff]
      %v3920 = vld [vmem:[%s2986 + $0x12a] sm:$0xff]
      %v3921 = vld [vmem:[%s2986 + $0x13a] sm:$0xff]
      %v3922 = vld [vmem:[%s2986 + $0x142] sm:$0xff]
      %v3923 = vld [vmem:[%s2986 + $0x152] sm:$0xff]
      %v3924 = vld [vmem:[%s2986 + $0x15a] sm:$0xff]
      %v3925 = vld [vmem:[%s2986 + $0x16a] sm:$0xff]
      %v3926 = vld [vmem:[%s2986 + $0x172] sm:$0xff]
      %v3927 = vld [vmem:[#allocation2] sm:$0xff]
      %v3928 = vld [vmem:[#allocation2 + $0x8] sm:$0xff]
      %v3929 = vld [vmem:[#allocation2 + $0x10] sm:$0xff]
      %v3930 = vld [vmem:[#allocation2 + $0x18] sm:$0xff]
      %v3931 = vld [vmem:[#allocation2 + $0x20] sm:$0xff]
      %v3932 = vld [vmem:[#allocation2 + $0x28] sm:$0xff]
      %v3933 = vld [vmem:[#allocation2 + $0x30] sm:$0xff]
      %v3934 = vld [vmem:[#allocation2 + $0x38] sm:$0xff]
      %v3935 = vld [vmem:[#allocation2 + $0x40] sm:$0xff]
      %v3936 = vld [vmem:[#allocation2 + $0x48] sm:$0xff]
      %v3937 = vld [vmem:[#allocation2 + $0x50] sm:$0xff]
      %v3938 = vld [vmem:[#allocation2 + $0x58] sm:$0xff]
      %v3939 = vld [vmem:[#allocation2 + $0x60] sm:$0xff]
      %v3940 = vld [vmem:[#allocation2 + $0x68] sm:$0xff]
      %v3941 = vld [vmem:[#allocation2 + $0x70] sm:$0xff]
      %v3942 = vld [vmem:[#allocation2 + $0x78] sm:$0xff]
      %v3943 = vld [vmem:[#allocation2 + $0x80] sm:$0xff]
      %v3944 = vld [vmem:[#allocation2 + $0x88] sm:$0xff]
      %v3945 = vld [vmem:[#allocation2 + $0x90] sm:$0xff]
      %v3946 = vld [vmem:[#allocation2 + $0x98] sm:$0xff]
      %v3947 = vld [vmem:[#allocation2 + $0xa0] sm:$0xff]
      %v3948 = vld [vmem:[#allocation2 + $0xa8] sm:$0xff]
      %v3949 = vld [vmem:[#allocation2 + $0xb0] sm:$0xff]
      %v3950 = vld [vmem:[#allocation2 + $0xb8] sm:$0xff]
      %v3951 = vld [vmem:[#allocation2 + $0xc0] sm:$0xff]
      %v3952 = vld [vmem:[#allocation2 + $0xc8] sm:$0xff]
      %v3953 = vld [vmem:[#allocation2 + $0xd0] sm:$0xff]
      %v3954 = vld [vmem:[#allocation2 + $0xd8] sm:$0xff]
      %v3955 = vld [vmem:[#allocation2 + $0xe0] sm:$0xff]
      %v3956 = vld [vmem:[#allocation2 + $0xe8] sm:$0xff]
      %v3957 = vld [vmem:[#allocation2 + $0xf0] sm:$0xff]
      %v3958 = vld [vmem:[#allocation2 + $0xf8] sm:$0xff]
      %s3959 = scalar_lea.vmem %s1, 32
      %v3960 = vld [vmem:[%s3959] sm:$0xf]
      %v3962 = vsel %vm321, %v3895, 0
      %v3965 = vsel %vm321, %v3896, 0
      %v3968 = vsel %vm321, %v3897, 0
      %v3971 = vsel %vm321, %v3898, 0
      %v3974 = vsel %vm321, %v3899, 0
      %v3977 = vsel %vm321, %v3900, 0
      %v3980 = vsel %vm321, %v3901, 0
      %v3983 = vsel %vm321, %v3902, 0
      %v3986 = vsel %vm321, %v3903, 0
      %v3989 = vsel %vm321, %v3904, 0
      %v3992 = vsel %vm321, %v3905, 0
      %v3995 = vsel %vm321, %v3906, 0
      %v3998 = vsel %vm321, %v3907, 0
      %v4001 = vsel %vm321, %v3908, 0
      %v4004 = vsel %vm321, %v3909, 0
      %v4007 = vsel %vm321, %v3910, 0
      %v4010 = vsel %vm321, %v3911, 0
      %v4013 = vsel %vm321, %v3912, 0
      %v4016 = vsel %vm321, %v3913, 0
      %v4019 = vsel %vm321, %v3914, 0
      %v4022 = vsel %vm321, %v3915, 0
      %v4025 = vsel %vm321, %v3916, 0
      %v4028 = vsel %vm321, %v3917, 0
      %v4031 = vsel %vm321, %v3918, 0
      %v4034 = vsel %vm321, %v3919, 0
      %v4037 = vsel %vm321, %v3920, 0
      %v4040 = vsel %vm321, %v3921, 0
      %v4043 = vsel %vm321, %v3922, 0
      %v4046 = vsel %vm321, %v3923, 0
      %v4049 = vsel %vm321, %v3924, 0
      %v4052 = vsel %vm321, %v3925, 0
      %v4055 = vsel %vm321, %v3926, 0
      %v4058 = vsel %vm418, %v3960, 0
      %4060 = vmatprep.subr.mxu0 0.0
      %4061 = vmatpush1.msra.mxu0 %v4058
      %4062 = vmatprep.subr.mxu0 0.0
      %4063 = vmatpush1.msra.mxu0 0.0
      %4064 = vmatprep.subr.mxu0 0.0
      %4065 = vmatpush1.msra.mxu0 0.0
      %4066 = vmatprep.subr.mxu0 0.0
      %4067 = vmatpush1.msra.mxu0 0.0
      %4068 = vmatprep.subr.mxu0 0.0
      %4069 = vmatpush1.msra.mxu0 0.0
      %4070 = vmatprep.subr.mxu0 0.0
      %4071 = vmatpush1.msra.mxu0 0.0
      %4072 = vmatprep.subr.mxu0 0.0
      %4073 = vmatpush1.msra.mxu0 0.0
      %4074 = vmatprep.subr.mxu0 0.0
      %4075 = vmatpush1.msra.mxu0 0.0
      %4076 = vmatprep.subr.mxu0 0.0
      %4077 = vmatpush1.msra.mxu0 0.0
      %4078 = vmatprep.subr.mxu0 0.0
      %4079 = vmatpush1.msra.mxu0 0.0
      %4080 = vmatprep.subr.mxu0 0.0
      %4081 = vmatpush1.msra.mxu0 0.0
      %4082 = vmatprep.subr.mxu0 0.0
      %4083 = vmatpush1.msra.mxu0 0.0
      %4084 = vmatprep.subr.mxu0 0.0
      %4085 = vmatpush1.msra.mxu0 0.0
      %4086 = vmatprep.subr.mxu0 0.0
      %4087 = vmatpush1.msra.mxu0 0.0
      %4088 = vmatprep.subr.mxu0 0.0
      %4089 = vmatpush1.msra.mxu0 0.0
      %4090 = vmatprep.subr.mxu0 0.0
      %4091 = vmatpush1.msra.mxu0 0.0
      %4092 = vmatprep.subr.mxu0 0.0
      %4093 = vmatpush1.msra.mxu0 0.0
      %4094 = vmatprep.subr.mxu0 0.0
      %4095 = vmatpush1.msra.mxu0 0.0
      %4096 = vmatprep.subr.mxu0 0.0
      %4097 = vmatpush1.msra.mxu0 0.0
      %4098 = vmatprep.subr.mxu0 0.0
      %4099 = vmatpush1.msra.mxu0 0.0
      %4100 = vmatprep.subr.mxu0 0.0
      %4101 = vmatpush1.msra.mxu0 0.0
      %4102 = vmatprep.subr.mxu0 0.0
      %4103 = vmatpush1.msra.mxu0 0.0
      %4104 = vmatprep.subr.mxu0 0.0
      %4105 = vmatpush1.msra.mxu0 0.0
      %4106 = vmatprep.subr.mxu0 0.0
      %4107 = vmatpush1.msra.mxu0 0.0
      %4108 = vmatprep.subr.mxu0 0.0
      %4109 = vmatpush1.msra.mxu0 0.0
      %4110 = vmatprep.subr.mxu0 0.0
      %4111 = vmatpush1.msra.mxu0 0.0
      %4112 = vmatprep.subr.mxu0 0.0
      %4113 = vmatpush1.msra.mxu0 0.0
      %4114 = vmatprep.subr.mxu0 0.0
      %4115 = vmatpush1.msra.mxu0 0.0
      %4116 = vmatprep.subr.mxu0 0.0
      %4117 = vmatpush1.msra.mxu0 0.0
      %4118 = vmatprep.subr.mxu0 0.0
      %4119 = vmatpush1.msra.mxu0 0.0
      %4120 = vmatprep.subr.mxu0 0.0
      %4121 = vmatpush1.msra.mxu0 0.0
      %4122 = vmatprep.subr.mxu0 0.0
      %4123 = vmatpush1.msra.mxu0 0.0
      %4124 = vmatprep.mubr.f32.mxu0 0.0
      %4125 = vmatmul.mubr.f32.gmra.mrb[0].mxu0 %v3962
      %v4126 = vpop.f32.mrb[0].mxu0
      %v4127 = vadd.f32 0.0, %v4126
      %v4128 = vpop.f32.mrb[0].mxu0
      %4129 = vmatprep.mubr.f32.mxu0 0.0
      %4130 = vmatmul.mubr.f32.gmra.mrb[0].mxu0 %v3965
      %v4131 = vpop.f32.mrb[0].mxu0
      %v4132 = vadd.f32 0.0, %v4131
      %v4133 = vpop.f32.mrb[0].mxu0
      %4134 = vmatprep.mubr.f32.mxu0 0.0
      %4135 = vmatmul.mubr.f32.gmra.mrb[0].mxu0 %v3968
      %v4136 = vpop.f32.mrb[0].mxu0
      %v4137 = vadd.f32 0.0, %v4136
      %v4138 = vpop.f32.mrb[0].mxu0
      %4139 = vmatprep.mubr.f32.mxu0 0.0
      %4140 = vmatmul.mubr.f32.gmra.mrb[0].mxu0 %v3971
      %v4141 = vpop.f32.mrb[0].mxu0
      %v4142 = vadd.f32 0.0, %v4141
      %v4143 = vpop.f32.mrb[0].mxu0
      %4144 = vmatprep.mubr.f32.mxu0 0.0
      %4145 = vmatmul.mubr.f32.gmra.mrb[0].mxu0 %v3974
      %v4146 = vpop.f32.mrb[0].mxu0
      %v4147 = vadd.f32 0.0, %v4146
      %v4148 = vpop.f32.mrb[0].mxu0
      %4149 = vmatprep.mubr.f32.mxu0 0.0
      %4150 = vmatmul.mubr.f32.gmra.mrb[0].mxu0 %v3977
      %v4151 = vpop.f32.mrb[0].mxu0
      %v4152 = vadd.f32 0.0, %v4151
      %v4153 = vpop.f32.mrb[0].mxu0
      %4154 = vmatprep.mubr.f32.mxu0 0.0
      %4155 = vmatmul.mubr.f32.gmra.mrb[0].mxu0 %v3980
      %v4156 = vpop.f32.mrb[0].mxu0
      %v4157 = vadd.f32 0.0, %v4156
      %v4158 = vpop.f32.mrb[0].mxu0
      %4159 = vmatprep.mubr.f32.mxu0 0.0
      %4160 = vmatmul.mubr.f32.gmra.mrb[0].mxu0 %v3983
      %v4161 = vpop.f32.mrb[0].mxu0
      %v4162 = vadd.f32 0.0, %v4161
      %v4163 = vpop.f32.mrb[0].mxu0
      %4164 = vmatprep.mubr.f32.mxu0 0.0
      %4165 = vmatmul.mubr.f32.gmra.mrb[0].mxu0 %v3986
      %v4166 = vpop.f32.mrb[0].mxu0
      %v4167 = vadd.f32 0.0, %v4166
      %v4168 = vpop.f32.mrb[0].mxu0
      %4169 = vmatprep.mubr.f32.mxu0 0.0
      %4170 = vmatmul.mubr.f32.gmra.mrb[0].mxu0 %v3989
      %v4171 = vpop.f32.mrb[0].mxu0
      %v4172 = vadd.f32 0.0, %v4171
      %v4173 = vpop.f32.mrb[0].mxu0
      %4174 = vmatprep.mubr.f32.mxu0 0.0
      %4175 = vmatmul.mubr.f32.gmra.mrb[0].mxu0 %v3992
      %v4176 = vpop.f32.mrb[0].mxu0
      %v4177 = vadd.f32 0.0, %v4176
      %v4178 = vpop.f32.mrb[0].mxu0
      %4179 = vmatprep.mubr.f32.mxu0 0.0
      %4180 = vmatmul.mubr.f32.gmra.mrb[0].mxu0 %v3995
      %v4181 = vpop.f32.mrb[0].mxu0
      %v4182 = vadd.f32 0.0, %v4181
      %v4183 = vpop.f32.mrb[0].mxu0
      %4184 = vmatprep.mubr.f32.mxu0 0.0
      %4185 = vmatmul.mubr.f32.gmra.mrb[0].mxu0 %v3998
      %v4186 = vpop.f32.mrb[0].mxu0
      %v4187 = vadd.f32 0.0, %v4186
      %v4188 = vpop.f32.mrb[0].mxu0
      %4189 = vmatprep.mubr.f32.mxu0 0.0
      %4190 = vmatmul.mubr.f32.gmra.mrb[0].mxu0 %v4001
      %v4191 = vpop.f32.mrb[0].mxu0
      %v4192 = vadd.f32 0.0, %v4191
      %v4193 = vpop.f32.mrb[0].mxu0
      %4194 = vmatprep.mubr.f32.mxu0 0.0
      %4195 = vmatmul.mubr.f32.gmra.mrb[0].mxu0 %v4004
      %v4196 = vpop.f32.mrb[0].mxu0
      %v4197 = vadd.f32 0.0, %v4196
      %v4198 = vpop.f32.mrb[0].mxu0
      %4199 = vmatprep.mubr.f32.mxu0 0.0
      %4200 = vmatmul.mubr.f32.gmra.mrb[0].mxu0 %v4007
      %v4201 = vpop.f32.mrb[0].mxu0
      %v4202 = vadd.f32 0.0, %v4201
      %v4203 = vpop.f32.mrb[0].mxu0
      %4204 = vmatprep.mubr.f32.mxu0 0.0
      %4205 = vmatmul.mubr.f32.gmra.mrb[0].mxu0 %v4010
      %v4206 = vpop.f32.mrb[0].mxu0
      %v4207 = vadd.f32 0.0, %v4206
      %v4208 = vpop.f32.mrb[0].mxu0
      %4209 = vmatprep.mubr.f32.mxu0 0.0
      %4210 = vmatmul.mubr.f32.gmra.mrb[0].mxu0 %v4013
      %v4211 = vpop.f32.mrb[0].mxu0
      %v4212 = vadd.f32 0.0, %v4211
      %v4213 = vpop.f32.mrb[0].mxu0
      %4214 = vmatprep.mubr.f32.mxu0 0.0
      %4215 = vmatmul.mubr.f32.gmra.mrb[0].mxu0 %v4016
      %v4216 = vpop.f32.mrb[0].mxu0
      %v4217 = vadd.f32 0.0, %v4216
      %v4218 = vpop.f32.mrb[0].mxu0
      %4219 = vmatprep.mubr.f32.mxu0 0.0
      %4220 = vmatmul.mubr.f32.gmra.mrb[0].mxu0 %v4019
      %v4221 = vpop.f32.mrb[0].mxu0
      %v4222 = vadd.f32 0.0, %v4221
      %v4223 = vpop.f32.mrb[0].mxu0
      %4224 = vmatprep.mubr.f32.mxu0 0.0
      %4225 = vmatmul.mubr.f32.gmra.mrb[0].mxu0 %v4022
      %v4226 = vpop.f32.mrb[0].mxu0
      %v4227 = vadd.f32 0.0, %v4226
      %v4228 = vpop.f32.mrb[0].mxu0
      %4229 = vmatprep.mubr.f32.mxu0 0.0
      %4230 = vmatmul.mubr.f32.gmra.mrb[0].mxu0 %v4025
      %v4231 = vpop.f32.mrb[0].mxu0
      %v4232 = vadd.f32 0.0, %v4231
      %v4233 = vpop.f32.mrb[0].mxu0
      %4234 = vmatprep.mubr.f32.mxu0 0.0
      %4235 = vmatmul.mubr.f32.gmra.mrb[0].mxu0 %v4028
      %v4236 = vpop.f32.mrb[0].mxu0
      %v4237 = vadd.f32 0.0, %v4236
      %v4238 = vpop.f32.mrb[0].mxu0
      %4239 = vmatprep.mubr.f32.mxu0 0.0
      %4240 = vmatmul.mubr.f32.gmra.mrb[0].mxu0 %v4031
      %v4241 = vpop.f32.mrb[0].mxu0
      %v4242 = vadd.f32 0.0, %v4241
      %v4243 = vpop.f32.mrb[0].mxu0
      %4244 = vmatprep.mubr.f32.mxu0 0.0
      %4245 = vmatmul.mubr.f32.gmra.mrb[0].mxu0 %v4034
      %v4246 = vpop.f32.mrb[0].mxu0
      %v4247 = vadd.f32 0.0, %v4246
      %v4248 = vpop.f32.mrb[0].mxu0
      %4249 = vmatprep.mubr.f32.mxu0 0.0
      %4250 = vmatmul.mubr.f32.gmra.mrb[0].mxu0 %v4037
      %v4251 = vpop.f32.mrb[0].mxu0
      %v4252 = vadd.f32 0.0, %v4251
      %v4253 = vpop.f32.mrb[0].mxu0
      %4254 = vmatprep.mubr.f32.mxu0 0.0
      %4255 = vmatmul.mubr.f32.gmra.mrb[0].mxu0 %v4040
      %v4256 = vpop.f32.mrb[0].mxu0
      %v4257 = vadd.f32 0.0, %v4256
      %v4258 = vpop.f32.mrb[0].mxu0
      %4259 = vmatprep.mubr.f32.mxu0 0.0
      %4260 = vmatmul.mubr.f32.gmra.mrb[0].mxu0 %v4043
      %v4261 = vpop.f32.mrb[0].mxu0
      %v4262 = vadd.f32 0.0, %v4261
      %v4263 = vpop.f32.mrb[0].mxu0
      %4264 = vmatprep.mubr.f32.mxu0 0.0
      %4265 = vmatmul.mubr.f32.gmra.mrb[0].mxu0 %v4046
      %v4266 = vpop.f32.mrb[0].mxu0
      %v4267 = vadd.f32 0.0, %v4266
      %v4268 = vpop.f32.mrb[0].mxu0
      %4269 = vmatprep.mubr.f32.mxu0 0.0
      %4270 = vmatmul.mubr.f32.gmra.mrb[0].mxu0 %v4049
      %v4271 = vpop.f32.mrb[0].mxu0
      %v4272 = vadd.f32 0.0, %v4271
      %v4273 = vpop.f32.mrb[0].mxu0
      %4274 = vmatprep.mubr.f32.mxu0 0.0
      %4275 = vmatmul.mubr.f32.gmra.mrb[0].mxu0 %v4052
      %v4276 = vpop.f32.mrb[0].mxu0
      %v4277 = vadd.f32 0.0, %v4276
      %v4278 = vpop.f32.mrb[0].mxu0
      %4279 = vmatprep.mubr.f32.mxu0 0.0
      %4280 = vmatmul.mubr.f32.gmra.mrb[0].mxu0 %v4055
      %v4281 = vpop.f32.mrb[0].mxu0
      %v4282 = vadd.f32 0.0, %v4281
      %v4283 = vpop.f32.mrb[0].mxu0
      %4284 = vdwg.mxu0
      %v4285 = vadd.f32 %v3927, %v4127
      %v4286 = vadd.f32 %v3928, %v4132
      %v4287 = vadd.f32 %v3929, %v4137
      %v4288 = vadd.f32 %v3930, %v4142
      %v4289 = vadd.f32 %v3931, %v4147
      %v4290 = vadd.f32 %v3932, %v4152
      %v4291 = vadd.f32 %v3933, %v4157
      %v4292 = vadd.f32 %v3934, %v4162
      %v4293 = vadd.f32 %v3935, %v4167
      %v4294 = vadd.f32 %v3936, %v4172
      %v4295 = vadd.f32 %v3937, %v4177
      %v4296 = vadd.f32 %v3938, %v4182
      %v4297 = vadd.f32 %v3939, %v4187
      %v4298 = vadd.f32 %v3940, %v4192
      %v4299 = vadd.f32 %v3941, %v4197
      %v4300 = vadd.f32 %v3942, %v4202
      %v4301 = vadd.f32 %v3943, %v4207
      %v4302 = vadd.f32 %v3944, %v4212
      %v4303 = vadd.f32 %v3945, %v4217
      %v4304 = vadd.f32 %v3946, %v4222
      %v4305 = vadd.f32 %v3947, %v4227
      %v4306 = vadd.f32 %v3948, %v4232
      %v4307 = vadd.f32 %v3949, %v4237
      %v4308 = vadd.f32 %v3950, %v4242
      %v4309 = vadd.f32 %v3951, %v4247
      %v4310 = vadd.f32 %v3952, %v4252
      %v4311 = vadd.f32 %v3953, %v4257
      %v4312 = vadd.f32 %v3954, %v4262
      %v4313 = vadd.f32 %v3955, %v4267
      %v4314 = vadd.f32 %v3956, %v4272
      %v4315 = vadd.f32 %v3957, %v4277
      %v4316 = vadd.f32 %v3958, %v4282
      %4317 = vst [vmem:[#allocation2] sm:$0xff] %v4285
      %4318 = vst [vmem:[#allocation2 + $0x8] sm:$0xff] %v4286
      %4319 = vst [vmem:[#allocation2 + $0x10] sm:$0xff] %v4287
      %4320 = vst [vmem:[#allocation2 + $0x18] sm:$0xff] %v4288
      %4321 = vst [vmem:[#allocation2 + $0x20] sm:$0xff] %v4289
      %4322 = vst [vmem:[#allocation2 + $0x28] sm:$0xff] %v4290
      %4323 = vst [vmem:[#allocation2 + $0x30] sm:$0xff] %v4291
      %4324 = vst [vmem:[#allocation2 + $0x38] sm:$0xff] %v4292
      %4325 = vst [vmem:[#allocation2 + $0x40] sm:$0xff] %v4293
      %4326 = vst [vmem:[#allocation2 + $0x48] sm:$0xff] %v4294
      %4327 = vst [vmem:[#allocation2 + $0x50] sm:$0xff] %v4295
      %4328 = vst [vmem:[#allocation2 + $0x58] sm:$0xff] %v4296
      %4329 = vst [vmem:[#allocation2 + $0x60] sm:$0xff] %v4297
      %4330 = vst [vmem:[#allocation2 + $0x68] sm:$0xff] %v4298
      %4331 = vst [vmem:[#allocation2 + $0x70] sm:$0xff] %v4299
      %4332 = vst [vmem:[#allocation2 + $0x78] sm:$0xff] %v4300
      %4333 = vst [vmem:[#allocation2 + $0x80] sm:$0xff] %v4301
      %4334 = vst [vmem:[#allocation2 + $0x88] sm:$0xff] %v4302
      %4335 = vst [vmem:[#allocation2 + $0x90] sm:$0xff] %v4303
      %4336 = vst [vmem:[#allocation2 + $0x98] sm:$0xff] %v4304
      %4337 = vst [vmem:[#allocation2 + $0xa0] sm:$0xff] %v4305
      %4338 = vst [vmem:[#allocation2 + $0xa8] sm:$0xff] %v4306
      %4339 = vst [vmem:[#allocation2 + $0xb0] sm:$0xff] %v4307
      %4340 = vst [vmem:[#allocation2 + $0xb8] sm:$0xff] %v4308
      %4341 = vst [vmem:[#allocation2 + $0xc0] sm:$0xff] %v4309
      %4342 = vst [vmem:[#allocation2 + $0xc8] sm:$0xff] %v4310
      %4343 = vst [vmem:[#allocation2 + $0xd0] sm:$0xff] %v4311
      %4344 = vst [vmem:[#allocation2 + $0xd8] sm:$0xff] %v4312
      %4345 = vst [vmem:[#allocation2 + $0xe0] sm:$0xff] %v4313
      %4346 = vst [vmem:[#allocation2 + $0xe8] sm:$0xff] %v4314
      %4347 = vst [vmem:[#allocation2 + $0xf0] sm:$0xff] %v4315
      %4348 = vst [vmem:[#allocation2 + $0xf8] sm:$0xff] %v4316
      %v4349 = vld [vmem:[#allocation2] sm:$0xff]
      %v4350 = vld [vmem:[#allocation2 + $0x8] sm:$0xff]
      %v4351 = vld [vmem:[#allocation2 + $0x10] sm:$0xff]
      %v4352 = vld [vmem:[#allocation2 + $0x18] sm:$0xff]
      %v4353 = vld [vmem:[#allocation2 + $0x20] sm:$0xff]
      %v4354 = vld [vmem:[#allocation2 + $0x28] sm:$0xff]
      %v4355 = vld [vmem:[#allocation2 + $0x30] sm:$0xff]
      %v4356 = vld [vmem:[#allocation2 + $0x38] sm:$0xff]
      %v4357 = vld [vmem:[#allocation2 + $0x40] sm:$0xff]
      %v4358 = vld [vmem:[#allocation2 + $0x48] sm:$0xff]
      %v4359 = vld [vmem:[#allocation2 + $0x50] sm:$0xff]
      %v4360 = vld [vmem:[#allocation2 + $0x58] sm:$0xff]
      %v4361 = vld [vmem:[#allocation2 + $0x60] sm:$0xff]
      %v4362 = vld [vmem:[#allocation2 + $0x68] sm:$0xff]
      %v4363 = vld [vmem:[#allocation2 + $0x70] sm:$0xff]
      %v4364 = vld [vmem:[#allocation2 + $0x78] sm:$0xff]
      %v4365 = vld [vmem:[#allocation2 + $0x80] sm:$0xff]
      %v4366 = vld [vmem:[#allocation2 + $0x88] sm:$0xff]
      %v4367 = vld [vmem:[#allocation2 + $0x90] sm:$0xff]
      %v4368 = vld [vmem:[#allocation2 + $0x98] sm:$0xff]
      %v4369 = vld [vmem:[#allocation2 + $0xa0] sm:$0xff]
      %v4370 = vld [vmem:[#allocation2 + $0xa8] sm:$0xff]
      %v4371 = vld [vmem:[#allocation2 + $0xb0] sm:$0xff]
      %v4372 = vld [vmem:[#allocation2 + $0xb8] sm:$0xff]
      %v4373 = vld [vmem:[#allocation2 + $0xc0] sm:$0xff]
      %v4374 = vld [vmem:[#allocation2 + $0xc8] sm:$0xff]
      %v4375 = vld [vmem:[#allocation2 + $0xd0] sm:$0xff]
      %v4376 = vld [vmem:[#allocation2 + $0xd8] sm:$0xff]
      %v4377 = vld [vmem:[#allocation2 + $0xe0] sm:$0xff]
      %v4378 = vld [vmem:[#allocation2 + $0xe8] sm:$0xff]
      %v4379 = vld [vmem:[#allocation2 + $0xf0] sm:$0xff]
      %v4380 = vld [vmem:[#allocation2 + $0xf8] sm:$0xff]
      %v4381 = vld [vmem:[%s2] sm:$0x1]
      %v4383 = vlaneseq
      %v4384 = vshrl.u32 %v4383, 7
      %v4385 = vsub.s32 0, %v4384
      %v4386 = vrot.slane %v4381, %v4385
      %v4388 = vmul.f32 %v4349, %v4386
      %v4389 = vmul.f32 %v4350, %v4386
      %v4390 = vmul.f32 %v4351, %v4386
      %v4391 = vmul.f32 %v4352, %v4386
      %v4392 = vmul.f32 %v4353, %v4386
      %v4393 = vmul.f32 %v4354, %v4386
      %v4394 = vmul.f32 %v4355, %v4386
      %v4395 = vmul.f32 %v4356, %v4386
      %v4396 = vmul.f32 %v4357, %v4386
      %v4397 = vmul.f32 %v4358, %v4386
      %v4398 = vmul.f32 %v4359, %v4386
      %v4399 = vmul.f32 %v4360, %v4386
      %v4400 = vmul.f32 %v4361, %v4386
      %v4401 = vmul.f32 %v4362, %v4386
      %v4402 = vmul.f32 %v4363, %v4386
      %v4403 = vmul.f32 %v4364, %v4386
      %v4404 = vmul.f32 %v4365, %v4386
      %v4405 = vmul.f32 %v4366, %v4386
      %v4406 = vmul.f32 %v4367, %v4386
      %v4407 = vmul.f32 %v4368, %v4386
      %v4408 = vmul.f32 %v4369, %v4386
      %v4409 = vmul.f32 %v4370, %v4386
      %v4410 = vmul.f32 %v4371, %v4386
      %v4411 = vmul.f32 %v4372, %v4386
      %v4412 = vmul.f32 %v4373, %v4386
      %v4413 = vmul.f32 %v4374, %v4386
      %v4414 = vmul.f32 %v4375, %v4386
      %v4415 = vmul.f32 %v4376, %v4386
      %v4416 = vmul.f32 %v4377, %v4386
      %v4417 = vmul.f32 %v4378, %v4386
      %v4418 = vmul.f32 %v4379, %v4386
      %v4419 = vmul.f32 %v4380, %v4386
      %v4420 = vld [vmem:[%s3] sm:$0x1]
      %v4422 = vlaneseq
      %v4423 = vshrl.u32 %v4422, 7
      %v4424 = vsub.s32 0, %v4423
      %v4425 = vrot.slane %v4420, %v4424
      %v4427 = vadd.f32 %v4388, %v4425
      %v4428 = vadd.f32 %v4389, %v4425
      %v4429 = vadd.f32 %v4390, %v4425
      %v4430 = vadd.f32 %v4391, %v4425
      %v4431 = vadd.f32 %v4392, %v4425
      %v4432 = vadd.f32 %v4393, %v4425
      %v4433 = vadd.f32 %v4394, %v4425
      %v4434 = vadd.f32 %v4395, %v4425
      %v4435 = vadd.f32 %v4396, %v4425
      %v4436 = vadd.f32 %v4397, %v4425
      %v4437 = vadd.f32 %v4398, %v4425
      %v4438 = vadd.f32 %v4399, %v4425
      %v4439 = vadd.f32 %v4400, %v4425
      %v4440 = vadd.f32 %v4401, %v4425
      %v4441 = vadd.f32 %v4402, %v4425
      %v4442 = vadd.f32 %v4403, %v4425
      %v4443 = vadd.f32 %v4404, %v4425
      %v4444 = vadd.f32 %v4405, %v4425
      %v4445 = vadd.f32 %v4406, %v4425
      %v4446 = vadd.f32 %v4407, %v4425
      %v4447 = vadd.f32 %v4408, %v4425
      %v4448 = vadd.f32 %v4409, %v4425
      %v4449 = vadd.f32 %v4410, %v4425
      %v4450 = vadd.f32 %v4411, %v4425
      %v4451 = vadd.f32 %v4412, %v4425
      %v4452 = vadd.f32 %v4413, %v4425
      %v4453 = vadd.f32 %v4414, %v4425
      %v4454 = vadd.f32 %v4415, %v4425
      %v4455 = vadd.f32 %v4416, %v4425
      %v4456 = vadd.f32 %v4417, %v4425
      %v4457 = vadd.f32 %v4418, %v4425
      %v4458 = vadd.f32 %v4419, %v4425
      %v4459 = vmax.f32 %v4427, 0.0
      %v4460 = vmax.f32 %v4428, 0.0
      %v4461 = vmax.f32 %v4429, 0.0
      %v4462 = vmax.f32 %v4430, 0.0
      %v4463 = vmax.f32 %v4431, 0.0
      %v4464 = vmax.f32 %v4432, 0.0
      %v4465 = vmax.f32 %v4433, 0.0
      %v4466 = vmax.f32 %v4434, 0.0
      %v4467 = vmax.f32 %v4435, 0.0
      %v4468 = vmax.f32 %v4436, 0.0
      %v4469 = vmax.f32 %v4437, 0.0
      %v4470 = vmax.f32 %v4438, 0.0
      %v4471 = vmax.f32 %v4439, 0.0
      %v4472 = vmax.f32 %v4440, 0.0
      %v4473 = vmax.f32 %v4441, 0.0
      %v4474 = vmax.f32 %v4442, 0.0
      %v4475 = vmax.f32 %v4443, 0.0
      %v4476 = vmax.f32 %v4444, 0.0
      %v4477 = vmax.f32 %v4445, 0.0
      %v4478 = vmax.f32 %v4446, 0.0
      %v4479 = vmax.f32 %v4447, 0.0
      %v4480 = vmax.f32 %v4448, 0.0
      %v4481 = vmax.f32 %v4449, 0.0
      %v4482 = vmax.f32 %v4450, 0.0
      %v4483 = vmax.f32 %v4451, 0.0
      %v4484 = vmax.f32 %v4452, 0.0
      %v4485 = vmax.f32 %v4453, 0.0
      %v4486 = vmax.f32 %v4454, 0.0
      %v4487 = vmax.f32 %v4455, 0.0
      %v4488 = vmax.f32 %v4456, 0.0
      %v4489 = vmax.f32 %v4457, 0.0
      %v4490 = vmax.f32 %v4458, 0.0
      %4491 = vst [vmem:[%s219] sm:$0xff] %v4459
      %4492 = vst [vmem:[%s219 + $0x8] sm:$0xff] %v4460
      %4493 = vst [vmem:[%s219 + $0x10] sm:$0xff] %v4461
      %4494 = vst [vmem:[%s219 + $0x18] sm:$0xff] %v4462
      %4495 = vst [vmem:[%s219 + $0x20] sm:$0xff] %v4463
      %4496 = vst [vmem:[%s219 + $0x28] sm:$0xff] %v4464
      %4497 = vst [vmem:[%s219 + $0x30] sm:$0xff] %v4465
      %4498 = vst [vmem:[%s219 + $0x38] sm:$0xff] %v4466
      %4499 = vst [vmem:[%s219 + $0x40] sm:$0xff] %v4467
      %4500 = vst [vmem:[%s219 + $0x48] sm:$0xff] %v4468
      %4501 = vst [vmem:[%s219 + $0x50] sm:$0xff] %v4469
      %4502 = vst [vmem:[%s219 + $0x58] sm:$0xff] %v4470
      %4503 = vst [vmem:[%s219 + $0x60] sm:$0xff] %v4471
      %4504 = vst [vmem:[%s219 + $0x68] sm:$0xff] %v4472
      %4505 = vst [vmem:[%s219 + $0x70] sm:$0xff] %v4473
      %4506 = vst [vmem:[%s219 + $0x78] sm:$0xff] %v4474
      %4507 = vst [vmem:[%s219 + $0x80] sm:$0xff] %v4475
      %4508 = vst [vmem:[%s219 + $0x88] sm:$0xff] %v4476
      %4509 = vst [vmem:[%s219 + $0x90] sm:$0xff] %v4477
      %4510 = vst [vmem:[%s219 + $0x98] sm:$0xff] %v4478
      %4511 = vst [vmem:[%s219 + $0xa0] sm:$0xff] %v4479
      %4512 = vst [vmem:[%s219 + $0xa8] sm:$0xff] %v4480
      %4513 = vst [vmem:[%s219 + $0xb0] sm:$0xff] %v4481
      %4514 = vst [vmem:[%s219 + $0xb8] sm:$0xff] %v4482
      %4515 = vst [vmem:[%s219 + $0xc0] sm:$0xff] %v4483
      %4516 = vst [vmem:[%s219 + $0xc8] sm:$0xff] %v4484
      %4517 = vst [vmem:[%s219 + $0xd0] sm:$0xff] %v4485
      %4518 = vst [vmem:[%s219 + $0xd8] sm:$0xff] %v4486
      %4519 = vst [vmem:[%s219 + $0xe0] sm:$0xff] %v4487
      %4520 = vst [vmem:[%s219 + $0xe8] sm:$0xff] %v4488
      %4521 = vst [vmem:[%s219 + $0xf0] sm:$0xff] %v4489
      %4522 = vst [vmem:[%s219 + $0xf8] sm:$0xff] %v4490
      %s4523 = smul.u32 32, %s20
      %p4524 = scmp.lt.s32.totalorder %s19, 1
      %s4525 = scalar_select %p4524, %s19, 1
      %p4526 = scmp.lt.s32.totalorder %s4523, 31
      %s4527 = scalar_select %p4526, %s4523, 31
      %s4528 = smul.addr %s4525, 32
      %s4529 = sadd.s32 %s4527, %s4528
      %s4530 = smul.addr %s4529, 8
      %s4531 = scalar_lea.vmem %s4, %s4530
      // Predicated region
      $region37: #{conv_block_forward.1} parent=35 // pred_check
        %p4532 = pneg %p136
      $region38: #{conv_block_forward.1} parent=35 // pred_check_branch
        %4534 = sbr.rel (%p4532) target = $region40
      $region39: #{conv_block_forward.1} parent=35 // pred_region
        %s4535 = smul.u32 32, %s20
      $region40: #{conv_block_forward.1} parent=35 // pred_fallthru
        _
    $region36: #{conv_block_forward.1} parent=5 // pred_fallthru
      _
    %p4536 = scmp.le.s32.totalorder 2, %s10
    // Predicated region
    $region41: #{conv_block_forward.1} parent=5 // pred_check
      %p4537 = pneg %p4536
    $region42: #{conv_block_forward.1} parent=5 // pred_check_branch
      %4539 = sbr.rel (%p4537) target = $region44
    $region43: #{conv_block_forward.1} parent=5 // pred_region
      %s4540 = ssub.s32 %s10, 2
      // Predicated region
      $region45: #{conv_block_forward.1} parent=43 // pred_check
        %p4541 = pneg %p142
      $region46: #{conv_block_forward.1} parent=43 // pred_check_branch
        %4543 = sbr.rel (%p4541) target = $region48
      $region47: #{conv_block_forward.1} parent=43 // pred_region
        %s4544 = smul.u32 32, %s22
        %p4545 = scmp.lt.s32.totalorder %s21, 1
        %s4546 = scalar_select %p4545, %s21, 1
        %p4547 = scmp.lt.s32.totalorder %s4544, 31
        %s4548 = scalar_select %p4547, %s4544, 31
        %s4549 = smul.addr %s4546, 32
        %s4550 = sadd.s32 %s4548, %s4549
        %s4551 = smul.addr %s4550, 8
        %s4552 = scalar_lea.vmem %s4, %s4551
      $region48: #{conv_block_forward.1} parent=43 // pred_fallthru
        _
    $region44: #{conv_block_forward.1} parent=5 // pred_fallthru
      _
  $region6: #{conv_block_forward.1} parent=0 // loop_footer
    %s14 = sadd.s32 1, %s10
  $region7: #{conv_block_forward.1} parent=0 // loop_footer_branch
    %9 = sbr.rel target = $region3
  $region8: #{conv_block_forward.1} parent=0 // loop_exit
    _

</llo_original>
